<compile_context>
chip_gen: v7x
topology: tpu7x:2x2x1
jax: 0.10.0
libtpu: 0.0.40
codegen_flags: <defaults>
</compile_context>

<pallas_src>
from functools import partial

import jax
import jax.numpy as jnp
from jax.experimental import pallas as pl
from jax.experimental.pallas import tpu as pltpu

EPS = 1e-5                       # nn.BatchNorm3d default
_VMEM_LIMIT = 32 * 1024 * 1024   # safe on v5e/v6e (128 MiB) and v7x (64 MiB physical)
_RESIDENT_BUDGET = 16 * 1024 * 1024  # gate for the single-kernel resident path
_TILE_BUDGET = 20 * 1024 * 1024      # per-step VMEM budget for the tiled path


def _round_up(n, m):
    return ((n + m - 1) // m) * m


def _choose_tile(n_true, in_rows, out_rows, w_bytes):
    """Largest lane tile under the VMEM budget, preferring grid >= 2 (v7x megacore)."""
    for t in (2048, 1024, 512, 256, 128):
        need = 8 * (in_rows + out_rows) * t + 2 * w_bytes + (1 << 16)
        if need > _TILE_BUDGET:
            continue
        if -(-n_true // t) >= 2:
            return t
    return 128


def _cheb_stack(lap, k_order):
    """T_k(L) for k = 0..K-1 via the Chebyshev recursion (constants)."""
    v = lap.shape[0]
    mats = [jnp.eye(v, dtype=jnp.float32)]
    if k_order > 1:
        mats.append(lap.astype(jnp.float32))
    for _ in range(2, k_order):
        mats.append(2.0 * (lap @ mats[-1]) - mats[-2])
    return jnp.stack(mats, axis=0)  # [K, V, V]


def prepare_block_operators(lap, weights, gammas, betas, V):
    """One-time prep (hoisted out of the forward): fold Chebyshev stack with the
    per-layer weights into bf16 operators and build per-layer BN helper constants."""
    K = weights[0].shape[0]
    T = _cheb_stack(lap, K)
    layers = []
    for w, g, be in zip(weights, gammas, betas):
        _, cin, cout = w.shape
        w_op = (jnp.einsum('kio,kvw->oviw', w, T)
                .reshape(cout * V, cin * V).astype(jnp.bfloat16))
        # Channel-grouping ones matrices (row r = o*V + v belongs to channel o).
        gsum = jnp.repeat(jnp.eye(cout, dtype=jnp.float32), V, axis=1)   # [cout, cout*V]
        expand = jnp.transpose(gsum)                                      # [cout*V, cout]
        layers.append(dict(
            w_op=w_op,
            gsum=gsum,
            expand=expand,
            gamma=g.astype(jnp.float32).reshape(cout, 1),
            beta=be.astype(jnp.float32).reshape(cout, 1),
        ))
    return layers


# ----------------------------------------------------------------------------
# Path A (tiled two-pass): conv kernel with fused previous-layer BN+ReLU prologue.
#   x_ref     : [Cin*V, TN]   bf16  (previous layer's pre-BN output, or the input)
#   w_ref     : [Cout*V, Cin*V] bf16
#   scale/shift (only when fused): [Cin*V, 1] f32  (previous layer's BN affine)
#   y_ref     : [Cout*V, TN]  bf16  (this layer's pre-BN output)
#   s1/s2_ref : [1, Cout*V, 1] f32  (per-tile sum / sum-of-squares per row)
# ----------------------------------------------------------------------------
def _make_conv_stats_kernel(fuse_prologue, need_mask, n_true, tn):
    def kernel(*refs):
        if fuse_prologue:
            x_ref, w_ref, scale_ref, shift_ref, y_ref, s1_ref, s2_ref = refs
            x = x_ref[...].astype(jnp.float32)            # upcast before elementwise (v5e)
            x = jnp.maximum(x * scale_ref[...] + shift_ref[...], 0.0)
            if need_mask:
                lane = (jax.lax.broadcasted_iota(jnp.int32, x.shape, 1)
                        + pl.program_id(0) * tn)
                x = jnp.where(lane < n_true, x, 0.0)      # keep padded lanes at 0
            x = x.astype(jnp.bfloat16)
        else:
            x_ref, w_ref, y_ref, s1_ref, s2_ref = refs
            x = x_ref[...]                                # already bf16
        y = jnp.dot(w_ref[...], x, preferred_element_type=jnp.float32)
        y_ref[...] = y.astype(jnp.bfloat16)               # bf16 inter-layer slab
        s1_ref[...] = jnp.sum(y, axis=1, keepdims=True)[None]
        s2_ref[...] = jnp.sum(y * y, axis=1, keepdims=True)[None]
    return kernel


def _conv_stats_layer(slab, w_op, scale_rows, shift_rows, *, tn, n_true):
    cin_v, npad = slab.shape
    cout_v = w_op.shape[0]
    steps = npad // tn
    fuse = scale_rows is not None
    need_mask = fuse and (npad != n_true)
    kernel = _make_conv_stats_kernel(fuse, need_mask, n_true, tn)

    in_specs = [pl.BlockSpec((cin_v, tn), lambda g: (0, g)),
                pl.BlockSpec((cout_v, cin_v), lambda g: (0, 0))]
    args = [slab, w_op]
    if fuse:
        in_specs += [pl.BlockSpec((cin_v, 1), lambda g: (0, 0)),
                     pl.BlockSpec((cin_v, 1), lambda g: (0, 0))]
        args += [scale_rows, shift_rows]

    return pl.pallas_call(
        kernel,
        out_shape=(jax.ShapeDtypeStruct((cout_v, npad), jnp.bfloat16),
                   jax.ShapeDtypeStruct((steps, cout_v, 1), jnp.float32),
                   jax.ShapeDtypeStruct((steps, cout_v, 1), jnp.float32)),
        grid=(steps,),
        in_specs=in_specs,
        out_specs=(pl.BlockSpec((cout_v, tn), lambda g: (0, g)),
                   pl.BlockSpec((1, cout_v, 1), lambda g: (g, 0, 0)),
                   pl.BlockSpec((1, cout_v, 1), lambda g: (g, 0, 0))),
        compiler_params=pltpu.CompilerParams(
            dimension_semantics=("parallel",),
            vmem_limit_bytes=_VMEM_LIMIT),
    )(*args)


# Final-layer BN apply + ReLU (lane-dense elementwise).
def _bn_relu_kernel(y_ref, scale_ref, shift_ref, o_ref):
    y = y_ref[...].astype(jnp.float32)
    o_ref[...] = jnp.maximum(y * scale_ref[...] + shift_ref[...], 0.0)


def _bn_relu_final(y_pre, scale_rows, shift_rows, *, tn):
    cout_v, npad = y_pre.shape
    steps = npad // tn
    return pl.pallas_call(
        _bn_relu_kernel,
        out_shape=jax.ShapeDtypeStruct((cout_v, npad), jnp.float32),
        grid=(steps,),
        in_specs=[pl.BlockSpec((cout_v, tn), lambda g: (0, g)),
                  pl.BlockSpec((cout_v, 1), lambda g: (0, 0)),
                  pl.BlockSpec((cout_v, 1), lambda g: (0, 0))],
        out_specs=pl.BlockSpec((cout_v, tn), lambda g: (0, g)),
        compiler_params=pltpu.CompilerParams(
            dimension_semantics=("parallel",),
            vmem_limit_bytes=_VMEM_LIMIT),
    )(y_pre, scale_rows, shift_rows)


# ----------------------------------------------------------------------------
# Path B (small problems): the ENTIRE block in one gridless pallas_call, slab
# resident in VMEM.  Per layer: MXU conv, channel stats via ones-matrix matmuls
# (no reshapes), BN + ReLU, feed next layer as a bf16 value.
# ----------------------------------------------------------------------------
def _make_resident_block_kernel(num_layers, inv_count, n_true, need_mask):
    def kernel(*refs):
        x_ref = refs[0]
        o_ref = refs[-1]
        p = refs[1:-1]                                    # 5 refs per layer
        x = x_ref[...]                                    # bf16 [C0*V, Npad]
        for l in range(num_layers):
            w_ref, g_ref, e_ref, gamma_ref, beta_ref = p[5 * l:5 * l + 5]
            y = jnp.dot(w_ref[...], x, preferred_element_type=jnp.float32)
            # Per-channel sums over the V rows of each channel (ones-matrix matmul,
            # f32), then lane reduction -> batch statistics.
            gy = jnp.dot(g_ref[...], y, preferred_element_type=jnp.float32)
            gy2 = jnp.dot(g_ref[...], y * y, preferred_element_type=jnp.float32)
            mean = jnp.sum(gy, axis=1, keepdims=True) * inv_count       # [Cout, 1]
            ex2 = jnp.sum(gy2, axis=1, keepdims=True) * inv_count
            var = jnp.maximum(ex2 - mean * mean, 0.0)
            inv = jax.lax.rsqrt(var + EPS)
            scale = gamma_ref[...] * inv                                 # [Cout, 1]
            shift = beta_ref[...] - mean * scale
            # Expand per-channel affine back to rows via the transposed ones matrix
            # (lane-dense matmul, then take one column) — avoids sublane reshapes.
            cout = scale.shape[0]
            scale_rows = jnp.dot(e_ref[...], jnp.broadcast_to(scale, (cout, 128)),
                                 preferred_element_type=jnp.float32)[:, 0:1]
            shift_rows = jnp.dot(e_ref[...], jnp.broadcast_to(shift, (cout, 128)),
                                 preferred_element_type=jnp.float32)[:, 0:1]
            a = jnp.maximum(y * scale_rows + shift_rows, 0.0)
            if need_mask:
                lane = jax.lax.broadcasted_iota(jnp.int32, a.shape, 1)
                a = jnp.where(lane < n_true, a, 0.0)      # keep padded lanes at 0
            if l + 1 < num_layers:
                x = a.astype(jnp.bfloat16)
            else:
                o_ref[...] = a
    return kernel


def _resident_block(slab, layer_params, *, n_true):
    num_layers = len(layer_params)
    npad = slab.shape[1]
    V = layer_params[0]['w_op'].shape[0] // layer_params[0]['gamma'].shape[0]
    inv_count = 1.0 / float(V * n_true)
    kernel = _make_resident_block_kernel(num_layers, inv_count, n_true, npad != n_true)
    args = [slab]
    for lp in layer_params:
        args += [lp['w_op'], lp['gsum'], lp['expand'], lp['gamma'], lp['beta']]
    out_rows = layer_params[-1]['w_op'].shape[0]
    return pl.pallas_call(
        kernel,
        out_shape=jax.ShapeDtypeStruct((out_rows, npad), jnp.float32),
        compiler_params=pltpu.CompilerParams(vmem_limit_bytes=_VMEM_LIMIT),
    )(*args)


# ----------------------------------------------------------------------------
# Forward
# ----------------------------------------------------------------------------
@partial(jax.jit, static_argnames=("force_two_pass",))
def block_proposed_forward(x, layer_params, force_two_pass=False):
    """BlockProposed.forward: sequence of (ChebConv -> BatchNorm3d(train) -> ReLU).

    x: [B, C0, V, X, Y, Z] f32 ; layer_params from prepare_block_operators.
    Conv biases are intentionally omitted: bias before training-mode BN cancels.
    Returns [B, C_last, V, X, Y, Z] f32.
    """
    B, C0, V, X, Y, Z = x.shape
    N = B * X * Y * Z

    # Entry transpose (once): -> bf16 slab [C*V, N] (matmul operands are bf16 anyway)
    slab = jnp.transpose(x, (1, 2, 0, 3, 4, 5)).reshape(C0 * V, N).astype(jnp.bfloat16)

    row_out = [lp["w_op"].shape[0] for lp in layer_params]
    row_in = [C0 * V] + row_out[:-1]
    max_w_bytes = max(lp["w_op"].size * 2 for lp in layer_params)

    # Resident-path VMEM estimate (whole block in one kernel).
    npad128 = _round_up(N, 128)
    param_bytes = sum(lp["w_op"].size * 2
                      + 4 * (lp["gsum"].size + lp["expand"].size
                             + lp["gamma"].size + lp["beta"].size)
                      for lp in layer_params)
    work_rows = max(ri + 3 * ro for ri, ro in zip(row_in, row_out))
    resident_bytes = (npad128 * (2 * C0 * V + 4 * row_out[-1] + 4 * work_rows)
                      + 2 * param_bytes)
    use_resident = (not force_two_pass) and resident_bytes <= _RESIDENT_BUDGET

    if use_resident:
        npad = npad128
        if npad != N:
            slab = jnp.pad(slab, ((0, 0), (0, npad - N)))
        out_slab = _resident_block(slab, layer_params, n_true=N)
    else:
        tn = _choose_tile(N, max(row_in), max(row_out), max_w_bytes)
        npad = _round_up(N, tn)
        if npad != N:
            slab = jnp.pad(slab, ((0, 0), (0, npad - N)))
        count = float(V * N)
        scale_rows = shift_rows = None
        for lp in layer_params:
            cout = lp["gamma"].shape[0]
            # Fused: previous layer's BN+ReLU prologue + this layer's conv + stats.
            y_pre, s1, s2 = _conv_stats_layer(slab, lp["w_op"], scale_rows, shift_rows,
                                              tn=tn, n_true=N)
            # Tiny host-side reduction -> this layer's BN affine (applied either in
            # the next layer's prologue or in the final BN kernel).
            sum1 = jnp.sum(s1, axis=0)[:, 0]
            sum2 = jnp.sum(s2, axis=0)[:, 0]
            per1 = jnp.sum(sum1.reshape(cout, V), axis=1)
            per2 = jnp.sum(sum2.reshape(cout, V), axis=1)
            mean = per1 / count
            var = jnp.maximum(per2 / count - mean * mean, 0.0)
            inv = jax.lax.rsqrt(var + EPS)
            scale = lp["gamma"][:, 0] * inv
            shift = lp["beta"][:, 0] - mean * scale
            scale_rows = jnp.repeat(scale, V)[:, None]
            shift_rows = jnp.repeat(shift, V)[:, None]
            slab = y_pre
        out_slab = _bn_relu_final(slab, scale_rows, shift_rows, tn=tn)

    # Exit: drop padding, slab [C_last*V, N] -> [B, C_last, V, X, Y, Z]
    out_slab = out_slab[:, :N]
    c_last = out_slab.shape[0] // V
    return jnp.transpose(out_slab.reshape(c_last, V, B, X, Y, Z), (2, 0, 1, 3, 4, 5))


# ----------------------------------------------------------------------------
# Pure-JAX f32 reference (mirrors the PyTorch module, including the conv bias,
# which cancels under training-mode BN) for the correctness check.
# ----------------------------------------------------------------------------
@jax.jit
def reference_forward(x, lap, weights, biases, gammas, betas):
    K = weights[0].shape[0]
    T = _cheb_stack(lap, K)
    for w, b, g, be in zip(weights, biases, gammas, betas):
        xt = jnp.einsum('kvw,bcwxyz->kbcvxyz', T, x)
        y = jnp.einsum('kbcvxyz,kco->bovxyz', xt, w)
        y = y + b[None, :, None, None, None, None]
        mean = jnp.mean(y, axis=(0, 2, 3, 4, 5), keepdims=True)
        var = jnp.mean((y - mean) ** 2, axis=(0, 2, 3, 4, 5), keepdims=True)
        yn = (y - mean) * jax.lax.rsqrt(var + EPS)
        yn = yn * g[None, :, None, None, None, None] + be[None, :, None, None, None, None]
        x = jnp.maximum(yn, 0.0)
    return x


def make_ring_laplacian(V):
    """Deterministic symmetric normalized Laplacian of a ring graph on V nodes."""
    idx = jnp.arange(V)
    adj = (jnp.zeros((V, V), jnp.float32)
           .at[idx, (idx + 1) % V].set(1.0)
           .at[idx, (idx - 1) % V].set(1.0))
    deg = jnp.sum(adj, axis=1)
    dinv = 1.0 / jnp.sqrt(deg)
    return jnp.eye(V, dtype=jnp.float32) - dinv[:, None] * adj * dinv[None, :]


if __name__ == "__main__":
    # Module config: BlockProposed(channels=[4, 8, 8], lap, kernel_sizeSph=3,
    #                              kernel_sizeSpa=3, conv_name='spherical', isoSpa=True)
    channels = [4, 8, 8]
    K = 3                          # kernel_sizeSph (Chebyshev order + 1)
    B, V, X, Y, Z = 2, 8, 8, 8, 8  # N = B*X*Y*Z = 1024

    key = jax.random.PRNGKey(0)
    keys = jax.random.split(key, 1 + 4 * (len(channels) - 1))

    x = jax.random.normal(keys[0], (B, channels[0], V, X, Y, Z), dtype=jnp.float32)
    lap = make_ring_laplacian(V)

    weights, biases, gammas, betas = [], [], [], []
    for i in range(len(channels) - 1):
        cin, cout = channels[i], channels[i + 1]
        kw, kb, kg, kbe = keys[1 + 4 * i: 1 + 4 * i + 4]
        wscale = 1.0 / jnp.sqrt(jnp.float32(K * cin))
        weights.append(jax.random.normal(kw, (K, cin, cout), jnp.float32) * wscale)
        biases.append(0.1 * jax.random.normal(kb, (cout,), jnp.float32))
        gammas.append(1.0 + 0.1 * jax.random.normal(kg, (cout,), jnp.float32))
        betas.append(0.1 * jax.random.normal(kbe, (cout,), jnp.float32))

    layer_params = prepare_block_operators(lap, weights, gammas, betas, V)

    # Path B: single fully-resident kernel (auto-selected at this size).
    out_res = jax.block_until_ready(block_proposed_forward(x, layer_params))
    # Path A: tiled two-pass pipeline with fused BN+ReLU prologues (forced, so
    # both code paths are exercised and validated).
    out_two = jax.block_until_ready(
        block_proposed_forward(x, layer_params, force_two_pass=True))

    ref = jax.block_until_ready(
        reference_forward(x, lap, weights, biases, gammas, betas))

    for out in (out_res, out_two):
        assert out.shape == (B, channels[-1], V, X, Y, Z), out.shape
        assert bool(jnp.all(jnp.isfinite(out)))
        assert bool(jnp.all(out >= 0.0))  # ReLU output
        max_err = float(jnp.max(jnp.abs(out - ref)))
        assert max_err < 0.15, f"max abs error vs f32 reference: {max_err}"

    print("KERNEL_OK")
</pallas_src>

<mosaic_0001>
module attributes {stable_mosaic.version = 11 : i64} {
  func.func @kernel(%arg0: memref<32x1024xbf16, #tpu.memory_space<vmem>>, %arg1: memref<64x32xbf16, #tpu.memory_space<vmem>>, %arg2: memref<8x64xf32, #tpu.memory_space<vmem>>, %arg3: memref<64x8xf32, #tpu.memory_space<vmem>>, %arg4: memref<8x1xf32, #tpu.memory_space<vmem>>, %arg5: memref<8x1xf32, #tpu.memory_space<vmem>>, %arg6: memref<64x64xbf16, #tpu.memory_space<vmem>>, %arg7: memref<8x64xf32, #tpu.memory_space<vmem>>, %arg8: memref<64x8xf32, #tpu.memory_space<vmem>>, %arg9: memref<8x1xf32, #tpu.memory_space<vmem>>, %arg10: memref<8x1xf32, #tpu.memory_space<vmem>>, %arg11: memref<64x1024xf32, #tpu.memory_space<vmem>>) attributes {dimension_semantics = [], scalar_prefetch = 0 : i64, scratch_operands = 0 : i64, tpu.core_type = #tpu.core_type<tc>} {
    %c0 = arith.constant 0 : index
    %c0_0 = arith.constant 0 : index
    %0 = vector.load %arg0[%c0, %c0_0] : memref<32x1024xbf16, #tpu.memory_space<vmem>>, vector<32x1024xbf16>
    %c0_1 = arith.constant 0 : index
    %c0_2 = arith.constant 0 : index
    %1 = vector.load %arg1[%c0_1, %c0_2] : memref<64x32xbf16, #tpu.memory_space<vmem>>, vector<64x32xbf16>
    %cst = arith.constant dense<0.000000e+00> : vector<64x1024xf32>
    %2 = tpu.matmul %1, %0, %cst {dimension_numbers = #tpu.dot_dimension_numbers<[1], [0], [0], [1], [0, 0, 1, 1], [], []>} : vector<64x32xbf16>, vector<32x1024xbf16>, vector<64x1024xf32> -> vector<64x1024xf32>
    %c0_3 = arith.constant 0 : index
    %c0_4 = arith.constant 0 : index
    %3 = vector.load %arg2[%c0_3, %c0_4] : memref<8x64xf32, #tpu.memory_space<vmem>>, vector<8x64xf32>
    %cst_5 = arith.constant dense<0.000000e+00> : vector<8x1024xf32>
    %4 = tpu.matmul %3, %2, %cst_5 {dimension_numbers = #tpu.dot_dimension_numbers<[1], [0], [0], [1], [0, 0, 1, 1], [], []>} : vector<8x64xf32>, vector<64x1024xf32>, vector<8x1024xf32> -> vector<8x1024xf32>
    %c0_6 = arith.constant 0 : index
    %c0_7 = arith.constant 0 : index
    %5 = vector.load %arg2[%c0_6, %c0_7] : memref<8x64xf32, #tpu.memory_space<vmem>>, vector<8x64xf32>
    %6 = arith.mulf %2, %2 : vector<64x1024xf32>
    %cst_8 = arith.constant dense<0.000000e+00> : vector<8x1024xf32>
    %7 = tpu.matmul %5, %6, %cst_8 {dimension_numbers = #tpu.dot_dimension_numbers<[1], [0], [0], [1], [0, 0, 1, 1], [], []>} : vector<8x64xf32>, vector<64x1024xf32>, vector<8x1024xf32> -> vector<8x1024xf32>
    %cst_9 = arith.constant dense<0.000000e+00> : vector<8xf32>
    %8 = vector.multi_reduction <add>, %4, %cst_9 [1] : vector<8x1024xf32> to vector<8xf32>
    %9 = vector.shape_cast %8 : vector<8xf32> to vector<8x1xf32>
    %cst_10 = arith.constant 1.22070313E-4 : f32
    %10 = vector.broadcast %cst_10 : f32 to vector<8x1xf32>
    %11 = arith.mulf %9, %10 : vector<8x1xf32>
    %cst_11 = arith.constant dense<0.000000e+00> : vector<8xf32>
    %12 = vector.multi_reduction <add>, %7, %cst_11 [1] : vector<8x1024xf32> to vector<8xf32>
    %13 = vector.shape_cast %12 : vector<8xf32> to vector<8x1xf32>
    %cst_12 = arith.constant 1.22070313E-4 : f32
    %14 = vector.broadcast %cst_12 : f32 to vector<8x1xf32>
    %15 = arith.mulf %13, %14 : vector<8x1xf32>
    %16 = arith.mulf %11, %11 : vector<8x1xf32>
    %17 = arith.subf %15, %16 : vector<8x1xf32>
    %cst_13 = arith.constant 0.000000e+00 : f32
    %18 = vector.broadcast %cst_13 : f32 to vector<8x1xf32>
    %19 = arith.maximumf %17, %18 : vector<8x1xf32>
    %cst_14 = arith.constant 9.99999974E-6 : f32
    %20 = vector.broadcast %cst_14 : f32 to vector<8x1xf32>
    %21 = arith.addf %19, %20 : vector<8x1xf32>
    %22 = math.rsqrt %21 : vector<8x1xf32>
    %c0_15 = arith.constant 0 : index
    %c0_16 = arith.constant 0 : index
    %23 = vector.load %arg4[%c0_15, %c0_16] : memref<8x1xf32, #tpu.memory_space<vmem>>, vector<8x1xf32>
    %24 = arith.mulf %23, %22 : vector<8x1xf32>
    %c0_17 = arith.constant 0 : index
    %c0_18 = arith.constant 0 : index
    %25 = vector.load %arg5[%c0_17, %c0_18] : memref<8x1xf32, #tpu.memory_space<vmem>>, vector<8x1xf32>
    %26 = arith.mulf %11, %24 : vector<8x1xf32>
    %27 = arith.subf %25, %26 : vector<8x1xf32>
    %c0_19 = arith.constant 0 : index
    %c0_20 = arith.constant 0 : index
    %28 = vector.load %arg3[%c0_19, %c0_20] : memref<64x8xf32, #tpu.memory_space<vmem>>, vector<64x8xf32>
    %29 = vector.shape_cast %24 : vector<8x1xf32> to vector<8x1xf32>
    %30 = vector.broadcast %29 : vector<8x1xf32> to vector<8x128xf32>
    %cst_21 = arith.constant dense<0.000000e+00> : vector<64x128xf32>
    %31 = tpu.matmul %28, %30, %cst_21 {dimension_numbers = #tpu.dot_dimension_numbers<[1], [0], [0], [1], [0, 0, 1, 1], [], []>} : vector<64x8xf32>, vector<8x128xf32>, vector<64x128xf32> -> vector<64x128xf32>
    %32 = vector.extract_strided_slice %31 {offsets = [0, 0], sizes = [64, 1], strides = [1, 1]} : vector<64x128xf32> to vector<64x1xf32>
    %c0_22 = arith.constant 0 : index
    %c0_23 = arith.constant 0 : index
    %33 = vector.load %arg3[%c0_22, %c0_23] : memref<64x8xf32, #tpu.memory_space<vmem>>, vector<64x8xf32>
    %34 = vector.shape_cast %27 : vector<8x1xf32> to vector<8x1xf32>
    %35 = vector.broadcast %34 : vector<8x1xf32> to vector<8x128xf32>
    %cst_24 = arith.constant dense<0.000000e+00> : vector<64x128xf32>
    %36 = tpu.matmul %33, %35, %cst_24 {dimension_numbers = #tpu.dot_dimension_numbers<[1], [0], [0], [1], [0, 0, 1, 1], [], []>} : vector<64x8xf32>, vector<8x128xf32>, vector<64x128xf32> -> vector<64x128xf32>
    %37 = vector.extract_strided_slice %36 {offsets = [0, 0], sizes = [64, 1], strides = [1, 1]} : vector<64x128xf32> to vector<64x1xf32>
    %38 = vector.broadcast %32 : vector<64x1xf32> to vector<64x1024xf32>
    %39 = arith.mulf %2, %38 : vector<64x1024xf32>
    %40 = vector.broadcast %37 : vector<64x1xf32> to vector<64x1024xf32>
    %41 = arith.addf %39, %40 : vector<64x1024xf32>
    %cst_25 = arith.constant 0.000000e+00 : f32
    %42 = vector.broadcast %cst_25 : f32 to vector<64x1024xf32>
    %43 = arith.maximumf %41, %42 : vector<64x1024xf32>
    %44 = arith.truncf %43 : vector<64x1024xf32> to vector<64x1024xbf16>
    %c0_26 = arith.constant 0 : index
    %c0_27 = arith.constant 0 : index
    %45 = vector.load %arg6[%c0_26, %c0_27] : memref<64x64xbf16, #tpu.memory_space<vmem>>, vector<64x64xbf16>
    %cst_28 = arith.constant dense<0.000000e+00> : vector<64x1024xf32>
    %46 = tpu.matmul %45, %44, %cst_28 {dimension_numbers = #tpu.dot_dimension_numbers<[1], [0], [0], [1], [0, 0, 1, 1], [], []>} : vector<64x64xbf16>, vector<64x1024xbf16>, vector<64x1024xf32> -> vector<64x1024xf32>
    %c0_29 = arith.constant 0 : index
    %c0_30 = arith.constant 0 : index
    %47 = vector.load %arg7[%c0_29, %c0_30] : memref<8x64xf32, #tpu.memory_space<vmem>>, vector<8x64xf32>
    %cst_31 = arith.constant dense<0.000000e+00> : vector<8x1024xf32>
    %48 = tpu.matmul %47, %46, %cst_31 {dimension_numbers = #tpu.dot_dimension_numbers<[1], [0], [0], [1], [0, 0, 1, 1], [], []>} : vector<8x64xf32>, vector<64x1024xf32>, vector<8x1024xf32> -> vector<8x1024xf32>
    %c0_32 = arith.constant 0 : index
    %c0_33 = arith.constant 0 : index
    %49 = vector.load %arg7[%c0_32, %c0_33] : memref<8x64xf32, #tpu.memory_space<vmem>>, vector<8x64xf32>
    %50 = arith.mulf %46, %46 : vector<64x1024xf32>
    %cst_34 = arith.constant dense<0.000000e+00> : vector<8x1024xf32>
    %51 = tpu.matmul %49, %50, %cst_34 {dimension_numbers = #tpu.dot_dimension_numbers<[1], [0], [0], [1], [0, 0, 1, 1], [], []>} : vector<8x64xf32>, vector<64x1024xf32>, vector<8x1024xf32> -> vector<8x1024xf32>
    %cst_35 = arith.constant dense<0.000000e+00> : vector<8xf32>
    %52 = vector.multi_reduction <add>, %48, %cst_35 [1] : vector<8x1024xf32> to vector<8xf32>
    %53 = vector.shape_cast %52 : vector<8xf32> to vector<8x1xf32>
    %cst_36 = arith.constant 1.22070313E-4 : f32
    %54 = vector.broadcast %cst_36 : f32 to vector<8x1xf32>
    %55 = arith.mulf %53, %54 : vector<8x1xf32>
    %cst_37 = arith.constant dense<0.000000e+00> : vector<8xf32>
    %56 = vector.multi_reduction <add>, %51, %cst_37 [1] : vector<8x1024xf32> to vector<8xf32>
    %57 = vector.shape_cast %56 : vector<8xf32> to vector<8x1xf32>
    %cst_38 = arith.constant 1.22070313E-4 : f32
    %58 = vector.broadcast %cst_38 : f32 to vector<8x1xf32>
    %59 = arith.mulf %57, %58 : vector<8x1xf32>
    %60 = arith.mulf %55, %55 : vector<8x1xf32>
    %61 = arith.subf %59, %60 : vector<8x1xf32>
    %cst_39 = arith.constant 0.000000e+00 : f32
    %62 = vector.broadcast %cst_39 : f32 to vector<8x1xf32>
    %63 = arith.maximumf %61, %62 : vector<8x1xf32>
    %cst_40 = arith.constant 9.99999974E-6 : f32
    %64 = vector.broadcast %cst_40 : f32 to vector<8x1xf32>
    %65 = arith.addf %63, %64 : vector<8x1xf32>
    %66 = math.rsqrt %65 : vector<8x1xf32>
    %c0_41 = arith.constant 0 : index
    %c0_42 = arith.constant 0 : index
    %67 = vector.load %arg9[%c0_41, %c0_42] : memref<8x1xf32, #tpu.memory_space<vmem>>, vector<8x1xf32>
    %68 = arith.mulf %67, %66 : vector<8x1xf32>
    %c0_43 = arith.constant 0 : index
    %c0_44 = arith.constant 0 : index
    %69 = vector.load %arg10[%c0_43, %c0_44] : memref<8x1xf32, #tpu.memory_space<vmem>>, vector<8x1xf32>
    %70 = arith.mulf %55, %68 : vector<8x1xf32>
    %71 = arith.subf %69, %70 : vector<8x1xf32>
    %c0_45 = arith.constant 0 : index
    %c0_46 = arith.constant 0 : index
    %72 = vector.load %arg8[%c0_45, %c0_46] : memref<64x8xf32, #tpu.memory_space<vmem>>, vector<64x8xf32>
    %73 = vector.shape_cast %68 : vector<8x1xf32> to vector<8x1xf32>
    %74 = vector.broadcast %73 : vector<8x1xf32> to vector<8x128xf32>
    %cst_47 = arith.constant dense<0.000000e+00> : vector<64x128xf32>
    %75 = tpu.matmul %72, %74, %cst_47 {dimension_numbers = #tpu.dot_dimension_numbers<[1], [0], [0], [1], [0, 0, 1, 1], [], []>} : vector<64x8xf32>, vector<8x128xf32>, vector<64x128xf32> -> vector<64x128xf32>
    %76 = vector.extract_strided_slice %75 {offsets = [0, 0], sizes = [64, 1], strides = [1, 1]} : vector<64x128xf32> to vector<64x1xf32>
    %c0_48 = arith.constant 0 : index
    %c0_49 = arith.constant 0 : index
    %77 = vector.load %arg8[%c0_48, %c0_49] : memref<64x8xf32, #tpu.memory_space<vmem>>, vector<64x8xf32>
    %78 = vector.shape_cast %71 : vector<8x1xf32> to vector<8x1xf32>
    %79 = vector.broadcast %78 : vector<8x1xf32> to vector<8x128xf32>
    %cst_50 = arith.constant dense<0.000000e+00> : vector<64x128xf32>
    %80 = tpu.matmul %77, %79, %cst_50 {dimension_numbers = #tpu.dot_dimension_numbers<[1], [0], [0], [1], [0, 0, 1, 1], [], []>} : vector<64x8xf32>, vector<8x128xf32>, vector<64x128xf32> -> vector<64x128xf32>
    %81 = vector.extract_strided_slice %80 {offsets = [0, 0], sizes = [64, 1], strides = [1, 1]} : vector<64x128xf32> to vector<64x1xf32>
    %82 = vector.broadcast %76 : vector<64x1xf32> to vector<64x1024xf32>
    %83 = arith.mulf %46, %82 : vector<64x1024xf32>
    %84 = vector.broadcast %81 : vector<64x1xf32> to vector<64x1024xf32>
    %85 = arith.addf %83, %84 : vector<64x1024xf32>
    %cst_51 = arith.constant 0.000000e+00 : f32
    %86 = vector.broadcast %cst_51 : f32 to vector<64x1024xf32>
    %87 = arith.maximumf %85, %86 : vector<64x1024xf32>
    %c0_52 = arith.constant 0 : index
    %c0_53 = arith.constant 0 : index
    %88 = vector.load %arg11[%c0_52, %c0_53] : memref<64x1024xf32, #tpu.memory_space<vmem>>, vector<64x1024xf32>
    tpu.vector_store %arg11[%c0_52, %c0_53], %87 {strides = array<i32>} : memref<64x1024xf32, #tpu.memory_space<vmem>>, vector<64x1024xf32>,
    return
  }
}

</mosaic_0001>

<llo_original>
// kernel: block_proposed_forward.1
$region0: #{block_proposed_forward.1}
  #allocation0 [shape = 'u32[]', space=smem, size = 0x4, offset = 0x4, fixed_abs, tag = 'smem constant byte address 0x4 - core index']
  #allocation1 [shape = 'u32[144,128]{1,0:T(1,128)}', space=vmem, size = 0x12000, scoped, tag = 'internal scratch']
  %s0 = inlined_call_operand.vmem [shape: bf16[32,1024], index: 0, kind: input, shape index: {}]
  %s1 = inlined_call_operand.vmem [shape: bf16[64,32], index: 1, kind: input, shape index: {}]
  %s2 = inlined_call_operand.vmem [shape: f32[8,64], index: 2, kind: input, shape index: {}]
  %s3 = inlined_call_operand.vmem [shape: f32[64,8], index: 3, kind: input, shape index: {}]
  %s4 = inlined_call_operand.vmem [shape: f32[8,1], index: 4, kind: input, shape index: {}]
  %s5 = inlined_call_operand.vmem [shape: f32[8,1], index: 5, kind: input, shape index: {}]
  %s6 = inlined_call_operand.vmem [shape: bf16[64,64], index: 6, kind: input, shape index: {}]
  %s7 = inlined_call_operand.vmem [shape: f32[8,64], index: 7, kind: input, shape index: {}]
  %s8 = inlined_call_operand.vmem [shape: f32[64,8], index: 8, kind: input, shape index: {}]
  %s9 = inlined_call_operand.vmem [shape: f32[8,1], index: 9, kind: input, shape index: {}]
  %s10 = inlined_call_operand.vmem [shape: f32[8,1], index: 10, kind: input, shape index: {}]
  %s11 = inlined_call_operand.vmem [shape: f32[64,1024], index: 11, kind: output, shape index: {}]
  %s12 = sld [smem:[#allocation0]]
  $region54: #{block_proposed_forward.1} parent=0
    _
  %s14 = ssub.s32 1, %s12
  %s15 = scalar_select 0, %s14, %s12
  // Predicated region
  $region2: #{block_proposed_forward.1} parent=0 // pred_check
    _
  $region3: #{block_proposed_forward.1} parent=0 // pred_check_branch
    %17 = sbr.rel (0) target = $region5
  $region4: #{block_proposed_forward.1} parent=0 // pred_region
    _
  $region5: #{block_proposed_forward.1} parent=0 // pred_fallthru
    _
  // Predicated region
  $region6: #{block_proposed_forward.1} parent=0 // pred_check
    _
  $region7: #{block_proposed_forward.1} parent=0 // pred_check_branch
    %19 = sbr.rel (0) target = $region9
  $region8: #{block_proposed_forward.1} parent=0 // pred_region
    _
  $region9: #{block_proposed_forward.1} parent=0 // pred_fallthru
    _
  // Predicated region
  $region10: #{block_proposed_forward.1} parent=0 // pred_check
    _
  $region11: #{block_proposed_forward.1} parent=0 // pred_check_branch
    %21 = sbr.rel (0) target = $region13
  $region12: #{block_proposed_forward.1} parent=0 // pred_region
    _
  $region13: #{block_proposed_forward.1} parent=0 // pred_fallthru
    _
  // Predicated region
  $region14: #{block_proposed_forward.1} parent=0 // pred_check
    _
  $region15: #{block_proposed_forward.1} parent=0 // pred_check_branch
    %23 = sbr.rel (0) target = $region17
  $region16: #{block_proposed_forward.1} parent=0 // pred_region
    _
  $region17: #{block_proposed_forward.1} parent=0 // pred_fallthru
    _
  // Predicated region
  $region18: #{block_proposed_forward.1} parent=0 // pred_check
    _
  $region19: #{block_proposed_forward.1} parent=0 // pred_check_branch
    %25 = sbr.rel (0) target = $region21
  $region20: #{block_proposed_forward.1} parent=0 // pred_region
    _
  $region21: #{block_proposed_forward.1} parent=0 // pred_fallthru
    _
  // Predicated region
  $region22: #{block_proposed_forward.1} parent=0 // pred_check
    _
  $region23: #{block_proposed_forward.1} parent=0 // pred_check_branch
    %27 = sbr.rel (0) target = $region25
  $region24: #{block_proposed_forward.1} parent=0 // pred_region
    _
  $region25: #{block_proposed_forward.1} parent=0 // pred_fallthru
    _
  // Predicated region
  $region26: #{block_proposed_forward.1} parent=0 // pred_check
    _
  $region27: #{block_proposed_forward.1} parent=0 // pred_check_branch
    %29 = sbr.rel (0) target = $region29
  $region28: #{block_proposed_forward.1} parent=0 // pred_region
    _
  $region29: #{block_proposed_forward.1} parent=0 // pred_fallthru
    _
  // Predicated region
  $region30: #{block_proposed_forward.1} parent=0 // pred_check
    _
  $region31: #{block_proposed_forward.1} parent=0 // pred_check_branch
    %31 = sbr.rel (0) target = $region33
  $region32: #{block_proposed_forward.1} parent=0 // pred_region
    _
  $region33: #{block_proposed_forward.1} parent=0 // pred_fallthru
    _
  // Predicated region
  $region34: #{block_proposed_forward.1} parent=0 // pred_check
    _
  $region35: #{block_proposed_forward.1} parent=0 // pred_check_branch
    %33 = sbr.rel (0) target = $region37
  $region36: #{block_proposed_forward.1} parent=0 // pred_region
    _
  $region37: #{block_proposed_forward.1} parent=0 // pred_fallthru
    _
  // Predicated region
  $region38: #{block_proposed_forward.1} parent=0 // pred_check
    _
  $region39: #{block_proposed_forward.1} parent=0 // pred_check_branch
    %35 = sbr.rel (0) target = $region41
  $region40: #{block_proposed_forward.1} parent=0 // pred_region
    _
  $region41: #{block_proposed_forward.1} parent=0 // pred_fallthru
    _
  // Predicated region
  $region42: #{block_proposed_forward.1} parent=0 // pred_check
    _
  $region43: #{block_proposed_forward.1} parent=0 // pred_check_branch
    %37 = sbr.rel (0) target = $region45
  $region44: #{block_proposed_forward.1} parent=0 // pred_region
    _
  $region45: #{block_proposed_forward.1} parent=0 // pred_fallthru
    _
  %v39 = vld [vmem:[%s0] sm:$0xff]
  %v40 = vld [vmem:[%s0 + $0x8] sm:$0xff]
  %v41 = vld [vmem:[%s0 + $0x10] sm:$0xff]
  %v42 = vld [vmem:[%s0 + $0x18] sm:$0xff]
  %v43 = vld [vmem:[%s0 + $0x20] sm:$0xff]
  %v44 = vld [vmem:[%s0 + $0x28] sm:$0xff]
  %v45 = vld [vmem:[%s0 + $0x30] sm:$0xff]
  %v46 = vld [vmem:[%s0 + $0x38] sm:$0xff]
  %v47 = vld [vmem:[%s0 + $0x40] sm:$0xff]
  %v48 = vld [vmem:[%s0 + $0x48] sm:$0xff]
  %v49 = vld [vmem:[%s0 + $0x50] sm:$0xff]
  %v50 = vld [vmem:[%s0 + $0x58] sm:$0xff]
  %v51 = vld [vmem:[%s0 + $0x60] sm:$0xff]
  %v52 = vld [vmem:[%s0 + $0x68] sm:$0xff]
  %v53 = vld [vmem:[%s0 + $0x70] sm:$0xff]
  %v54 = vld [vmem:[%s0 + $0x78] sm:$0xff]
  %v55 = vld [vmem:[%s1] sm:$0xf]
  %v56 = vld [vmem:[%s1 + $0x4] sm:$0xf]
  %v57 = vld [vmem:[%s1 + $0x8] sm:$0xf]
  %v58 = vld [vmem:[%s1 + $0xc] sm:$0xf]
  %v59 = vld [vmem:[%s1 + $0x10] sm:$0xf]
  %v60 = vld [vmem:[%s1 + $0x14] sm:$0xf]
  %v61 = vld [vmem:[%s1 + $0x18] sm:$0xf]
  %v62 = vld [vmem:[%s1 + $0x1c] sm:$0xf]
  %v71 = vunpack.c.l.b16 %v55
  %v72 = vunpack.c.l.b16 %v56
  %v73 = vunpack.c.l.b16 %v57
  %v74 = vunpack.c.l.b16 %v58
  %v75 = vunpack.c.l.b16 %v59
  %v76 = vunpack.c.l.b16 %v60
  %v77 = vunpack.c.l.b16 %v61
  %v78 = vunpack.c.l.b16 %v62
  %v79 = vpack.c.b16 %v72, %v71
  %v80 = vpack.c.b16 %v74, %v73
  %v81 = vpack.c.b16 %v76, %v75
  %v82 = vpack.c.b16 %v78, %v77
  %v99 = vunpack.c.l.b16 %v39
  %v100 = vunpack.c.h.b16 %v39
  %v101 = vunpack.c.l.b16 %v40
  %v102 = vunpack.c.h.b16 %v40
  %v103 = vunpack.c.l.b16 %v41
  %v104 = vunpack.c.h.b16 %v41
  %v105 = vunpack.c.l.b16 %v42
  %v106 = vunpack.c.h.b16 %v42
  %v107 = vunpack.c.l.b16 %v43
  %v108 = vunpack.c.h.b16 %v43
  %v109 = vunpack.c.l.b16 %v44
  %v110 = vunpack.c.h.b16 %v44
  %v111 = vunpack.c.l.b16 %v45
  %v112 = vunpack.c.h.b16 %v45
  %v113 = vunpack.c.l.b16 %v46
  %v114 = vunpack.c.h.b16 %v46
  %v115 = vunpack.c.l.b16 %v47
  %v116 = vunpack.c.h.b16 %v47
  %v117 = vunpack.c.l.b16 %v48
  %v118 = vunpack.c.h.b16 %v48
  %v119 = vunpack.c.l.b16 %v49
  %v120 = vunpack.c.h.b16 %v49
  %v121 = vunpack.c.l.b16 %v50
  %v122 = vunpack.c.h.b16 %v50
  %v123 = vunpack.c.l.b16 %v51
  %v124 = vunpack.c.h.b16 %v51
  %v125 = vunpack.c.l.b16 %v52
  %v126 = vunpack.c.h.b16 %v52
  %v127 = vunpack.c.l.b16 %v53
  %v128 = vunpack.c.h.b16 %v53
  %v129 = vunpack.c.l.b16 %v54
  %v130 = vunpack.c.h.b16 %v54
  %v131 = vpack.c.b16 %v107, %v99
  %v132 = vpack.c.b16 %v108, %v100
  %v133 = vpack.c.b16 %v109, %v101
  %v134 = vpack.c.b16 %v110, %v102
  %v135 = vpack.c.b16 %v111, %v103
  %v136 = vpack.c.b16 %v112, %v104
  %v137 = vpack.c.b16 %v113, %v105
  %v138 = vpack.c.b16 %v114, %v106
  %v139 = vpack.c.b16 %v123, %v115
  %v140 = vpack.c.b16 %v124, %v116
  %v141 = vpack.c.b16 %v125, %v117
  %v142 = vpack.c.b16 %v126, %v118
  %v143 = vpack.c.b16 %v127, %v119
  %v144 = vpack.c.b16 %v128, %v120
  %v145 = vpack.c.b16 %v129, %v121
  %v146 = vpack.c.b16 %v130, %v122
  %vm163 = vcmask 261120
  %v165 = vsel %vm163, %v79, 0
  %v168 = vsel %vm163, %v80, 0
  %v171 = vsel %vm163, %v81, 0
  %v174 = vsel %vm163, %v82, 0
  %176 = vmatprep.subr.bf16.mxu0 %v132
  %177 = vmatpush1.bf16.msra.mxu0 %v131
  %178 = vmatprep.subr.bf16.mxu0 %v140
  %179 = vmatpush1.bf16.msra.mxu0 %v139
  %180 = vmatprep.subr.bf16.mxu0 0
  %181 = vmatpush1.bf16.msra.mxu0 0
  %182 = vmatprep.subr.bf16.mxu0 0
  %183 = vmatpush1.bf16.msra.mxu0 0
  %184 = vmatprep.subr.bf16.mxu0 0
  %185 = vmatpush1.bf16.msra.mxu0 0
  %186 = vmatprep.subr.bf16.mxu0 0
  %187 = vmatpush1.bf16.msra.mxu0 0
  %188 = vmatprep.subr.bf16.mxu0 0
  %189 = vmatpush1.bf16.msra.mxu0 0
  %190 = vmatprep.subr.bf16.mxu0 0
  %191 = vmatpush1.bf16.msra.mxu0 0
  %192 = vmatprep.subr.bf16.mxu0 0
  %193 = vmatpush1.bf16.msra.mxu0 0
  %194 = vmatprep.subr.bf16.mxu0 0
  %195 = vmatpush1.bf16.msra.mxu0 0
  %196 = vmatprep.subr.bf16.mxu0 0
  %197 = vmatpush1.bf16.msra.mxu0 0
  %198 = vmatprep.subr.bf16.mxu0 0
  %199 = vmatpush1.bf16.msra.mxu0 0
  %200 = vmatprep.subr.bf16.mxu0 0
  %201 = vmatpush1.bf16.msra.mxu0 0
  %202 = vmatprep.subr.bf16.mxu0 0
  %203 = vmatpush1.bf16.msra.mxu0 0
  %204 = vmatprep.subr.bf16.mxu0 0
  %205 = vmatpush1.bf16.msra.mxu0 0
  %206 = vmatprep.subr.bf16.mxu0 0
  %207 = vmatpush1.bf16.msra.mxu0 0
  %208 = vmatprep.mubr.bf16.mxu0 0
  %209 = vmatmul.mubr.bf16.gmra.mrb[0].mxu0 %v165
  %v210 = vpop.f32.mrb[0].mxu0
  %v211 = vadd.f32 0.0, %v210
  %v212 = vpop.f32.mrb[0].mxu0
  %v213 = vadd.f32 0.0, %v212
  %v214 = vpop.f32.mrb[0].mxu0
  %v215 = vadd.f32 0.0, %v214
  %v216 = vpop.f32.mrb[0].mxu0
  %v217 = vadd.f32 0.0, %v216
  %218 = vmatprep.mubr.bf16.mxu0 0
  %219 = vmatmul.mubr.bf16.gmra.mrb[0].mxu0 %v168
  %v220 = vpop.f32.mrb[0].mxu0
  %v221 = vadd.f32 0.0, %v220
  %v222 = vpop.f32.mrb[0].mxu0
  %v223 = vadd.f32 0.0, %v222
  %v224 = vpop.f32.mrb[0].mxu0
  %v225 = vadd.f32 0.0, %v224
  %v226 = vpop.f32.mrb[0].mxu0
  %v227 = vadd.f32 0.0, %v226
  %228 = vmatprep.mubr.bf16.mxu0 0
  %229 = vmatmul.mubr.bf16.gmra.mrb[0].mxu0 %v171
  %v230 = vpop.f32.mrb[0].mxu0
  %v231 = vadd.f32 0.0, %v230
  %v232 = vpop.f32.mrb[0].mxu0
  %v233 = vadd.f32 0.0, %v232
  %v234 = vpop.f32.mrb[0].mxu0
  %v235 = vadd.f32 0.0, %v234
  %v236 = vpop.f32.mrb[0].mxu0
  %v237 = vadd.f32 0.0, %v236
  %238 = vmatprep.mubr.bf16.mxu0 0
  %239 = vmatmul.mubr.bf16.gmra.mrb[0].mxu0 %v174
  %v240 = vpop.f32.mrb[0].mxu0
  %v241 = vadd.f32 0.0, %v240
  %v242 = vpop.f32.mrb[0].mxu0
  %v243 = vadd.f32 0.0, %v242
  %v244 = vpop.f32.mrb[0].mxu0
  %v245 = vadd.f32 0.0, %v244
  %v246 = vpop.f32.mrb[0].mxu0
  %v247 = vadd.f32 0.0, %v246
  %248 = vdwg.mxu0
  %249 = vmatprep.subr.bf16.mxu0 %v134
  %250 = vmatpush1.bf16.msra.mxu0 %v133
  %251 = vmatprep.subr.bf16.mxu0 %v142
  %252 = vmatpush1.bf16.msra.mxu0 %v141
  %253 = vmatprep.subr.bf16.mxu0 0
  %254 = vmatpush1.bf16.msra.mxu0 0
  %255 = vmatprep.subr.bf16.mxu0 0
  %256 = vmatpush1.bf16.msra.mxu0 0
  %257 = vmatprep.subr.bf16.mxu0 0
  %258 = vmatpush1.bf16.msra.mxu0 0
  %259 = vmatprep.subr.bf16.mxu0 0
  %260 = vmatpush1.bf16.msra.mxu0 0
  %261 = vmatprep.subr.bf16.mxu0 0
  %262 = vmatpush1.bf16.msra.mxu0 0
  %263 = vmatprep.subr.bf16.mxu0 0
  %264 = vmatpush1.bf16.msra.mxu0 0
  %265 = vmatprep.subr.bf16.mxu0 0
  %266 = vmatpush1.bf16.msra.mxu0 0
  %267 = vmatprep.subr.bf16.mxu0 0
  %268 = vmatpush1.bf16.msra.mxu0 0
  %269 = vmatprep.subr.bf16.mxu0 0
  %270 = vmatpush1.bf16.msra.mxu0 0
  %271 = vmatprep.subr.bf16.mxu0 0
  %272 = vmatpush1.bf16.msra.mxu0 0
  %273 = vmatprep.subr.bf16.mxu0 0
  %274 = vmatpush1.bf16.msra.mxu0 0
  %275 = vmatprep.subr.bf16.mxu0 0
  %276 = vmatpush1.bf16.msra.mxu0 0
  %277 = vmatprep.subr.bf16.mxu0 0
  %278 = vmatpush1.bf16.msra.mxu0 0
  %279 = vmatprep.subr.bf16.mxu0 0
  %280 = vmatpush1.bf16.msra.mxu0 0
  %281 = vmatprep.mubr.bf16.mxu0 0
  %282 = vmatmul.mubr.bf16.gmra.mrb[0].mxu0 %v165
  %v283 = vpop.f32.mrb[0].mxu0
  %v284 = vadd.f32 0.0, %v283
  %v285 = vpop.f32.mrb[0].mxu0
  %v286 = vadd.f32 0.0, %v285
  %v287 = vpop.f32.mrb[0].mxu0
  %v288 = vadd.f32 0.0, %v287
  %v289 = vpop.f32.mrb[0].mxu0
  %v290 = vadd.f32 0.0, %v289
  %291 = vmatprep.mubr.bf16.mxu0 0
  %292 = vmatmul.mubr.bf16.gmra.mrb[0].mxu0 %v168
  %v293 = vpop.f32.mrb[0].mxu0
  %v294 = vadd.f32 0.0, %v293
  %v295 = vpop.f32.mrb[0].mxu0
  %v296 = vadd.f32 0.0, %v295
  %v297 = vpop.f32.mrb[0].mxu0
  %v298 = vadd.f32 0.0, %v297
  %v299 = vpop.f32.mrb[0].mxu0
  %v300 = vadd.f32 0.0, %v299
  %301 = vmatprep.mubr.bf16.mxu0 0
  %302 = vmatmul.mubr.bf16.gmra.mrb[0].mxu0 %v171
  %v303 = vpop.f32.mrb[0].mxu0
  %v304 = vadd.f32 0.0, %v303
  %v305 = vpop.f32.mrb[0].mxu0
  %v306 = vadd.f32 0.0, %v305
  %v307 = vpop.f32.mrb[0].mxu0
  %v308 = vadd.f32 0.0, %v307
  %v309 = vpop.f32.mrb[0].mxu0
  %v310 = vadd.f32 0.0, %v309
  %311 = vmatprep.mubr.bf16.mxu0 0
  %312 = vmatmul.mubr.bf16.gmra.mrb[0].mxu0 %v174
  %v313 = vpop.f32.mrb[0].mxu0
  %v314 = vadd.f32 0.0, %v313
  %v315 = vpop.f32.mrb[0].mxu0
  %v316 = vadd.f32 0.0, %v315
  %v317 = vpop.f32.mrb[0].mxu0
  %v318 = vadd.f32 0.0, %v317
  %v319 = vpop.f32.mrb[0].mxu0
  %v320 = vadd.f32 0.0, %v319
  %321 = vdwg.mxu0
  %322 = vmatprep.subr.bf16.mxu0 %v136
  %323 = vmatpush1.bf16.msra.mxu0 %v135
  %324 = vmatprep.subr.bf16.mxu0 %v144
  %325 = vmatpush1.bf16.msra.mxu0 %v143
  %326 = vmatprep.subr.bf16.mxu0 0
  %327 = vmatpush1.bf16.msra.mxu0 0
  %328 = vmatprep.subr.bf16.mxu0 0
  %329 = vmatpush1.bf16.msra.mxu0 0
  %330 = vmatprep.subr.bf16.mxu0 0
  %331 = vmatpush1.bf16.msra.mxu0 0
  %332 = vmatprep.subr.bf16.mxu0 0
  %333 = vmatpush1.bf16.msra.mxu0 0
  %334 = vmatprep.subr.bf16.mxu0 0
  %335 = vmatpush1.bf16.msra.mxu0 0
  %336 = vmatprep.subr.bf16.mxu0 0
  %337 = vmatpush1.bf16.msra.mxu0 0
  %338 = vmatprep.subr.bf16.mxu0 0
  %339 = vmatpush1.bf16.msra.mxu0 0
  %340 = vmatprep.subr.bf16.mxu0 0
  %341 = vmatpush1.bf16.msra.mxu0 0
  %342 = vmatprep.subr.bf16.mxu0 0
  %343 = vmatpush1.bf16.msra.mxu0 0
  %344 = vmatprep.subr.bf16.mxu0 0
  %345 = vmatpush1.bf16.msra.mxu0 0
  %346 = vmatprep.subr.bf16.mxu0 0
  %347 = vmatpush1.bf16.msra.mxu0 0
  %348 = vmatprep.subr.bf16.mxu0 0
  %349 = vmatpush1.bf16.msra.mxu0 0
  %350 = vmatprep.subr.bf16.mxu0 0
  %351 = vmatpush1.bf16.msra.mxu0 0
  %352 = vmatprep.subr.bf16.mxu0 0
  %353 = vmatpush1.bf16.msra.mxu0 0
  %354 = vmatprep.mubr.bf16.mxu0 0
  %355 = vmatmul.mubr.bf16.gmra.mrb[0].mxu0 %v165
  %v356 = vpop.f32.mrb[0].mxu0
  %v357 = vadd.f32 0.0, %v356
  %v358 = vpop.f32.mrb[0].mxu0
  %v359 = vadd.f32 0.0, %v358
  %v360 = vpop.f32.mrb[0].mxu0
  %v361 = vadd.f32 0.0, %v360
  %v362 = vpop.f32.mrb[0].mxu0
  %v363 = vadd.f32 0.0, %v362
  %364 = vmatprep.mubr.bf16.mxu0 0
  %365 = vmatmul.mubr.bf16.gmra.mrb[0].mxu0 %v168
  %v366 = vpop.f32.mrb[0].mxu0
  %v367 = vadd.f32 0.0, %v366
  %v368 = vpop.f32.mrb[0].mxu0
  %v369 = vadd.f32 0.0, %v368
  %v370 = vpop.f32.mrb[0].mxu0
  %v371 = vadd.f32 0.0, %v370
  %v372 = vpop.f32.mrb[0].mxu0
  %v373 = vadd.f32 0.0, %v372
  %374 = vmatprep.mubr.bf16.mxu0 0
  %375 = vmatmul.mubr.bf16.gmra.mrb[0].mxu0 %v171
  %v376 = vpop.f32.mrb[0].mxu0
  %v377 = vadd.f32 0.0, %v376
  %v378 = vpop.f32.mrb[0].mxu0
  %v379 = vadd.f32 0.0, %v378
  %v380 = vpop.f32.mrb[0].mxu0
  %v381 = vadd.f32 0.0, %v380
  %v382 = vpop.f32.mrb[0].mxu0
  %v383 = vadd.f32 0.0, %v382
  %384 = vmatprep.mubr.bf16.mxu0 0
  %385 = vmatmul.mubr.bf16.gmra.mrb[0].mxu0 %v174
  %v386 = vpop.f32.mrb[0].mxu0
  %v387 = vadd.f32 0.0, %v386
  %v388 = vpop.f32.mrb[0].mxu0
  %v389 = vadd.f32 0.0, %v388
  %v390 = vpop.f32.mrb[0].mxu0
  %v391 = vadd.f32 0.0, %v390
  %v392 = vpop.f32.mrb[0].mxu0
  %v393 = vadd.f32 0.0, %v392
  %394 = vdwg.mxu0
  %395 = vmatprep.subr.bf16.mxu0 %v138
  %396 = vmatpush1.bf16.msra.mxu0 %v137
  %397 = vmatprep.subr.bf16.mxu0 %v146
  %398 = vmatpush1.bf16.msra.mxu0 %v145
  %399 = vmatprep.subr.bf16.mxu0 0
  %400 = vmatpush1.bf16.msra.mxu0 0
  %401 = vmatprep.subr.bf16.mxu0 0
  %402 = vmatpush1.bf16.msra.mxu0 0
  %403 = vmatprep.subr.bf16.mxu0 0
  %404 = vmatpush1.bf16.msra.mxu0 0
  %405 = vmatprep.subr.bf16.mxu0 0
  %406 = vmatpush1.bf16.msra.mxu0 0
  %407 = vmatprep.subr.bf16.mxu0 0
  %408 = vmatpush1.bf16.msra.mxu0 0
  %409 = vmatprep.subr.bf16.mxu0 0
  %410 = vmatpush1.bf16.msra.mxu0 0
  %411 = vmatprep.subr.bf16.mxu0 0
  %412 = vmatpush1.bf16.msra.mxu0 0
  %413 = vmatprep.subr.bf16.mxu0 0
  %414 = vmatpush1.bf16.msra.mxu0 0
  %415 = vmatprep.subr.bf16.mxu0 0
  %416 = vmatpush1.bf16.msra.mxu0 0
  %417 = vmatprep.subr.bf16.mxu0 0
  %418 = vmatpush1.bf16.msra.mxu0 0
  %419 = vmatprep.subr.bf16.mxu0 0
  %420 = vmatpush1.bf16.msra.mxu0 0
  %421 = vmatprep.subr.bf16.mxu0 0
  %422 = vmatpush1.bf16.msra.mxu0 0
  %423 = vmatprep.subr.bf16.mxu0 0
  %424 = vmatpush1.bf16.msra.mxu0 0
  %425 = vmatprep.subr.bf16.mxu0 0
  %426 = vmatpush1.bf16.msra.mxu0 0
  %427 = vmatprep.mubr.bf16.mxu0 0
  %428 = vmatmul.mubr.bf16.gmra.mrb[0].mxu0 %v165
  %v429 = vpop.f32.mrb[0].mxu0
  %v430 = vadd.f32 0.0, %v429
  %v431 = vpop.f32.mrb[0].mxu0
  %v432 = vadd.f32 0.0, %v431
  %v433 = vpop.f32.mrb[0].mxu0
  %v434 = vadd.f32 0.0, %v433
  %v435 = vpop.f32.mrb[0].mxu0
  %v436 = vadd.f32 0.0, %v435
  %437 = vmatprep.mubr.bf16.mxu0 0
  %438 = vmatmul.mubr.bf16.gmra.mrb[0].mxu0 %v168
  %v439 = vpop.f32.mrb[0].mxu0
  %v440 = vadd.f32 0.0, %v439
  %v441 = vpop.f32.mrb[0].mxu0
  %v442 = vadd.f32 0.0, %v441
  %v443 = vpop.f32.mrb[0].mxu0
  %v444 = vadd.f32 0.0, %v443
  %v445 = vpop.f32.mrb[0].mxu0
  %v446 = vadd.f32 0.0, %v445
  %447 = vmatprep.mubr.bf16.mxu0 0
  %448 = vmatmul.mubr.bf16.gmra.mrb[0].mxu0 %v171
  %v449 = vpop.f32.mrb[0].mxu0
  %v450 = vadd.f32 0.0, %v449
  %v451 = vpop.f32.mrb[0].mxu0
  %v452 = vadd.f32 0.0, %v451
  %v453 = vpop.f32.mrb[0].mxu0
  %v454 = vadd.f32 0.0, %v453
  %v455 = vpop.f32.mrb[0].mxu0
  %v456 = vadd.f32 0.0, %v455
  %457 = vmatprep.mubr.bf16.mxu0 0
  %458 = vmatmul.mubr.bf16.gmra.mrb[0].mxu0 %v174
  %v459 = vpop.f32.mrb[0].mxu0
  %v460 = vadd.f32 0.0, %v459
  %v461 = vpop.f32.mrb[0].mxu0
  %v462 = vadd.f32 0.0, %v461
  %v463 = vpop.f32.mrb[0].mxu0
  %v464 = vadd.f32 0.0, %v463
  %v465 = vpop.f32.mrb[0].mxu0
  %v466 = vadd.f32 0.0, %v465
  %467 = vdwg.mxu0
  %v468 = vld [vmem:[%s2] sm:$0xff]
  %vm469 = vcmask 523264
  %v471 = vsel %vm469, %v468, 0
  %473 = vmatprep.subr.mxu0 %v213
  %474 = vmatpush1.msra.mxu0 %v211
  %475 = vmatprep.subr.mxu0 %v217
  %476 = vmatpush1.msra.mxu0 %v215
  %477 = vmatprep.subr.mxu0 %v223
  %478 = vmatpush1.msra.mxu0 %v221
  %479 = vmatprep.subr.mxu0 %v227
  %480 = vmatpush1.msra.mxu0 %v225
  %481 = vmatprep.subr.mxu0 %v233
  %482 = vmatpush1.msra.mxu0 %v231
  %483 = vmatprep.subr.mxu0 %v237
  %484 = vmatpush1.msra.mxu0 %v235
  %485 = vmatprep.subr.mxu0 %v243
  %486 = vmatpush1.msra.mxu0 %v241
  %487 = vmatprep.subr.mxu0 %v247
  %488 = vmatpush1.msra.mxu0 %v245
  %489 = vmatprep.subr.mxu0 0.0
  %490 = vmatpush1.msra.mxu0 0.0
  %491 = vmatprep.subr.mxu0 0.0
  %492 = vmatpush1.msra.mxu0 0.0
  %493 = vmatprep.subr.mxu0 0.0
  %494 = vmatpush1.msra.mxu0 0.0
  %495 = vmatprep.subr.mxu0 0.0
  %496 = vmatpush1.msra.mxu0 0.0
  %497 = vmatprep.subr.mxu0 0.0
  %498 = vmatpush1.msra.mxu0 0.0
  %499 = vmatprep.subr.mxu0 0.0
  %500 = vmatpush1.msra.mxu0 0.0
  %501 = vmatprep.subr.mxu0 0.0
  %502 = vmatpush1.msra.mxu0 0.0
  %503 = vmatprep.subr.mxu0 0.0
  %504 = vmatpush1.msra.mxu0 0.0
  %505 = vmatprep.subr.mxu0 0.0
  %506 = vmatpush1.msra.mxu0 0.0
  %507 = vmatprep.subr.mxu0 0.0
  %508 = vmatpush1.msra.mxu0 0.0
  %509 = vmatprep.subr.mxu0 0.0
  %510 = vmatpush1.msra.mxu0 0.0
  %511 = vmatprep.subr.mxu0 0.0
  %512 = vmatpush1.msra.mxu0 0.0
  %513 = vmatprep.subr.mxu0 0.0
  %514 = vmatpush1.msra.mxu0 0.0
  %515 = vmatprep.subr.mxu0 0.0
  %516 = vmatpush1.msra.mxu0 0.0
  %517 = vmatprep.subr.mxu0 0.0
  %518 = vmatpush1.msra.mxu0 0.0
  %519 = vmatprep.subr.mxu0 0.0
  %520 = vmatpush1.msra.mxu0 0.0
  %521 = vmatprep.subr.mxu0 0.0
  %522 = vmatpush1.msra.mxu0 0.0
  %523 = vmatprep.subr.mxu0 0.0
  %524 = vmatpush1.msra.mxu0 0.0
  %525 = vmatprep.subr.mxu0 0.0
  %526 = vmatpush1.msra.mxu0 0.0
  %527 = vmatprep.subr.mxu0 0.0
  %528 = vmatpush1.msra.mxu0 0.0
  %529 = vmatprep.subr.mxu0 0.0
  %530 = vmatpush1.msra.mxu0 0.0
  %531 = vmatprep.subr.mxu0 0.0
  %532 = vmatpush1.msra.mxu0 0.0
  %533 = vmatprep.subr.mxu0 0.0
  %534 = vmatpush1.msra.mxu0 0.0
  %535 = vmatprep.subr.mxu0 0.0
  %536 = vmatpush1.msra.mxu0 0.0
  %537 = vmatprep.mubr.f32.mxu0 0.0
  %538 = vmatmul.mubr.f32.gmra.mrb[0].mxu0 %v471
  %v539 = vpop.f32.mrb[0].mxu0
  %v540 = vadd.f32 0.0, %v539
  %v541 = vpop.f32.mrb[0].mxu0
  %v542 = vadd.f32 0.0, %v541
  %543 = vdwg.mxu0
  %544 = vmatprep.subr.mxu0 %v286
  %545 = vmatpush1.msra.mxu0 %v284
  %546 = vmatprep.subr.mxu0 %v290
  %547 = vmatpush1.msra.mxu0 %v288
  %548 = vmatprep.subr.mxu0 %v296
  %549 = vmatpush1.msra.mxu0 %v294
  %550 = vmatprep.subr.mxu0 %v300
  %551 = vmatpush1.msra.mxu0 %v298
  %552 = vmatprep.subr.mxu0 %v306
  %553 = vmatpush1.msra.mxu0 %v304
  %554 = vmatprep.subr.mxu0 %v310
  %555 = vmatpush1.msra.mxu0 %v308
  %556 = vmatprep.subr.mxu0 %v316
  %557 = vmatpush1.msra.mxu0 %v314
  %558 = vmatprep.subr.mxu0 %v320
  %559 = vmatpush1.msra.mxu0 %v318
  %560 = vmatprep.subr.mxu0 0.0
  %561 = vmatpush1.msra.mxu0 0.0
  %562 = vmatprep.subr.mxu0 0.0
  %563 = vmatpush1.msra.mxu0 0.0
  %564 = vmatprep.subr.mxu0 0.0
  %565 = vmatpush1.msra.mxu0 0.0
  %566 = vmatprep.subr.mxu0 0.0
  %567 = vmatpush1.msra.mxu0 0.0
  %568 = vmatprep.subr.mxu0 0.0
  %569 = vmatpush1.msra.mxu0 0.0
  %570 = vmatprep.subr.mxu0 0.0
  %571 = vmatpush1.msra.mxu0 0.0
  %572 = vmatprep.subr.mxu0 0.0
  %573 = vmatpush1.msra.mxu0 0.0
  %574 = vmatprep.subr.mxu0 0.0
  %575 = vmatpush1.msra.mxu0 0.0
  %576 = vmatprep.subr.mxu0 0.0
  %577 = vmatpush1.msra.mxu0 0.0
  %578 = vmatprep.subr.mxu0 0.0
  %579 = vmatpush1.msra.mxu0 0.0
  %580 = vmatprep.subr.mxu0 0.0
  %581 = vmatpush1.msra.mxu0 0.0
  %582 = vmatprep.subr.mxu0 0.0
  %583 = vmatpush1.msra.mxu0 0.0
  %584 = vmatprep.subr.mxu0 0.0
  %585 = vmatpush1.msra.mxu0 0.0
  %586 = vmatprep.subr.mxu0 0.0
  %587 = vmatpush1.msra.mxu0 0.0
  %588 = vmatprep.subr.mxu0 0.0
  %589 = vmatpush1.msra.mxu0 0.0
  %590 = vmatprep.subr.mxu0 0.0
  %591 = vmatpush1.msra.mxu0 0.0
  %592 = vmatprep.subr.mxu0 0.0
  %593 = vmatpush1.msra.mxu0 0.0
  %594 = vmatprep.subr.mxu0 0.0
  %595 = vmatpush1.msra.mxu0 0.0
  %596 = vmatprep.subr.mxu0 0.0
  %597 = vmatpush1.msra.mxu0 0.0
  %598 = vmatprep.subr.mxu0 0.0
  %599 = vmatpush1.msra.mxu0 0.0
  %600 = vmatprep.subr.mxu0 0.0
  %601 = vmatpush1.msra.mxu0 0.0
  %602 = vmatprep.subr.mxu0 0.0
  %603 = vmatpush1.msra.mxu0 0.0
  %604 = vmatprep.subr.mxu0 0.0
  %605 = vmatpush1.msra.mxu0 0.0
  %606 = vmatprep.subr.mxu0 0.0
  %607 = vmatpush1.msra.mxu0 0.0
  %608 = vmatprep.mubr.f32.mxu0 0.0
  %609 = vmatmul.mubr.f32.gmra.mrb[0].mxu0 %v471
  %v610 = vpop.f32.mrb[0].mxu0
  %v611 = vadd.f32 0.0, %v610
  %v612 = vpop.f32.mrb[0].mxu0
  %v613 = vadd.f32 0.0, %v612
  %614 = vdwg.mxu0
  %615 = vmatprep.subr.mxu0 %v359
  %616 = vmatpush1.msra.mxu0 %v357
  %617 = vmatprep.subr.mxu0 %v363
  %618 = vmatpush1.msra.mxu0 %v361
  %619 = vmatprep.subr.mxu0 %v369
  %620 = vmatpush1.msra.mxu0 %v367
  %621 = vmatprep.subr.mxu0 %v373
  %622 = vmatpush1.msra.mxu0 %v371
  %623 = vmatprep.subr.mxu0 %v379
  %624 = vmatpush1.msra.mxu0 %v377
  %625 = vmatprep.subr.mxu0 %v383
  %626 = vmatpush1.msra.mxu0 %v381
  %627 = vmatprep.subr.mxu0 %v389
  %628 = vmatpush1.msra.mxu0 %v387
  %629 = vmatprep.subr.mxu0 %v393
  %630 = vmatpush1.msra.mxu0 %v391
  %631 = vmatprep.subr.mxu0 0.0
  %632 = vmatpush1.msra.mxu0 0.0
  %633 = vmatprep.subr.mxu0 0.0
  %634 = vmatpush1.msra.mxu0 0.0
  %635 = vmatprep.subr.mxu0 0.0
  %636 = vmatpush1.msra.mxu0 0.0
  %637 = vmatprep.subr.mxu0 0.0
  %638 = vmatpush1.msra.mxu0 0.0
  %639 = vmatprep.subr.mxu0 0.0
  %640 = vmatpush1.msra.mxu0 0.0
  %641 = vmatprep.subr.mxu0 0.0
  %642 = vmatpush1.msra.mxu0 0.0
  %643 = vmatprep.subr.mxu0 0.0
  %644 = vmatpush1.msra.mxu0 0.0
  %645 = vmatprep.subr.mxu0 0.0
  %646 = vmatpush1.msra.mxu0 0.0
  %647 = vmatprep.subr.mxu0 0.0
  %648 = vmatpush1.msra.mxu0 0.0
  %649 = vmatprep.subr.mxu0 0.0
  %650 = vmatpush1.msra.mxu0 0.0
  %651 = vmatprep.subr.mxu0 0.0
  %652 = vmatpush1.msra.mxu0 0.0
  %653 = vmatprep.subr.mxu0 0.0
  %654 = vmatpush1.msra.mxu0 0.0
  %655 = vmatprep.subr.mxu0 0.0
  %656 = vmatpush1.msra.mxu0 0.0
  %657 = vmatprep.subr.mxu0 0.0
  %658 = vmatpush1.msra.mxu0 0.0
  %659 = vmatprep.subr.mxu0 0.0
  %660 = vmatpush1.msra.mxu0 0.0
  %661 = vmatprep.subr.mxu0 0.0
  %662 = vmatpush1.msra.mxu0 0.0
  %663 = vmatprep.subr.mxu0 0.0
  %664 = vmatpush1.msra.mxu0 0.0
  %665 = vmatprep.subr.mxu0 0.0
  %666 = vmatpush1.msra.mxu0 0.0
  %667 = vmatprep.subr.mxu0 0.0
  %668 = vmatpush1.msra.mxu0 0.0
  %669 = vmatprep.subr.mxu0 0.0
  %670 = vmatpush1.msra.mxu0 0.0
  %671 = vmatprep.subr.mxu0 0.0
  %672 = vmatpush1.msra.mxu0 0.0
  %673 = vmatprep.subr.mxu0 0.0
  %674 = vmatpush1.msra.mxu0 0.0
  %675 = vmatprep.subr.mxu0 0.0
  %676 = vmatpush1.msra.mxu0 0.0
  %677 = vmatprep.subr.mxu0 0.0
  %678 = vmatpush1.msra.mxu0 0.0
  %679 = vmatprep.mubr.f32.mxu0 0.0
  %680 = vmatmul.mubr.f32.gmra.mrb[0].mxu0 %v471
  %v681 = vpop.f32.mrb[0].mxu0
  %v682 = vadd.f32 0.0, %v681
  %v683 = vpop.f32.mrb[0].mxu0
  %v684 = vadd.f32 0.0, %v683
  %685 = vdwg.mxu0
  %686 = vmatprep.subr.mxu0 %v432
  %687 = vmatpush1.msra.mxu0 %v430
  %688 = vmatprep.subr.mxu0 %v436
  %689 = vmatpush1.msra.mxu0 %v434
  %690 = vmatprep.subr.mxu0 %v442
  %691 = vmatpush1.msra.mxu0 %v440
  %692 = vmatprep.subr.mxu0 %v446
  %693 = vmatpush1.msra.mxu0 %v444
  %694 = vmatprep.subr.mxu0 %v452
  %695 = vmatpush1.msra.mxu0 %v450
  %696 = vmatprep.subr.mxu0 %v456
  %697 = vmatpush1.msra.mxu0 %v454
  %698 = vmatprep.subr.mxu0 %v462
  %699 = vmatpush1.msra.mxu0 %v460
  %700 = vmatprep.subr.mxu0 %v466
  %701 = vmatpush1.msra.mxu0 %v464
  %702 = vmatprep.subr.mxu0 0.0
  %703 = vmatpush1.msra.mxu0 0.0
  %704 = vmatprep.subr.mxu0 0.0
  %705 = vmatpush1.msra.mxu0 0.0
  %706 = vmatprep.subr.mxu0 0.0
  %707 = vmatpush1.msra.mxu0 0.0
  %708 = vmatprep.subr.mxu0 0.0
  %709 = vmatpush1.msra.mxu0 0.0
  %710 = vmatprep.subr.mxu0 0.0
  %711 = vmatpush1.msra.mxu0 0.0
  %712 = vmatprep.subr.mxu0 0.0
  %713 = vmatpush1.msra.mxu0 0.0
  %714 = vmatprep.subr.mxu0 0.0
  %715 = vmatpush1.msra.mxu0 0.0
  %716 = vmatprep.subr.mxu0 0.0
  %717 = vmatpush1.msra.mxu0 0.0
  %718 = vmatprep.subr.mxu0 0.0
  %719 = vmatpush1.msra.mxu0 0.0
  %720 = vmatprep.subr.mxu0 0.0
  %721 = vmatpush1.msra.mxu0 0.0
  %722 = vmatprep.subr.mxu0 0.0
  %723 = vmatpush1.msra.mxu0 0.0
  %724 = vmatprep.subr.mxu0 0.0
  %725 = vmatpush1.msra.mxu0 0.0
  %726 = vmatprep.subr.mxu0 0.0
  %727 = vmatpush1.msra.mxu0 0.0
  %728 = vmatprep.subr.mxu0 0.0
  %729 = vmatpush1.msra.mxu0 0.0
  %730 = vmatprep.subr.mxu0 0.0
  %731 = vmatpush1.msra.mxu0 0.0
  %732 = vmatprep.subr.mxu0 0.0
  %733 = vmatpush1.msra.mxu0 0.0
  %734 = vmatprep.subr.mxu0 0.0
  %735 = vmatpush1.msra.mxu0 0.0
  %736 = vmatprep.subr.mxu0 0.0
  %737 = vmatpush1.msra.mxu0 0.0
  %738 = vmatprep.subr.mxu0 0.0
  %739 = vmatpush1.msra.mxu0 0.0
  %740 = vmatprep.subr.mxu0 0.0
  %741 = vmatpush1.msra.mxu0 0.0
  %742 = vmatprep.subr.mxu0 0.0
  %743 = vmatpush1.msra.mxu0 0.0
  %744 = vmatprep.subr.mxu0 0.0
  %745 = vmatpush1.msra.mxu0 0.0
  %746 = vmatprep.subr.mxu0 0.0
  %747 = vmatpush1.msra.mxu0 0.0
  %748 = vmatprep.subr.mxu0 0.0
  %749 = vmatpush1.msra.mxu0 0.0
  %750 = vmatprep.mubr.f32.mxu0 0.0
  %751 = vmatmul.mubr.f32.gmra.mrb[0].mxu0 %v471
  %v752 = vpop.f32.mrb[0].mxu0
  %v753 = vadd.f32 0.0, %v752
  %v754 = vpop.f32.mrb[0].mxu0
  %v755 = vadd.f32 0.0, %v754
  %756 = vdwg.mxu0
  %v757 = vmul.f32 %v211, %v211
  %v758 = vmul.f32 %v213, %v213
  %v759 = vmul.f32 %v284, %v284
  %v760 = vmul.f32 %v286, %v286
  %v761 = vmul.f32 %v357, %v357
  %v762 = vmul.f32 %v359, %v359
  %v763 = vmul.f32 %v430, %v430
  %v764 = vmul.f32 %v432, %v432
  %v765 = vmul.f32 %v215, %v215
  %v766 = vmul.f32 %v217, %v217
  %v767 = vmul.f32 %v288, %v288
  %v768 = vmul.f32 %v290, %v290
  %v769 = vmul.f32 %v361, %v361
  %v770 = vmul.f32 %v363, %v363
  %v771 = vmul.f32 %v434, %v434
  %v772 = vmul.f32 %v436, %v436
  %v773 = vmul.f32 %v221, %v221
  %v774 = vmul.f32 %v223, %v223
  %v775 = vmul.f32 %v294, %v294
  %v776 = vmul.f32 %v296, %v296
  %v777 = vmul.f32 %v367, %v367
  %v778 = vmul.f32 %v369, %v369
  %v779 = vmul.f32 %v440, %v440
  %v780 = vmul.f32 %v442, %v442
  %v781 = vmul.f32 %v225, %v225
  %v782 = vmul.f32 %v227, %v227
  %v783 = vmul.f32 %v298, %v298
  %v784 = vmul.f32 %v300, %v300
  %v785 = vmul.f32 %v371, %v371
  %v786 = vmul.f32 %v373, %v373
  %v787 = vmul.f32 %v444, %v444
  %v788 = vmul.f32 %v446, %v446
  %v789 = vmul.f32 %v231, %v231
  %v790 = vmul.f32 %v233, %v233
  %v791 = vmul.f32 %v304, %v304
  %v792 = vmul.f32 %v306, %v306
  %v793 = vmul.f32 %v377, %v377
  %v794 = vmul.f32 %v379, %v379
  %v795 = vmul.f32 %v450, %v450
  %v796 = vmul.f32 %v452, %v452
  %v797 = vmul.f32 %v235, %v235
  %v798 = vmul.f32 %v237, %v237
  %v799 = vmul.f32 %v308, %v308
  %v800 = vmul.f32 %v310, %v310
  %v801 = vmul.f32 %v381, %v381
  %v802 = vmul.f32 %v383, %v383
  %v803 = vmul.f32 %v454, %v454
  %v804 = vmul.f32 %v456, %v456
  %v805 = vmul.f32 %v241, %v241
  %v806 = vmul.f32 %v243, %v243
  %v807 = vmul.f32 %v314, %v314
  %v808 = vmul.f32 %v316, %v316
  %v809 = vmul.f32 %v387, %v387
  %v810 = vmul.f32 %v389, %v389
  %v811 = vmul.f32 %v460, %v460
  %v812 = vmul.f32 %v462, %v462
  %v813 = vmul.f32 %v245, %v245
  %v814 = vmul.f32 %v247, %v247
  %v815 = vmul.f32 %v318, %v318
  %v816 = vmul.f32 %v320, %v320
  %v817 = vmul.f32 %v391, %v391
  %v818 = vmul.f32 %v393, %v393
  %v819 = vmul.f32 %v464, %v464
  %v820 = vmul.f32 %v466, %v466
  %821 = vmatprep.subr.mxu0 %v758
  %822 = vmatpush1.msra.mxu0 %v757
  %823 = vmatprep.subr.mxu0 %v766
  %824 = vmatpush1.msra.mxu0 %v765
  %825 = vmatprep.subr.mxu0 %v774
  %826 = vmatpush1.msra.mxu0 %v773
  %827 = vmatprep.subr.mxu0 %v782
  %828 = vmatpush1.msra.mxu0 %v781
  %829 = vmatprep.subr.mxu0 %v790
  %830 = vmatpush1.msra.mxu0 %v789
  %831 = vmatprep.subr.mxu0 %v798
  %832 = vmatpush1.msra.mxu0 %v797
  %833 = vmatprep.subr.mxu0 %v806
  %834 = vmatpush1.msra.mxu0 %v805
  %835 = vmatprep.subr.mxu0 %v814
  %836 = vmatpush1.msra.mxu0 %v813
  %837 = vmatprep.subr.mxu0 0.0
  %838 = vmatpush1.msra.mxu0 0.0
  %839 = vmatprep.subr.mxu0 0.0
  %840 = vmatpush1.msra.mxu0 0.0
  %841 = vmatprep.subr.mxu0 0.0
  %842 = vmatpush1.msra.mxu0 0.0
  %843 = vmatprep.subr.mxu0 0.0
  %844 = vmatpush1.msra.mxu0 0.0
  %845 = vmatprep.subr.mxu0 0.0
  %846 = vmatpush1.msra.mxu0 0.0
  %847 = vmatprep.subr.mxu0 0.0
  %848 = vmatpush1.msra.mxu0 0.0
  %849 = vmatprep.subr.mxu0 0.0
  %850 = vmatpush1.msra.mxu0 0.0
  %851 = vmatprep.subr.mxu0 0.0
  %852 = vmatpush1.msra.mxu0 0.0
  %853 = vmatprep.subr.mxu0 0.0
  %854 = vmatpush1.msra.mxu0 0.0
  %855 = vmatprep.subr.mxu0 0.0
  %856 = vmatpush1.msra.mxu0 0.0
  %857 = vmatprep.subr.mxu0 0.0
  %858 = vmatpush1.msra.mxu0 0.0
  %859 = vmatprep.subr.mxu0 0.0
  %860 = vmatpush1.msra.mxu0 0.0
  %861 = vmatprep.subr.mxu0 0.0
  %862 = vmatpush1.msra.mxu0 0.0
  %863 = vmatprep.subr.mxu0 0.0
  %864 = vmatpush1.msra.mxu0 0.0
  %865 = vmatprep.subr.mxu0 0.0
  %866 = vmatpush1.msra.mxu0 0.0
  %867 = vmatprep.subr.mxu0 0.0
  %868 = vmatpush1.msra.mxu0 0.0
  %869 = vmatprep.subr.mxu0 0.0
  %870 = vmatpush1.msra.mxu0 0.0
  %871 = vmatprep.subr.mxu0 0.0
  %872 = vmatpush1.msra.mxu0 0.0
  %873 = vmatprep.subr.mxu0 0.0
  %874 = vmatpush1.msra.mxu0 0.0
  %875 = vmatprep.subr.mxu0 0.0
  %876 = vmatpush1.msra.mxu0 0.0
  %877 = vmatprep.subr.mxu0 0.0
  %878 = vmatpush1.msra.mxu0 0.0
  %879 = vmatprep.subr.mxu0 0.0
  %880 = vmatpush1.msra.mxu0 0.0
  %881 = vmatprep.subr.mxu0 0.0
  %882 = vmatpush1.msra.mxu0 0.0
  %883 = vmatprep.subr.mxu0 0.0
  %884 = vmatpush1.msra.mxu0 0.0
  %885 = vmatprep.mubr.f32.mxu0 0.0
  %886 = vmatmul.mubr.f32.gmra.mrb[0].mxu0 %v471
  %v887 = vpop.f32.mrb[0].mxu0
  %v888 = vadd.f32 0.0, %v887
  %v889 = vpop.f32.mrb[0].mxu0
  %v890 = vadd.f32 0.0, %v889
  %891 = vdwg.mxu0
  %892 = vmatprep.subr.mxu0 %v760
  %893 = vmatpush1.msra.mxu0 %v759
  %894 = vmatprep.subr.mxu0 %v768
  %895 = vmatpush1.msra.mxu0 %v767
  %896 = vmatprep.subr.mxu0 %v776
  %897 = vmatpush1.msra.mxu0 %v775
  %898 = vmatprep.subr.mxu0 %v784
  %899 = vmatpush1.msra.mxu0 %v783
  %900 = vmatprep.subr.mxu0 %v792
  %901 = vmatpush1.msra.mxu0 %v791
  %902 = vmatprep.subr.mxu0 %v800
  %903 = vmatpush1.msra.mxu0 %v799
  %904 = vmatprep.subr.mxu0 %v808
  %905 = vmatpush1.msra.mxu0 %v807
  %906 = vmatprep.subr.mxu0 %v816
  %907 = vmatpush1.msra.mxu0 %v815
  %908 = vmatprep.subr.mxu0 0.0
  %909 = vmatpush1.msra.mxu0 0.0
  %910 = vmatprep.subr.mxu0 0.0
  %911 = vmatpush1.msra.mxu0 0.0
  %912 = vmatprep.subr.mxu0 0.0
  %913 = vmatpush1.msra.mxu0 0.0
  %914 = vmatprep.subr.mxu0 0.0
  %915 = vmatpush1.msra.mxu0 0.0
  %916 = vmatprep.subr.mxu0 0.0
  %917 = vmatpush1.msra.mxu0 0.0
  %918 = vmatprep.subr.mxu0 0.0
  %919 = vmatpush1.msra.mxu0 0.0
  %920 = vmatprep.subr.mxu0 0.0
  %921 = vmatpush1.msra.mxu0 0.0
  %922 = vmatprep.subr.mxu0 0.0
  %923 = vmatpush1.msra.mxu0 0.0
  %924 = vmatprep.subr.mxu0 0.0
  %925 = vmatpush1.msra.mxu0 0.0
  %926 = vmatprep.subr.mxu0 0.0
  %927 = vmatpush1.msra.mxu0 0.0
  %928 = vmatprep.subr.mxu0 0.0
  %929 = vmatpush1.msra.mxu0 0.0
  %930 = vmatprep.subr.mxu0 0.0
  %931 = vmatpush1.msra.mxu0 0.0
  %932 = vmatprep.subr.mxu0 0.0
  %933 = vmatpush1.msra.mxu0 0.0
  %934 = vmatprep.subr.mxu0 0.0
  %935 = vmatpush1.msra.mxu0 0.0
  %936 = vmatprep.subr.mxu0 0.0
  %937 = vmatpush1.msra.mxu0 0.0
  %938 = vmatprep.subr.mxu0 0.0
  %939 = vmatpush1.msra.mxu0 0.0
  %940 = vmatprep.subr.mxu0 0.0
  %941 = vmatpush1.msra.mxu0 0.0
  %942 = vmatprep.subr.mxu0 0.0
  %943 = vmatpush1.msra.mxu0 0.0
  %944 = vmatprep.subr.mxu0 0.0
  %945 = vmatpush1.msra.mxu0 0.0
  %946 = vmatprep.subr.mxu0 0.0
  %947 = vmatpush1.msra.mxu0 0.0
  %948 = vmatprep.subr.mxu0 0.0
  %949 = vmatpush1.msra.mxu0 0.0
  %950 = vmatprep.subr.mxu0 0.0
  %951 = vmatpush1.msra.mxu0 0.0
  %952 = vmatprep.subr.mxu0 0.0
  %953 = vmatpush1.msra.mxu0 0.0
  %954 = vmatprep.subr.mxu0 0.0
  %955 = vmatpush1.msra.mxu0 0.0
  %956 = vmatprep.mubr.f32.mxu0 0.0
  %957 = vmatmul.mubr.f32.gmra.mrb[0].mxu0 %v471
  %v958 = vpop.f32.mrb[0].mxu0
  %v959 = vadd.f32 0.0, %v958
  %v960 = vpop.f32.mrb[0].mxu0
  %v961 = vadd.f32 0.0, %v960
  %962 = vdwg.mxu0
  %963 = vmatprep.subr.mxu0 %v762
  %964 = vmatpush1.msra.mxu0 %v761
  %965 = vmatprep.subr.mxu0 %v770
  %966 = vmatpush1.msra.mxu0 %v769
  %967 = vmatprep.subr.mxu0 %v778
  %968 = vmatpush1.msra.mxu0 %v777
  %969 = vmatprep.subr.mxu0 %v786
  %970 = vmatpush1.msra.mxu0 %v785
  %971 = vmatprep.subr.mxu0 %v794
  %972 = vmatpush1.msra.mxu0 %v793
  %973 = vmatprep.subr.mxu0 %v802
  %974 = vmatpush1.msra.mxu0 %v801
  %975 = vmatprep.subr.mxu0 %v810
  %976 = vmatpush1.msra.mxu0 %v809
  %977 = vmatprep.subr.mxu0 %v818
  %978 = vmatpush1.msra.mxu0 %v817
  %979 = vmatprep.subr.mxu0 0.0
  %980 = vmatpush1.msra.mxu0 0.0
  %981 = vmatprep.subr.mxu0 0.0
  %982 = vmatpush1.msra.mxu0 0.0
  %983 = vmatprep.subr.mxu0 0.0
  %984 = vmatpush1.msra.mxu0 0.0
  %985 = vmatprep.subr.mxu0 0.0
  %986 = vmatpush1.msra.mxu0 0.0
  %987 = vmatprep.subr.mxu0 0.0
  %988 = vmatpush1.msra.mxu0 0.0
  %989 = vmatprep.subr.mxu0 0.0
  %990 = vmatpush1.msra.mxu0 0.0
  %991 = vmatprep.subr.mxu0 0.0
  %992 = vmatpush1.msra.mxu0 0.0
  %993 = vmatprep.subr.mxu0 0.0
  %994 = vmatpush1.msra.mxu0 0.0
  %995 = vmatprep.subr.mxu0 0.0
  %996 = vmatpush1.msra.mxu0 0.0
  %997 = vmatprep.subr.mxu0 0.0
  %998 = vmatpush1.msra.mxu0 0.0
  %999 = vmatprep.subr.mxu0 0.0
  %1000 = vmatpush1.msra.mxu0 0.0
  %1001 = vmatprep.subr.mxu0 0.0
  %1002 = vmatpush1.msra.mxu0 0.0
  %1003 = vmatprep.subr.mxu0 0.0
  %1004 = vmatpush1.msra.mxu0 0.0
  %1005 = vmatprep.subr.mxu0 0.0
  %1006 = vmatpush1.msra.mxu0 0.0
  %1007 = vmatprep.subr.mxu0 0.0
  %1008 = vmatpush1.msra.mxu0 0.0
  %1009 = vmatprep.subr.mxu0 0.0
  %1010 = vmatpush1.msra.mxu0 0.0
  %1011 = vmatprep.subr.mxu0 0.0
  %1012 = vmatpush1.msra.mxu0 0.0
  %1013 = vmatprep.subr.mxu0 0.0
  %1014 = vmatpush1.msra.mxu0 0.0
  %1015 = vmatprep.subr.mxu0 0.0
  %1016 = vmatpush1.msra.mxu0 0.0
  %1017 = vmatprep.subr.mxu0 0.0
  %1018 = vmatpush1.msra.mxu0 0.0
  %1019 = vmatprep.subr.mxu0 0.0
  %1020 = vmatpush1.msra.mxu0 0.0
  %1021 = vmatprep.subr.mxu0 0.0
  %1022 = vmatpush1.msra.mxu0 0.0
  %1023 = vmatprep.subr.mxu0 0.0
  %1024 = vmatpush1.msra.mxu0 0.0
  %1025 = vmatprep.subr.mxu0 0.0
  %1026 = vmatpush1.msra.mxu0 0.0
  %1027 = vmatprep.mubr.f32.mxu0 0.0
  %1028 = vmatmul.mubr.f32.gmra.mrb[0].mxu0 %v471
  %v1029 = vpop.f32.mrb[0].mxu0
  %v1030 = vadd.f32 0.0, %v1029
  %v1031 = vpop.f32.mrb[0].mxu0
  %v1032 = vadd.f32 0.0, %v1031
  %1033 = vdwg.mxu0
  %1034 = vmatprep.subr.mxu0 %v764
  %1035 = vmatpush1.msra.mxu0 %v763
  %1036 = vmatprep.subr.mxu0 %v772
  %1037 = vmatpush1.msra.mxu0 %v771
  %1038 = vmatprep.subr.mxu0 %v780
  %1039 = vmatpush1.msra.mxu0 %v779
  %1040 = vmatprep.subr.mxu0 %v788
  %1041 = vmatpush1.msra.mxu0 %v787
  %1042 = vmatprep.subr.mxu0 %v796
  %1043 = vmatpush1.msra.mxu0 %v795
  %1044 = vmatprep.subr.mxu0 %v804
  %1045 = vmatpush1.msra.mxu0 %v803
  %1046 = vmatprep.subr.mxu0 %v812
  %1047 = vmatpush1.msra.mxu0 %v811
  %1048 = vmatprep.subr.mxu0 %v820
  %1049 = vmatpush1.msra.mxu0 %v819
  %1050 = vmatprep.subr.mxu0 0.0
  %1051 = vmatpush1.msra.mxu0 0.0
  %1052 = vmatprep.subr.mxu0 0.0
  %1053 = vmatpush1.msra.mxu0 0.0
  %1054 = vmatprep.subr.mxu0 0.0
  %1055 = vmatpush1.msra.mxu0 0.0
  %1056 = vmatprep.subr.mxu0 0.0
  %1057 = vmatpush1.msra.mxu0 0.0
  %1058 = vmatprep.subr.mxu0 0.0
  %1059 = vmatpush1.msra.mxu0 0.0
  %1060 = vmatprep.subr.mxu0 0.0
  %1061 = vmatpush1.msra.mxu0 0.0
  %1062 = vmatprep.subr.mxu0 0.0
  %1063 = vmatpush1.msra.mxu0 0.0
  %1064 = vmatprep.subr.mxu0 0.0
  %1065 = vmatpush1.msra.mxu0 0.0
  %1066 = vmatprep.subr.mxu0 0.0
  %1067 = vmatpush1.msra.mxu0 0.0
  %1068 = vmatprep.subr.mxu0 0.0
  %1069 = vmatpush1.msra.mxu0 0.0
  %1070 = vmatprep.subr.mxu0 0.0
  %1071 = vmatpush1.msra.mxu0 0.0
  %1072 = vmatprep.subr.mxu0 0.0
  %1073 = vmatpush1.msra.mxu0 0.0
  %1074 = vmatprep.subr.mxu0 0.0
  %1075 = vmatpush1.msra.mxu0 0.0
  %1076 = vmatprep.subr.mxu0 0.0
  %1077 = vmatpush1.msra.mxu0 0.0
  %1078 = vmatprep.subr.mxu0 0.0
  %1079 = vmatpush1.msra.mxu0 0.0
  %1080 = vmatprep.subr.mxu0 0.0
  %1081 = vmatpush1.msra.mxu0 0.0
  %1082 = vmatprep.subr.mxu0 0.0
  %1083 = vmatpush1.msra.mxu0 0.0
  %1084 = vmatprep.subr.mxu0 0.0
  %1085 = vmatpush1.msra.mxu0 0.0
  %1086 = vmatprep.subr.mxu0 0.0
  %1087 = vmatpush1.msra.mxu0 0.0
  %1088 = vmatprep.subr.mxu0 0.0
  %1089 = vmatpush1.msra.mxu0 0.0
  %1090 = vmatprep.subr.mxu0 0.0
  %1091 = vmatpush1.msra.mxu0 0.0
  %1092 = vmatprep.subr.mxu0 0.0
  %1093 = vmatpush1.msra.mxu0 0.0
  %1094 = vmatprep.subr.mxu0 0.0
  %1095 = vmatpush1.msra.mxu0 0.0
  %1096 = vmatprep.subr.mxu0 0.0
  %1097 = vmatpush1.msra.mxu0 0.0
  %1098 = vmatprep.mubr.f32.mxu0 0.0
  %1099 = vmatmul.mubr.f32.gmra.mrb[0].mxu0 %v471
  %v1100 = vpop.f32.mrb[0].mxu0
  %v1101 = vadd.f32 0.0, %v1100
  %v1102 = vpop.f32.mrb[0].mxu0
  %v1103 = vadd.f32 0.0, %v1102
  %1104 = vdwg.mxu0
  %v1105 = vadd.f32 %v540, %v542
  %v1106 = vadd.f32 %v1105, %v611
  %v1107 = vadd.f32 %v1106, %v613
  %v1108 = vadd.f32 %v1107, %v682
  %v1109 = vadd.f32 %v1108, %v684
  %v1110 = vadd.f32 %v1109, %v753
  %v1111 = vadd.f32 %v1110, %v755
  %1112 = vadd.xlane.f32.xlu0 %v1111
  %v1113 = vpop.xlane.xlu0 %1112
  %v1114 = vmul.f32 %v1113, 0.00012207031
  %v1115 = vadd.f32 %v888, %v890
  %v1116 = vadd.f32 %v1115, %v959
  %v1117 = vadd.f32 %v1116, %v961
  %v1118 = vadd.f32 %v1117, %v1030
  %v1119 = vadd.f32 %v1118, %v1032
  %v1120 = vadd.f32 %v1119, %v1101
  %v1121 = vadd.f32 %v1120, %v1103
  %1122 = vadd.xlane.f32.xlu0 %v1121
  %v1123 = vpop.xlane.xlu0 %1122
  %v1124 = vmul.f32 %v1123, 0.00012207031
  %v1125 = vmul.f32 %v1114, %v1114
  %v1126 = vsub.f32 %v1124, %v1125
  %v1127 = vmax.f32 %v1126, 0.0
  %v1128 = vadd.f32 %v1127, 1e-05
  %v1129 = vrsqrt.pop %v1128
  %v1130 = vld [vmem:[%s4] sm:$0xff]
  %v1131 = vmul.f32 %v1130, %v1129
  %v1132 = vld [vmem:[%s5] sm:$0xff]
  %v1133 = vmul.f32 %v1114, %v1131
  %v1134 = vsub.f32 %v1132, %v1133
  %v1135 = vld [vmem:[%s3] sm:$0xff]
  %v1136 = vld [vmem:[%s3 + $0x8] sm:$0xff]
  %v1137 = vld [vmem:[%s3 + $0x10] sm:$0xff]
  %v1138 = vld [vmem:[%s3 + $0x18] sm:$0xff]
  %v1139 = vld [vmem:[%s3 + $0x20] sm:$0xff]
  %v1140 = vld [vmem:[%s3 + $0x28] sm:$0xff]
  %v1141 = vld [vmem:[%s3 + $0x30] sm:$0xff]
  %v1142 = vld [vmem:[%s3 + $0x38] sm:$0xff]
  %1144 = vset.pattern.permute.xlu0 0
  %1145 = vperm.xlu0 %1144, %v1131
  %v1146 = vpop.permute.xlu0 %1145
  %vm1148 = vcmask 64512
  %v1150 = vsel %vm1148, %v1135, 0
  %v1153 = vsel %vm1148, %v1136, 0
  %v1156 = vsel %vm1148, %v1137, 0
  %v1159 = vsel %vm1148, %v1138, 0
  %v1162 = vsel %vm1148, %v1139, 0
  %v1165 = vsel %vm1148, %v1140, 0
  %v1168 = vsel %vm1148, %v1141, 0
  %v1171 = vsel %vm1148, %v1142, 0
  %1173 = vmatprep.subr.mxu0 0.0
  %1174 = vmatpush1.msra.mxu0 %v1146
  %1175 = vmatprep.subr.mxu0 0.0
  %1176 = vmatpush1.msra.mxu0 0.0
  %1177 = vmatprep.subr.mxu0 0.0
  %1178 = vmatpush1.msra.mxu0 0.0
  %1179 = vmatprep.subr.mxu0 0.0
  %1180 = vmatpush1.msra.mxu0 0.0
  %1181 = vmatprep.subr.mxu0 0.0
  %1182 = vmatpush1.msra.mxu0 0.0
  %1183 = vmatprep.subr.mxu0 0.0
  %1184 = vmatpush1.msra.mxu0 0.0
  %1185 = vmatprep.subr.mxu0 0.0
  %1186 = vmatpush1.msra.mxu0 0.0
  %1187 = vmatprep.subr.mxu0 0.0
  %1188 = vmatpush1.msra.mxu0 0.0
  %1189 = vmatprep.subr.mxu0 0.0
  %1190 = vmatpush1.msra.mxu0 0.0
  %1191 = vmatprep.subr.mxu0 0.0
  %1192 = vmatpush1.msra.mxu0 0.0
  %1193 = vmatprep.subr.mxu0 0.0
  %1194 = vmatpush1.msra.mxu0 0.0
  %1195 = vmatprep.subr.mxu0 0.0
  %1196 = vmatpush1.msra.mxu0 0.0
  %1197 = vmatprep.subr.mxu0 0.0
  %1198 = vmatpush1.msra.mxu0 0.0
  %1199 = vmatprep.subr.mxu0 0.0
  %1200 = vmatpush1.msra.mxu0 0.0
  %1201 = vmatprep.subr.mxu0 0.0
  %1202 = vmatpush1.msra.mxu0 0.0
  %1203 = vmatprep.subr.mxu0 0.0
  %1204 = vmatpush1.msra.mxu0 0.0
  %1205 = vmatprep.subr.mxu0 0.0
  %1206 = vmatpush1.msra.mxu0 0.0
  %1207 = vmatprep.subr.mxu0 0.0
  %1208 = vmatpush1.msra.mxu0 0.0
  %1209 = vmatprep.subr.mxu0 0.0
  %1210 = vmatpush1.msra.mxu0 0.0
  %1211 = vmatprep.subr.mxu0 0.0
  %1212 = vmatpush1.msra.mxu0 0.0
  %1213 = vmatprep.subr.mxu0 0.0
  %1214 = vmatpush1.msra.mxu0 0.0
  %1215 = vmatprep.subr.mxu0 0.0
  %1216 = vmatpush1.msra.mxu0 0.0
  %1217 = vmatprep.subr.mxu0 0.0
  %1218 = vmatpush1.msra.mxu0 0.0
  %1219 = vmatprep.subr.mxu0 0.0
  %1220 = vmatpush1.msra.mxu0 0.0
  %1221 = vmatprep.subr.mxu0 0.0
  %1222 = vmatpush1.msra.mxu0 0.0
  %1223 = vmatprep.subr.mxu0 0.0
  %1224 = vmatpush1.msra.mxu0 0.0
  %1225 = vmatprep.subr.mxu0 0.0
  %1226 = vmatpush1.msra.mxu0 0.0
  %1227 = vmatprep.subr.mxu0 0.0
  %1228 = vmatpush1.msra.mxu0 0.0
  %1229 = vmatprep.subr.mxu0 0.0
  %1230 = vmatpush1.msra.mxu0 0.0
  %1231 = vmatprep.subr.mxu0 0.0
  %1232 = vmatpush1.msra.mxu0 0.0
  %1233 = vmatprep.subr.mxu0 0.0
  %1234 = vmatpush1.msra.mxu0 0.0
  %1235 = vmatprep.subr.mxu0 0.0
  %1236 = vmatpush1.msra.mxu0 0.0
  %1237 = vmatprep.mubr.f32.mxu0 0.0
  %1238 = vmatmul.mubr.f32.gmra.mrb[0].mxu0 %v1150
  %v1239 = vpop.f32.mrb[0].mxu0
  %v1240 = vadd.f32 0.0, %v1239
  %v1241 = vpop.f32.mrb[0].mxu0
  %1242 = vmatprep.mubr.f32.mxu0 0.0
  %1243 = vmatmul.mubr.f32.gmra.mrb[0].mxu0 %v1153
  %v1244 = vpop.f32.mrb[0].mxu0
  %v1245 = vadd.f32 0.0, %v1244
  %v1246 = vpop.f32.mrb[0].mxu0
  %1247 = vmatprep.mubr.f32.mxu0 0.0
  %1248 = vmatmul.mubr.f32.gmra.mrb[0].mxu0 %v1156
  %v1249 = vpop.f32.mrb[0].mxu0
  %v1250 = vadd.f32 0.0, %v1249
  %v1251 = vpop.f32.mrb[0].mxu0
  %1252 = vmatprep.mubr.f32.mxu0 0.0
  %1253 = vmatmul.mubr.f32.gmra.mrb[0].mxu0 %v1159
  %v1254 = vpop.f32.mrb[0].mxu0
  %v1255 = vadd.f32 0.0, %v1254
  %v1256 = vpop.f32.mrb[0].mxu0
  %1257 = vmatprep.mubr.f32.mxu0 0.0
  %1258 = vmatmul.mubr.f32.gmra.mrb[0].mxu0 %v1162
  %v1259 = vpop.f32.mrb[0].mxu0
  %v1260 = vadd.f32 0.0, %v1259
  %v1261 = vpop.f32.mrb[0].mxu0
  %1262 = vmatprep.mubr.f32.mxu0 0.0
  %1263 = vmatmul.mubr.f32.gmra.mrb[0].mxu0 %v1165
  %v1264 = vpop.f32.mrb[0].mxu0
  %v1265 = vadd.f32 0.0, %v1264
  %v1266 = vpop.f32.mrb[0].mxu0
  %1267 = vmatprep.mubr.f32.mxu0 0.0
  %1268 = vmatmul.mubr.f32.gmra.mrb[0].mxu0 %v1168
  %v1269 = vpop.f32.mrb[0].mxu0
  %v1270 = vadd.f32 0.0, %v1269
  %v1271 = vpop.f32.mrb[0].mxu0
  %1272 = vmatprep.mubr.f32.mxu0 0.0
  %1273 = vmatmul.mubr.f32.gmra.mrb[0].mxu0 %v1171
  %v1274 = vpop.f32.mrb[0].mxu0
  %v1275 = vadd.f32 0.0, %v1274
  %v1276 = vpop.f32.mrb[0].mxu0
  %1277 = vdwg.mxu0
  %1279 = vset.pattern.permute.xlu0 0
  %1280 = vperm.xlu0 %1279, %v1134
  %v1281 = vpop.permute.xlu0 %1280
  %1283 = vmatprep.subr.mxu0 0.0
  %1284 = vmatpush1.msra.mxu0 %v1281
  %1285 = vmatprep.subr.mxu0 0.0
  %1286 = vmatpush1.msra.mxu0 0.0
  %1287 = vmatprep.subr.mxu0 0.0
  %1288 = vmatpush1.msra.mxu0 0.0
  %1289 = vmatprep.subr.mxu0 0.0
  %1290 = vmatpush1.msra.mxu0 0.0
  %1291 = vmatprep.subr.mxu0 0.0
  %1292 = vmatpush1.msra.mxu0 0.0
  %1293 = vmatprep.subr.mxu0 0.0
  %1294 = vmatpush1.msra.mxu0 0.0
  %1295 = vmatprep.subr.mxu0 0.0
  %1296 = vmatpush1.msra.mxu0 0.0
  %1297 = vmatprep.subr.mxu0 0.0
  %1298 = vmatpush1.msra.mxu0 0.0
  %1299 = vmatprep.subr.mxu0 0.0
  %1300 = vmatpush1.msra.mxu0 0.0
  %1301 = vmatprep.subr.mxu0 0.0
  %1302 = vmatpush1.msra.mxu0 0.0
  %1303 = vmatprep.subr.mxu0 0.0
  %1304 = vmatpush1.msra.mxu0 0.0
  %1305 = vmatprep.subr.mxu0 0.0
  %1306 = vmatpush1.msra.mxu0 0.0
  %1307 = vmatprep.subr.mxu0 0.0
  %1308 = vmatpush1.msra.mxu0 0.0
  %1309 = vmatprep.subr.mxu0 0.0
  %1310 = vmatpush1.msra.mxu0 0.0
  %1311 = vmatprep.subr.mxu0 0.0
  %1312 = vmatpush1.msra.mxu0 0.0
  %1313 = vmatprep.subr.mxu0 0.0
  %1314 = vmatpush1.msra.mxu0 0.0
  %1315 = vmatprep.subr.mxu0 0.0
  %1316 = vmatpush1.msra.mxu0 0.0
  %1317 = vmatprep.subr.mxu0 0.0
  %1318 = vmatpush1.msra.mxu0 0.0
  %1319 = vmatprep.subr.mxu0 0.0
  %1320 = vmatpush1.msra.mxu0 0.0
  %1321 = vmatprep.subr.mxu0 0.0
  %1322 = vmatpush1.msra.mxu0 0.0
  %1323 = vmatprep.subr.mxu0 0.0
  %1324 = vmatpush1.msra.mxu0 0.0
  %1325 = vmatprep.subr.mxu0 0.0
  %1326 = vmatpush1.msra.mxu0 0.0
  %1327 = vmatprep.subr.mxu0 0.0
  %1328 = vmatpush1.msra.mxu0 0.0
  %1329 = vmatprep.subr.mxu0 0.0
  %1330 = vmatpush1.msra.mxu0 0.0
  %1331 = vmatprep.subr.mxu0 0.0
  %1332 = vmatpush1.msra.mxu0 0.0
  %1333 = vmatprep.subr.mxu0 0.0
  %1334 = vmatpush1.msra.mxu0 0.0
  %1335 = vmatprep.subr.mxu0 0.0
  %1336 = vmatpush1.msra.mxu0 0.0
  %1337 = vmatprep.subr.mxu0 0.0
  %1338 = vmatpush1.msra.mxu0 0.0
  %1339 = vmatprep.subr.mxu0 0.0
  %1340 = vmatpush1.msra.mxu0 0.0
  %1341 = vmatprep.subr.mxu0 0.0
  %1342 = vmatpush1.msra.mxu0 0.0
  %1343 = vmatprep.subr.mxu0 0.0
  %1344 = vmatpush1.msra.mxu0 0.0
  %1345 = vmatprep.subr.mxu0 0.0
  %1346 = vmatpush1.msra.mxu0 0.0
  %1347 = vmatprep.mubr.f32.mxu0 0.0
  %1348 = vmatmul.mubr.f32.gmra.mrb[0].mxu0 %v1150
  %v1349 = vpop.f32.mrb[0].mxu0
  %v1350 = vadd.f32 0.0, %v1349
  %v1351 = vpop.f32.mrb[0].mxu0
  %1352 = vmatprep.mubr.f32.mxu0 0.0
  %1353 = vmatmul.mubr.f32.gmra.mrb[0].mxu0 %v1153
  %v1354 = vpop.f32.mrb[0].mxu0
  %v1355 = vadd.f32 0.0, %v1354
  %v1356 = vpop.f32.mrb[0].mxu0
  %1357 = vmatprep.mubr.f32.mxu0 0.0
  %1358 = vmatmul.mubr.f32.gmra.mrb[0].mxu0 %v1156
  %v1359 = vpop.f32.mrb[0].mxu0
  %v1360 = vadd.f32 0.0, %v1359
  %v1361 = vpop.f32.mrb[0].mxu0
  %1362 = vmatprep.mubr.f32.mxu0 0.0
  %1363 = vmatmul.mubr.f32.gmra.mrb[0].mxu0 %v1159
  %v1364 = vpop.f32.mrb[0].mxu0
  %v1365 = vadd.f32 0.0, %v1364
  %v1366 = vpop.f32.mrb[0].mxu0
  %1367 = vmatprep.mubr.f32.mxu0 0.0
  %1368 = vmatmul.mubr.f32.gmra.mrb[0].mxu0 %v1162
  %v1369 = vpop.f32.mrb[0].mxu0
  %v1370 = vadd.f32 0.0, %v1369
  %v1371 = vpop.f32.mrb[0].mxu0
  %1372 = vmatprep.mubr.f32.mxu0 0.0
  %1373 = vmatmul.mubr.f32.gmra.mrb[0].mxu0 %v1165
  %v1374 = vpop.f32.mrb[0].mxu0
  %v1375 = vadd.f32 0.0, %v1374
  %v1376 = vpop.f32.mrb[0].mxu0
  %1377 = vmatprep.mubr.f32.mxu0 0.0
  %1378 = vmatmul.mubr.f32.gmra.mrb[0].mxu0 %v1168
  %v1379 = vpop.f32.mrb[0].mxu0
  %v1380 = vadd.f32 0.0, %v1379
  %v1381 = vpop.f32.mrb[0].mxu0
  %1382 = vmatprep.mubr.f32.mxu0 0.0
  %1383 = vmatmul.mubr.f32.gmra.mrb[0].mxu0 %v1171
  %v1384 = vpop.f32.mrb[0].mxu0
  %v1385 = vadd.f32 0.0, %v1384
  %v1386 = vpop.f32.mrb[0].mxu0
  %1387 = vdwg.mxu0
  %1389 = vset.pattern.permute.xlu0 0
  %1390 = vperm.xlu0 %1389, %v1240
  %v1391 = vpop.permute.xlu0 %1390
  %1394 = vset.pattern.permute.xlu0 0
  %1395 = vperm.xlu0 %1394, %v1245
  %v1396 = vpop.permute.xlu0 %1395
  %1399 = vset.pattern.permute.xlu0 0
  %1400 = vperm.xlu0 %1399, %v1250
  %v1401 = vpop.permute.xlu0 %1400
  %1404 = vset.pattern.permute.xlu0 0
  %1405 = vperm.xlu0 %1404, %v1255
  %v1406 = vpop.permute.xlu0 %1405
  %1409 = vset.pattern.permute.xlu0 0
  %1410 = vperm.xlu0 %1409, %v1260
  %v1411 = vpop.permute.xlu0 %1410
  %1414 = vset.pattern.permute.xlu0 0
  %1415 = vperm.xlu0 %1414, %v1265
  %v1416 = vpop.permute.xlu0 %1415
  %1419 = vset.pattern.permute.xlu0 0
  %1420 = vperm.xlu0 %1419, %v1270
  %v1421 = vpop.permute.xlu0 %1420
  %1424 = vset.pattern.permute.xlu0 0
  %1425 = vperm.xlu0 %1424, %v1275
  %v1426 = vpop.permute.xlu0 %1425
  %v1428 = vmul.f32 %v211, %v1391
  %v1429 = vmul.f32 %v213, %v1391
  %v1430 = vmul.f32 %v284, %v1391
  %v1431 = vmul.f32 %v286, %v1391
  %v1432 = vmul.f32 %v357, %v1391
  %v1433 = vmul.f32 %v359, %v1391
  %v1434 = vmul.f32 %v430, %v1391
  %v1435 = vmul.f32 %v432, %v1391
  %v1436 = vmul.f32 %v215, %v1396
  %v1437 = vmul.f32 %v217, %v1396
  %v1438 = vmul.f32 %v288, %v1396
  %v1439 = vmul.f32 %v290, %v1396
  %v1440 = vmul.f32 %v361, %v1396
  %v1441 = vmul.f32 %v363, %v1396
  %v1442 = vmul.f32 %v434, %v1396
  %v1443 = vmul.f32 %v436, %v1396
  %v1444 = vmul.f32 %v221, %v1401
  %v1445 = vmul.f32 %v223, %v1401
  %v1446 = vmul.f32 %v294, %v1401
  %v1447 = vmul.f32 %v296, %v1401
  %v1448 = vmul.f32 %v367, %v1401
  %v1449 = vmul.f32 %v369, %v1401
  %v1450 = vmul.f32 %v440, %v1401
  %v1451 = vmul.f32 %v442, %v1401
  %v1452 = vmul.f32 %v225, %v1406
  %v1453 = vmul.f32 %v227, %v1406
  %v1454 = vmul.f32 %v298, %v1406
  %v1455 = vmul.f32 %v300, %v1406
  %v1456 = vmul.f32 %v371, %v1406
  %v1457 = vmul.f32 %v373, %v1406
  %v1458 = vmul.f32 %v444, %v1406
  %v1459 = vmul.f32 %v446, %v1406
  %v1460 = vmul.f32 %v231, %v1411
  %v1461 = vmul.f32 %v233, %v1411
  %v1462 = vmul.f32 %v304, %v1411
  %v1463 = vmul.f32 %v306, %v1411
  %v1464 = vmul.f32 %v377, %v1411
  %v1465 = vmul.f32 %v379, %v1411
  %v1466 = vmul.f32 %v450, %v1411
  %v1467 = vmul.f32 %v452, %v1411
  %v1468 = vmul.f32 %v235, %v1416
  %v1469 = vmul.f32 %v237, %v1416
  %v1470 = vmul.f32 %v308, %v1416
  %v1471 = vmul.f32 %v310, %v1416
  %v1472 = vmul.f32 %v381, %v1416
  %v1473 = vmul.f32 %v383, %v1416
  %v1474 = vmul.f32 %v454, %v1416
  %v1475 = vmul.f32 %v456, %v1416
  %v1476 = vmul.f32 %v241, %v1421
  %v1477 = vmul.f32 %v243, %v1421
  %v1478 = vmul.f32 %v314, %v1421
  %v1479 = vmul.f32 %v316, %v1421
  %v1480 = vmul.f32 %v387, %v1421
  %v1481 = vmul.f32 %v389, %v1421
  %v1482 = vmul.f32 %v460, %v1421
  %v1483 = vmul.f32 %v462, %v1421
  %v1484 = vmul.f32 %v245, %v1426
  %v1485 = vmul.f32 %v247, %v1426
  %v1486 = vmul.f32 %v318, %v1426
  %v1487 = vmul.f32 %v320, %v1426
  %v1488 = vmul.f32 %v391, %v1426
  %v1489 = vmul.f32 %v393, %v1426
  %v1490 = vmul.f32 %v464, %v1426
  %v1491 = vmul.f32 %v466, %v1426
  %1493 = vset.pattern.permute.xlu0 0
  %1494 = vperm.xlu0 %1493, %v1350
  %v1495 = vpop.permute.xlu0 %1494
  %1498 = vset.pattern.permute.xlu0 0
  %1499 = vperm.xlu0 %1498, %v1355
  %v1500 = vpop.permute.xlu0 %1499
  %1503 = vset.pattern.permute.xlu0 0
  %1504 = vperm.xlu0 %1503, %v1360
  %v1505 = vpop.permute.xlu0 %1504
  %1508 = vset.pattern.permute.xlu0 0
  %1509 = vperm.xlu0 %1508, %v1365
  %v1510 = vpop.permute.xlu0 %1509
  %1513 = vset.pattern.permute.xlu0 0
  %1514 = vperm.xlu0 %1513, %v1370
  %v1515 = vpop.permute.xlu0 %1514
  %1518 = vset.pattern.permute.xlu0 0
  %1519 = vperm.xlu0 %1518, %v1375
  %v1520 = vpop.permute.xlu0 %1519
  %1523 = vset.pattern.permute.xlu0 0
  %1524 = vperm.xlu0 %1523, %v1380
  %v1525 = vpop.permute.xlu0 %1524
  %1528 = vset.pattern.permute.xlu0 0
  %1529 = vperm.xlu0 %1528, %v1385
  %v1530 = vpop.permute.xlu0 %1529
  %v1532 = vadd.f32 %v1428, %v1495
  %v1533 = vadd.f32 %v1429, %v1495
  %v1534 = vadd.f32 %v1430, %v1495
  %v1535 = vadd.f32 %v1431, %v1495
  %v1536 = vadd.f32 %v1432, %v1495
  %v1537 = vadd.f32 %v1433, %v1495
  %v1538 = vadd.f32 %v1434, %v1495
  %v1539 = vadd.f32 %v1435, %v1495
  %v1540 = vadd.f32 %v1436, %v1500
  %v1541 = vadd.f32 %v1437, %v1500
  %v1542 = vadd.f32 %v1438, %v1500
  %v1543 = vadd.f32 %v1439, %v1500
  %v1544 = vadd.f32 %v1440, %v1500
  %v1545 = vadd.f32 %v1441, %v1500
  %v1546 = vadd.f32 %v1442, %v1500
  %v1547 = vadd.f32 %v1443, %v1500
  %v1548 = vadd.f32 %v1444, %v1505
  %v1549 = vadd.f32 %v1445, %v1505
  %v1550 = vadd.f32 %v1446, %v1505
  %v1551 = vadd.f32 %v1447, %v1505
  %v1552 = vadd.f32 %v1448, %v1505
  %v1553 = vadd.f32 %v1449, %v1505
  %v1554 = vadd.f32 %v1450, %v1505
  %v1555 = vadd.f32 %v1451, %v1505
  %v1556 = vadd.f32 %v1452, %v1510
  %v1557 = vadd.f32 %v1453, %v1510
  %v1558 = vadd.f32 %v1454, %v1510
  %v1559 = vadd.f32 %v1455, %v1510
  %v1560 = vadd.f32 %v1456, %v1510
  %v1561 = vadd.f32 %v1457, %v1510
  %v1562 = vadd.f32 %v1458, %v1510
  %v1563 = vadd.f32 %v1459, %v1510
  %v1564 = vadd.f32 %v1460, %v1515
  %v1565 = vadd.f32 %v1461, %v1515
  %v1566 = vadd.f32 %v1462, %v1515
  %v1567 = vadd.f32 %v1463, %v1515
  %v1568 = vadd.f32 %v1464, %v1515
  %v1569 = vadd.f32 %v1465, %v1515
  %v1570 = vadd.f32 %v1466, %v1515
  %v1571 = vadd.f32 %v1467, %v1515
  %v1572 = vadd.f32 %v1468, %v1520
  %v1573 = vadd.f32 %v1469, %v1520
  %v1574 = vadd.f32 %v1470, %v1520
  %v1575 = vadd.f32 %v1471, %v1520
  %v1576 = vadd.f32 %v1472, %v1520
  %v1577 = vadd.f32 %v1473, %v1520
  %v1578 = vadd.f32 %v1474, %v1520
  %v1579 = vadd.f32 %v1475, %v1520
  %v1580 = vadd.f32 %v1476, %v1525
  %v1581 = vadd.f32 %v1477, %v1525
  %v1582 = vadd.f32 %v1478, %v1525
  %v1583 = vadd.f32 %v1479, %v1525
  %v1584 = vadd.f32 %v1480, %v1525
  %v1585 = vadd.f32 %v1481, %v1525
  %v1586 = vadd.f32 %v1482, %v1525
  %v1587 = vadd.f32 %v1483, %v1525
  %v1588 = vadd.f32 %v1484, %v1530
  %v1589 = vadd.f32 %v1485, %v1530
  %v1590 = vadd.f32 %v1486, %v1530
  %v1591 = vadd.f32 %v1487, %v1530
  %v1592 = vadd.f32 %v1488, %v1530
  %v1593 = vadd.f32 %v1489, %v1530
  %v1594 = vadd.f32 %v1490, %v1530
  %v1595 = vadd.f32 %v1491, %v1530
  %v1596 = vmax.f32 %v1532, 0.0
  %v1597 = vmax.f32 %v1533, 0.0
  %v1598 = vmax.f32 %v1534, 0.0
  %v1599 = vmax.f32 %v1535, 0.0
  %v1600 = vmax.f32 %v1536, 0.0
  %v1601 = vmax.f32 %v1537, 0.0
  %v1602 = vmax.f32 %v1538, 0.0
  %v1603 = vmax.f32 %v1539, 0.0
  %v1604 = vmax.f32 %v1540, 0.0
  %v1605 = vmax.f32 %v1541, 0.0
  %v1606 = vmax.f32 %v1542, 0.0
  %v1607 = vmax.f32 %v1543, 0.0
  %v1608 = vmax.f32 %v1544, 0.0
  %v1609 = vmax.f32 %v1545, 0.0
  %v1610 = vmax.f32 %v1546, 0.0
  %v1611 = vmax.f32 %v1547, 0.0
  %v1612 = vmax.f32 %v1548, 0.0
  %v1613 = vmax.f32 %v1549, 0.0
  %v1614 = vmax.f32 %v1550, 0.0
  %v1615 = vmax.f32 %v1551, 0.0
  %v1616 = vmax.f32 %v1552, 0.0
  %v1617 = vmax.f32 %v1553, 0.0
  %v1618 = vmax.f32 %v1554, 0.0
  %v1619 = vmax.f32 %v1555, 0.0
  %v1620 = vmax.f32 %v1556, 0.0
  %v1621 = vmax.f32 %v1557, 0.0
  %v1622 = vmax.f32 %v1558, 0.0
  %v1623 = vmax.f32 %v1559, 0.0
  %v1624 = vmax.f32 %v1560, 0.0
  %v1625 = vmax.f32 %v1561, 0.0
  %v1626 = vmax.f32 %v1562, 0.0
  %v1627 = vmax.f32 %v1563, 0.0
  %v1628 = vmax.f32 %v1564, 0.0
  %v1629 = vmax.f32 %v1565, 0.0
  %v1630 = vmax.f32 %v1566, 0.0
  %v1631 = vmax.f32 %v1567, 0.0
  %v1632 = vmax.f32 %v1568, 0.0
  %v1633 = vmax.f32 %v1569, 0.0
  %v1634 = vmax.f32 %v1570, 0.0
  %v1635 = vmax.f32 %v1571, 0.0
  %v1636 = vmax.f32 %v1572, 0.0
  %v1637 = vmax.f32 %v1573, 0.0
  %v1638 = vmax.f32 %v1574, 0.0
  %v1639 = vmax.f32 %v1575, 0.0
  %v1640 = vmax.f32 %v1576, 0.0
  %v1641 = vmax.f32 %v1577, 0.0
  %v1642 = vmax.f32 %v1578, 0.0
  %v1643 = vmax.f32 %v1579, 0.0
  %v1644 = vmax.f32 %v1580, 0.0
  %v1645 = vmax.f32 %v1581, 0.0
  %v1646 = vmax.f32 %v1582, 0.0
  %v1647 = vmax.f32 %v1583, 0.0
  %v1648 = vmax.f32 %v1584, 0.0
  %v1649 = vmax.f32 %v1585, 0.0
  %v1650 = vmax.f32 %v1586, 0.0
  %v1651 = vmax.f32 %v1587, 0.0
  %v1652 = vmax.f32 %v1588, 0.0
  %v1653 = vmax.f32 %v1589, 0.0
  %v1654 = vmax.f32 %v1590, 0.0
  %v1655 = vmax.f32 %v1591, 0.0
  %v1656 = vmax.f32 %v1592, 0.0
  %v1657 = vmax.f32 %v1593, 0.0
  %v1658 = vmax.f32 %v1594, 0.0
  %v1659 = vmax.f32 %v1595, 0.0
  %v1660 = vpack.c.bf16 %v1604, %v1596
  %v1661 = vpack.c.bf16 %v1605, %v1597
  %v1662 = vpack.c.bf16 %v1606, %v1598
  %v1663 = vpack.c.bf16 %v1607, %v1599
  %v1664 = vpack.c.bf16 %v1608, %v1600
  %v1665 = vpack.c.bf16 %v1609, %v1601
  %v1666 = vpack.c.bf16 %v1610, %v1602
  %v1667 = vpack.c.bf16 %v1611, %v1603
  %v1668 = vpack.c.bf16 %v1620, %v1612
  %v1669 = vpack.c.bf16 %v1621, %v1613
  %v1670 = vpack.c.bf16 %v1622, %v1614
  %v1671 = vpack.c.bf16 %v1623, %v1615
  %v1672 = vpack.c.bf16 %v1624, %v1616
  %v1673 = vpack.c.bf16 %v1625, %v1617
  %v1674 = vpack.c.bf16 %v1626, %v1618
  %v1675 = vpack.c.bf16 %v1627, %v1619
  %v1676 = vpack.c.bf16 %v1636, %v1628
  %v1677 = vpack.c.bf16 %v1637, %v1629
  %v1678 = vpack.c.bf16 %v1638, %v1630
  %v1679 = vpack.c.bf16 %v1639, %v1631
  %v1680 = vpack.c.bf16 %v1640, %v1632
  %v1681 = vpack.c.bf16 %v1641, %v1633
  %v1682 = vpack.c.bf16 %v1642, %v1634
  %v1683 = vpack.c.bf16 %v1643, %v1635
  %v1684 = vpack.c.bf16 %v1652, %v1644
  %v1685 = vpack.c.bf16 %v1653, %v1645
  %v1686 = vpack.c.bf16 %v1654, %v1646
  %v1687 = vpack.c.bf16 %v1655, %v1647
  %v1688 = vpack.c.bf16 %v1656, %v1648
  %v1689 = vpack.c.bf16 %v1657, %v1649
  %v1690 = vpack.c.bf16 %v1658, %v1650
  %v1691 = vpack.c.bf16 %v1659, %v1651
  %v1692 = vld [vmem:[%s6] sm:$0xf]
  %v1693 = vld [vmem:[%s6 + $0x4] sm:$0xf]
  %v1694 = vld [vmem:[%s6 + $0x8] sm:$0xf]
  %v1695 = vld [vmem:[%s6 + $0xc] sm:$0xf]
  %v1696 = vld [vmem:[%s6 + $0x10] sm:$0xf]
  %v1697 = vld [vmem:[%s6 + $0x14] sm:$0xf]
  %v1698 = vld [vmem:[%s6 + $0x18] sm:$0xf]
  %v1699 = vld [vmem:[%s6 + $0x1c] sm:$0xf]
  %v1708 = vunpack.c.l.b16 %v1692
  %v1709 = vunpack.c.l.b16 %v1693
  %v1710 = vunpack.c.l.b16 %v1694
  %v1711 = vunpack.c.l.b16 %v1695
  %v1712 = vunpack.c.l.b16 %v1696
  %v1713 = vunpack.c.l.b16 %v1697
  %v1714 = vunpack.c.l.b16 %v1698
  %v1715 = vunpack.c.l.b16 %v1699
  %v1716 = vpack.c.b16 %v1709, %v1708
  %v1717 = vpack.c.b16 %v1711, %v1710
  %v1718 = vpack.c.b16 %v1713, %v1712
  %v1719 = vpack.c.b16 %v1715, %v1714
  %v1721 = vsel %vm469, %v1716, 0
  %v1724 = vsel %vm469, %v1717, 0
  %v1727 = vsel %vm469, %v1718, 0
  %v1730 = vsel %vm469, %v1719, 0
  %1732 = vmatprep.subr.bf16.mxu0 %v1661
  %1733 = vmatpush1.bf16.msra.mxu0 %v1660
  %1734 = vmatprep.subr.bf16.mxu0 %v1669
  %1735 = vmatpush1.bf16.msra.mxu0 %v1668
  %1736 = vmatprep.subr.bf16.mxu0 %v1677
  %1737 = vmatpush1.bf16.msra.mxu0 %v1676
  %1738 = vmatprep.subr.bf16.mxu0 %v1685
  %1739 = vmatpush1.bf16.msra.mxu0 %v1684
  %1740 = vmatprep.subr.bf16.mxu0 0
  %1741 = vmatpush1.bf16.msra.mxu0 0
  %1742 = vmatprep.subr.bf16.mxu0 0
  %1743 = vmatpush1.bf16.msra.mxu0 0
  %1744 = vmatprep.subr.bf16.mxu0 0
  %1745 = vmatpush1.bf16.msra.mxu0 0
  %1746 = vmatprep.subr.bf16.mxu0 0
  %1747 = vmatpush1.bf16.msra.mxu0 0
  %1748 = vmatprep.subr.bf16.mxu0 0
  %1749 = vmatpush1.bf16.msra.mxu0 0
  %1750 = vmatprep.subr.bf16.mxu0 0
  %1751 = vmatpush1.bf16.msra.mxu0 0
  %1752 = vmatprep.subr.bf16.mxu0 0
  %1753 = vmatpush1.bf16.msra.mxu0 0
  %1754 = vmatprep.subr.bf16.mxu0 0
  %1755 = vmatpush1.bf16.msra.mxu0 0
  %1756 = vmatprep.subr.bf16.mxu0 0
  %1757 = vmatpush1.bf16.msra.mxu0 0
  %1758 = vmatprep.subr.bf16.mxu0 0
  %1759 = vmatpush1.bf16.msra.mxu0 0
  %1760 = vmatprep.subr.bf16.mxu0 0
  %1761 = vmatpush1.bf16.msra.mxu0 0
  %1762 = vmatprep.subr.bf16.mxu0 0
  %1763 = vmatpush1.bf16.msra.mxu0 0
  %1764 = vmatprep.mubr.bf16.mxu0 0
  %1765 = vmatmul.mubr.bf16.gmra.mrb[0].mxu0 %v1721
  %v1766 = vpop.f32.mrb[0].mxu0
  %v1767 = vadd.f32 0.0, %v1766
  %v1768 = vpop.f32.mrb[0].mxu0
  %v1769 = vadd.f32 0.0, %v1768
  %v1770 = vpop.f32.mrb[0].mxu0
  %v1771 = vadd.f32 0.0, %v1770
  %v1772 = vpop.f32.mrb[0].mxu0
  %v1773 = vadd.f32 0.0, %v1772
  %1774 = vmatprep.mubr.bf16.mxu0 0
  %1775 = vmatmul.mubr.bf16.gmra.mrb[0].mxu0 %v1724
  %v1776 = vpop.f32.mrb[0].mxu0
  %v1777 = vadd.f32 0.0, %v1776
  %v1778 = vpop.f32.mrb[0].mxu0
  %v1779 = vadd.f32 0.0, %v1778
  %v1780 = vpop.f32.mrb[0].mxu0
  %v1781 = vadd.f32 0.0, %v1780
  %v1782 = vpop.f32.mrb[0].mxu0
  %v1783 = vadd.f32 0.0, %v1782
  %1784 = vmatprep.mubr.bf16.mxu0 0
  %1785 = vmatmul.mubr.bf16.gmra.mrb[0].mxu0 %v1727
  %v1786 = vpop.f32.mrb[0].mxu0
  %v1787 = vadd.f32 0.0, %v1786
  %v1788 = vpop.f32.mrb[0].mxu0
  %v1789 = vadd.f32 0.0, %v1788
  %v1790 = vpop.f32.mrb[0].mxu0
  %v1791 = vadd.f32 0.0, %v1790
  %v1792 = vpop.f32.mrb[0].mxu0
  %v1793 = vadd.f32 0.0, %v1792
  %1794 = vmatprep.mubr.bf16.mxu0 0
  %1795 = vmatmul.mubr.bf16.gmra.mrb[0].mxu0 %v1730
  %v1796 = vpop.f32.mrb[0].mxu0
  %v1797 = vadd.f32 0.0, %v1796
  %v1798 = vpop.f32.mrb[0].mxu0
  %v1799 = vadd.f32 0.0, %v1798
  %v1800 = vpop.f32.mrb[0].mxu0
  %v1801 = vadd.f32 0.0, %v1800
  %v1802 = vpop.f32.mrb[0].mxu0
  %v1803 = vadd.f32 0.0, %v1802
  %1804 = vdwg.mxu0
  %1805 = vmatprep.subr.bf16.mxu0 %v1663
  %1806 = vmatpush1.bf16.msra.mxu0 %v1662
  %1807 = vmatprep.subr.bf16.mxu0 %v1671
  %1808 = vmatpush1.bf16.msra.mxu0 %v1670
  %1809 = vmatprep.subr.bf16.mxu0 %v1679
  %1810 = vmatpush1.bf16.msra.mxu0 %v1678
  %1811 = vmatprep.subr.bf16.mxu0 %v1687
  %1812 = vmatpush1.bf16.msra.mxu0 %v1686
  %1813 = vmatprep.subr.bf16.mxu0 0
  %1814 = vmatpush1.bf16.msra.mxu0 0
  %1815 = vmatprep.subr.bf16.mxu0 0
  %1816 = vmatpush1.bf16.msra.mxu0 0
  %1817 = vmatprep.subr.bf16.mxu0 0
  %1818 = vmatpush1.bf16.msra.mxu0 0
  %1819 = vmatprep.subr.bf16.mxu0 0
  %1820 = vmatpush1.bf16.msra.mxu0 0
  %1821 = vmatprep.subr.bf16.mxu0 0
  %1822 = vmatpush1.bf16.msra.mxu0 0
  %1823 = vmatprep.subr.bf16.mxu0 0
  %1824 = vmatpush1.bf16.msra.mxu0 0
  %1825 = vmatprep.subr.bf16.mxu0 0
  %1826 = vmatpush1.bf16.msra.mxu0 0
  %1827 = vmatprep.subr.bf16.mxu0 0
  %1828 = vmatpush1.bf16.msra.mxu0 0
  %1829 = vmatprep.subr.bf16.mxu0 0
  %1830 = vmatpush1.bf16.msra.mxu0 0
  %1831 = vmatprep.subr.bf16.mxu0 0
  %1832 = vmatpush1.bf16.msra.mxu0 0
  %1833 = vmatprep.subr.bf16.mxu0 0
  %1834 = vmatpush1.bf16.msra.mxu0 0
  %1835 = vmatprep.subr.bf16.mxu0 0
  %1836 = vmatpush1.bf16.msra.mxu0 0
  %1837 = vmatprep.mubr.bf16.mxu0 0
  %1838 = vmatmul.mubr.bf16.gmra.mrb[0].mxu0 %v1721
  %v1839 = vpop.f32.mrb[0].mxu0
  %v1840 = vadd.f32 0.0, %v1839
  %v1841 = vpop.f32.mrb[0].mxu0
  %v1842 = vadd.f32 0.0, %v1841
  %v1843 = vpop.f32.mrb[0].mxu0
  %v1844 = vadd.f32 0.0, %v1843
  %v1845 = vpop.f32.mrb[0].mxu0
  %v1846 = vadd.f32 0.0, %v1845
  %1847 = vmatprep.mubr.bf16.mxu0 0
  %1848 = vmatmul.mubr.bf16.gmra.mrb[0].mxu0 %v1724
  %v1849 = vpop.f32.mrb[0].mxu0
  %v1850 = vadd.f32 0.0, %v1849
  %v1851 = vpop.f32.mrb[0].mxu0
  %v1852 = vadd.f32 0.0, %v1851
  %v1853 = vpop.f32.mrb[0].mxu0
  %v1854 = vadd.f32 0.0, %v1853
  %v1855 = vpop.f32.mrb[0].mxu0
  %v1856 = vadd.f32 0.0, %v1855
  %1857 = vmatprep.mubr.bf16.mxu0 0
  %1858 = vmatmul.mubr.bf16.gmra.mrb[0].mxu0 %v1727
  %v1859 = vpop.f32.mrb[0].mxu0
  %v1860 = vadd.f32 0.0, %v1859
  %v1861 = vpop.f32.mrb[0].mxu0
  %v1862 = vadd.f32 0.0, %v1861
  %v1863 = vpop.f32.mrb[0].mxu0
  %v1864 = vadd.f32 0.0, %v1863
  %v1865 = vpop.f32.mrb[0].mxu0
  %v1866 = vadd.f32 0.0, %v1865
  %1867 = vmatprep.mubr.bf16.mxu0 0
  %1868 = vmatmul.mubr.bf16.gmra.mrb[0].mxu0 %v1730
  %v1869 = vpop.f32.mrb[0].mxu0
  %v1870 = vadd.f32 0.0, %v1869
  %v1871 = vpop.f32.mrb[0].mxu0
  %v1872 = vadd.f32 0.0, %v1871
  %v1873 = vpop.f32.mrb[0].mxu0
  %v1874 = vadd.f32 0.0, %v1873
  %v1875 = vpop.f32.mrb[0].mxu0
  %v1876 = vadd.f32 0.0, %v1875
  %1877 = vdwg.mxu0
  %1878 = vmatprep.subr.bf16.mxu0 %v1665
  %1879 = vmatpush1.bf16.msra.mxu0 %v1664
  %1880 = vmatprep.subr.bf16.mxu0 %v1673
  %1881 = vmatpush1.bf16.msra.mxu0 %v1672
  %1882 = vmatprep.subr.bf16.mxu0 %v1681
  %1883 = vmatpush1.bf16.msra.mxu0 %v1680
  %1884 = vmatprep.subr.bf16.mxu0 %v1689
  %1885 = vmatpush1.bf16.msra.mxu0 %v1688
  %1886 = vmatprep.subr.bf16.mxu0 0
  %1887 = vmatpush1.bf16.msra.mxu0 0
  %1888 = vmatprep.subr.bf16.mxu0 0
  %1889 = vmatpush1.bf16.msra.mxu0 0
  %1890 = vmatprep.subr.bf16.mxu0 0
  %1891 = vmatpush1.bf16.msra.mxu0 0
  %1892 = vmatprep.subr.bf16.mxu0 0
  %1893 = vmatpush1.bf16.msra.mxu0 0
  %1894 = vmatprep.subr.bf16.mxu0 0
  %1895 = vmatpush1.bf16.msra.mxu0 0
  %1896 = vmatprep.subr.bf16.mxu0 0
  %1897 = vmatpush1.bf16.msra.mxu0 0
  %1898 = vmatprep.subr.bf16.mxu0 0
  %1899 = vmatpush1.bf16.msra.mxu0 0
  %1900 = vmatprep.subr.bf16.mxu0 0
  %1901 = vmatpush1.bf16.msra.mxu0 0
  %1902 = vmatprep.subr.bf16.mxu0 0
  %1903 = vmatpush1.bf16.msra.mxu0 0
  %1904 = vmatprep.subr.bf16.mxu0 0
  %1905 = vmatpush1.bf16.msra.mxu0 0
  %1906 = vmatprep.subr.bf16.mxu0 0
  %1907 = vmatpush1.bf16.msra.mxu0 0
  %1908 = vmatprep.subr.bf16.mxu0 0
  %1909 = vmatpush1.bf16.msra.mxu0 0
  %1910 = vmatprep.mubr.bf16.mxu0 0
  %1911 = vmatmul.mubr.bf16.gmra.mrb[0].mxu0 %v1721
  %v1912 = vpop.f32.mrb[0].mxu0
  %v1913 = vadd.f32 0.0, %v1912
  %v1914 = vpop.f32.mrb[0].mxu0
  %v1915 = vadd.f32 0.0, %v1914
  %v1916 = vpop.f32.mrb[0].mxu0
  %v1917 = vadd.f32 0.0, %v1916
  %v1918 = vpop.f32.mrb[0].mxu0
  %v1919 = vadd.f32 0.0, %v1918
  %1920 = vmatprep.mubr.bf16.mxu0 0
  %1921 = vmatmul.mubr.bf16.gmra.mrb[0].mxu0 %v1724
  %v1922 = vpop.f32.mrb[0].mxu0
  %v1923 = vadd.f32 0.0, %v1922
  %v1924 = vpop.f32.mrb[0].mxu0
  %v1925 = vadd.f32 0.0, %v1924
  %v1926 = vpop.f32.mrb[0].mxu0
  %v1927 = vadd.f32 0.0, %v1926
  %v1928 = vpop.f32.mrb[0].mxu0
  %v1929 = vadd.f32 0.0, %v1928
  %1930 = vmatprep.mubr.bf16.mxu0 0
  %1931 = vmatmul.mubr.bf16.gmra.mrb[0].mxu0 %v1727
  %v1932 = vpop.f32.mrb[0].mxu0
  %v1933 = vadd.f32 0.0, %v1932
  %v1934 = vpop.f32.mrb[0].mxu0
  %v1935 = vadd.f32 0.0, %v1934
  %v1936 = vpop.f32.mrb[0].mxu0
  %v1937 = vadd.f32 0.0, %v1936
  %v1938 = vpop.f32.mrb[0].mxu0
  %v1939 = vadd.f32 0.0, %v1938
  %1940 = vmatprep.mubr.bf16.mxu0 0
  %1941 = vmatmul.mubr.bf16.gmra.mrb[0].mxu0 %v1730
  %v1942 = vpop.f32.mrb[0].mxu0
  %v1943 = vadd.f32 0.0, %v1942
  %v1944 = vpop.f32.mrb[0].mxu0
  %v1945 = vadd.f32 0.0, %v1944
  %v1946 = vpop.f32.mrb[0].mxu0
  %v1947 = vadd.f32 0.0, %v1946
  %v1948 = vpop.f32.mrb[0].mxu0
  %v1949 = vadd.f32 0.0, %v1948
  %1950 = vdwg.mxu0
  %1951 = vmatprep.subr.bf16.mxu0 %v1667
  %1952 = vmatpush1.bf16.msra.mxu0 %v1666
  %1953 = vmatprep.subr.bf16.mxu0 %v1675
  %1954 = vmatpush1.bf16.msra.mxu0 %v1674
  %1955 = vmatprep.subr.bf16.mxu0 %v1683
  %1956 = vmatpush1.bf16.msra.mxu0 %v1682
  %1957 = vmatprep.subr.bf16.mxu0 %v1691
  %1958 = vmatpush1.bf16.msra.mxu0 %v1690
  %1959 = vmatprep.subr.bf16.mxu0 0
  %1960 = vmatpush1.bf16.msra.mxu0 0
  %1961 = vmatprep.subr.bf16.mxu0 0
  %1962 = vmatpush1.bf16.msra.mxu0 0
  %1963 = vmatprep.subr.bf16.mxu0 0
  %1964 = vmatpush1.bf16.msra.mxu0 0
  %1965 = vmatprep.subr.bf16.mxu0 0
  %1966 = vmatpush1.bf16.msra.mxu0 0
  %1967 = vmatprep.subr.bf16.mxu0 0
  %1968 = vmatpush1.bf16.msra.mxu0 0
  %1969 = vmatprep.subr.bf16.mxu0 0
  %1970 = vmatpush1.bf16.msra.mxu0 0
  %1971 = vmatprep.subr.bf16.mxu0 0
  %1972 = vmatpush1.bf16.msra.mxu0 0
  %1973 = vmatprep.subr.bf16.mxu0 0
  %1974 = vmatpush1.bf16.msra.mxu0 0
  %1975 = vmatprep.subr.bf16.mxu0 0
  %1976 = vmatpush1.bf16.msra.mxu0 0
  %1977 = vmatprep.subr.bf16.mxu0 0
  %1978 = vmatpush1.bf16.msra.mxu0 0
  %1979 = vmatprep.subr.bf16.mxu0 0
  %1980 = vmatpush1.bf16.msra.mxu0 0
  %1981 = vmatprep.subr.bf16.mxu0 0
  %1982 = vmatpush1.bf16.msra.mxu0 0
  %1983 = vmatprep.mubr.bf16.mxu0 0
  %1984 = vmatmul.mubr.bf16.gmra.mrb[0].mxu0 %v1721
  %v1985 = vpop.f32.mrb[0].mxu0
  %v1986 = vadd.f32 0.0, %v1985
  %v1987 = vpop.f32.mrb[0].mxu0
  %v1988 = vadd.f32 0.0, %v1987
  %v1989 = vpop.f32.mrb[0].mxu0
  %v1990 = vadd.f32 0.0, %v1989
  %v1991 = vpop.f32.mrb[0].mxu0
  %v1992 = vadd.f32 0.0, %v1991
  %1993 = vmatprep.mubr.bf16.mxu0 0
  %1994 = vmatmul.mubr.bf16.gmra.mrb[0].mxu0 %v1724
  %v1995 = vpop.f32.mrb[0].mxu0
  %v1996 = vadd.f32 0.0, %v1995
  %v1997 = vpop.f32.mrb[0].mxu0
  %v1998 = vadd.f32 0.0, %v1997
  %v1999 = vpop.f32.mrb[0].mxu0
  %v2000 = vadd.f32 0.0, %v1999
  %v2001 = vpop.f32.mrb[0].mxu0
  %v2002 = vadd.f32 0.0, %v2001
  %2003 = vmatprep.mubr.bf16.mxu0 0
  %2004 = vmatmul.mubr.bf16.gmra.mrb[0].mxu0 %v1727
  %v2005 = vpop.f32.mrb[0].mxu0
  %v2006 = vadd.f32 0.0, %v2005
  %v2007 = vpop.f32.mrb[0].mxu0
  %v2008 = vadd.f32 0.0, %v2007
  %v2009 = vpop.f32.mrb[0].mxu0
  %v2010 = vadd.f32 0.0, %v2009
  %v2011 = vpop.f32.mrb[0].mxu0
  %v2012 = vadd.f32 0.0, %v2011
  %2013 = vmatprep.mubr.bf16.mxu0 0
  %2014 = vmatmul.mubr.bf16.gmra.mrb[0].mxu0 %v1730
  %v2015 = vpop.f32.mrb[0].mxu0
  %v2016 = vadd.f32 0.0, %v2015
  %v2017 = vpop.f32.mrb[0].mxu0
  %v2018 = vadd.f32 0.0, %v2017
  %v2019 = vpop.f32.mrb[0].mxu0
  %v2020 = vadd.f32 0.0, %v2019
  %v2021 = vpop.f32.mrb[0].mxu0
  %v2022 = vadd.f32 0.0, %v2021
  %2023 = vdwg.mxu0
  %v2024 = vld [vmem:[%s7] sm:$0xff]
  %v2026 = vsel %vm469, %v2024, 0
  %2028 = vmatprep.subr.mxu0 %v1769
  %2029 = vmatpush1.msra.mxu0 %v1767
  %2030 = vmatprep.subr.mxu0 %v1773
  %2031 = vmatpush1.msra.mxu0 %v1771
  %2032 = vmatprep.subr.mxu0 %v1779
  %2033 = vmatpush1.msra.mxu0 %v1777
  %2034 = vmatprep.subr.mxu0 %v1783
  %2035 = vmatpush1.msra.mxu0 %v1781
  %2036 = vmatprep.subr.mxu0 %v1789
  %2037 = vmatpush1.msra.mxu0 %v1787
  %2038 = vmatprep.subr.mxu0 %v1793
  %2039 = vmatpush1.msra.mxu0 %v1791
  %2040 = vmatprep.subr.mxu0 %v1799
  %2041 = vmatpush1.msra.mxu0 %v1797
  %2042 = vmatprep.subr.mxu0 %v1803
  %2043 = vmatpush1.msra.mxu0 %v1801
  %2044 = vmatprep.subr.mxu0 0.0
  %2045 = vmatpush1.msra.mxu0 0.0
  %2046 = vmatprep.subr.mxu0 0.0
  %2047 = vmatpush1.msra.mxu0 0.0
  %2048 = vmatprep.subr.mxu0 0.0
  %2049 = vmatpush1.msra.mxu0 0.0
  %2050 = vmatprep.subr.mxu0 0.0
  %2051 = vmatpush1.msra.mxu0 0.0
  %2052 = vmatprep.subr.mxu0 0.0
  %2053 = vmatpush1.msra.mxu0 0.0
  %2054 = vmatprep.subr.mxu0 0.0
  %2055 = vmatpush1.msra.mxu0 0.0
  %2056 = vmatprep.subr.mxu0 0.0
  %2057 = vmatpush1.msra.mxu0 0.0
  %2058 = vmatprep.subr.mxu0 0.0
  %2059 = vmatpush1.msra.mxu0 0.0
  %2060 = vmatprep.subr.mxu0 0.0
  %2061 = vmatpush1.msra.mxu0 0.0
  %2062 = vmatprep.subr.mxu0 0.0
  %2063 = vmatpush1.msra.mxu0 0.0
  %2064 = vmatprep.subr.mxu0 0.0
  %2065 = vmatpush1.msra.mxu0 0.0
  %2066 = vmatprep.subr.mxu0 0.0
  %2067 = vmatpush1.msra.mxu0 0.0
  %2068 = vmatprep.subr.mxu0 0.0
  %2069 = vmatpush1.msra.mxu0 0.0
  %2070 = vmatprep.subr.mxu0 0.0
  %2071 = vmatpush1.msra.mxu0 0.0
  %2072 = vmatprep.subr.mxu0 0.0
  %2073 = vmatpush1.msra.mxu0 0.0
  %2074 = vmatprep.subr.mxu0 0.0
  %2075 = vmatpush1.msra.mxu0 0.0
  %2076 = vmatprep.subr.mxu0 0.0
  %2077 = vmatpush1.msra.mxu0 0.0
  %2078 = vmatprep.subr.mxu0 0.0
  %2079 = vmatpush1.msra.mxu0 0.0
  %2080 = vmatprep.subr.mxu0 0.0
  %2081 = vmatpush1.msra.mxu0 0.0
  %2082 = vmatprep.subr.mxu0 0.0
  %2083 = vmatpush1.msra.mxu0 0.0
  %2084 = vmatprep.subr.mxu0 0.0
  %2085 = vmatpush1.msra.mxu0 0.0
  %2086 = vmatprep.subr.mxu0 0.0
  %2087 = vmatpush1.msra.mxu0 0.0
  %2088 = vmatprep.subr.mxu0 0.0
  %2089 = vmatpush1.msra.mxu0 0.0
  %2090 = vmatprep.subr.mxu0 0.0
  %2091 = vmatpush1.msra.mxu0 0.0
  %2092 = vmatprep.mubr.f32.mxu0 0.0
  %2093 = vmatmul.mubr.f32.gmra.mrb[0].mxu0 %v2026
  %v2094 = vpop.f32.mrb[0].mxu0
  %v2095 = vadd.f32 0.0, %v2094
  %v2096 = vpop.f32.mrb[0].mxu0
  %v2097 = vadd.f32 0.0, %v2096
  %2098 = vdwg.mxu0
  %2099 = vmatprep.subr.mxu0 %v1842
  %2100 = vmatpush1.msra.mxu0 %v1840
  %2101 = vmatprep.subr.mxu0 %v1846
  %2102 = vmatpush1.msra.mxu0 %v1844
  %2103 = vmatprep.subr.mxu0 %v1852
  %2104 = vmatpush1.msra.mxu0 %v1850
  %2105 = vmatprep.subr.mxu0 %v1856
  %2106 = vmatpush1.msra.mxu0 %v1854
  %2107 = vmatprep.subr.mxu0 %v1862
  %2108 = vmatpush1.msra.mxu0 %v1860
  %2109 = vmatprep.subr.mxu0 %v1866
  %2110 = vmatpush1.msra.mxu0 %v1864
  %2111 = vmatprep.subr.mxu0 %v1872
  %2112 = vmatpush1.msra.mxu0 %v1870
  %2113 = vmatprep.subr.mxu0 %v1876
  %2114 = vmatpush1.msra.mxu0 %v1874
  %2115 = vmatprep.subr.mxu0 0.0
  %2116 = vmatpush1.msra.mxu0 0.0
  %2117 = vmatprep.subr.mxu0 0.0
  %2118 = vmatpush1.msra.mxu0 0.0
  %2119 = vmatprep.subr.mxu0 0.0
  %2120 = vmatpush1.msra.mxu0 0.0
  %2121 = vmatprep.subr.mxu0 0.0
  %2122 = vmatpush1.msra.mxu0 0.0
  %2123 = vmatprep.subr.mxu0 0.0
  %2124 = vmatpush1.msra.mxu0 0.0
  %2125 = vmatprep.subr.mxu0 0.0
  %2126 = vmatpush1.msra.mxu0 0.0
  %2127 = vmatprep.subr.mxu0 0.0
  %2128 = vmatpush1.msra.mxu0 0.0
  %2129 = vmatprep.subr.mxu0 0.0
  %2130 = vmatpush1.msra.mxu0 0.0
  %2131 = vmatprep.subr.mxu0 0.0
  %2132 = vmatpush1.msra.mxu0 0.0
  %2133 = vmatprep.subr.mxu0 0.0
  %2134 = vmatpush1.msra.mxu0 0.0
  %2135 = vmatprep.subr.mxu0 0.0
  %2136 = vmatpush1.msra.mxu0 0.0
  %2137 = vmatprep.subr.mxu0 0.0
  %2138 = vmatpush1.msra.mxu0 0.0
  %2139 = vmatprep.subr.mxu0 0.0
  %2140 = vmatpush1.msra.mxu0 0.0
  %2141 = vmatprep.subr.mxu0 0.0
  %2142 = vmatpush1.msra.mxu0 0.0
  %2143 = vmatprep.subr.mxu0 0.0
  %2144 = vmatpush1.msra.mxu0 0.0
  %2145 = vmatprep.subr.mxu0 0.0
  %2146 = vmatpush1.msra.mxu0 0.0
  %2147 = vmatprep.subr.mxu0 0.0
  %2148 = vmatpush1.msra.mxu0 0.0
  %2149 = vmatprep.subr.mxu0 0.0
  %2150 = vmatpush1.msra.mxu0 0.0
  %2151 = vmatprep.subr.mxu0 0.0
  %2152 = vmatpush1.msra.mxu0 0.0
  %2153 = vmatprep.subr.mxu0 0.0
  %2154 = vmatpush1.msra.mxu0 0.0
  %2155 = vmatprep.subr.mxu0 0.0
  %2156 = vmatpush1.msra.mxu0 0.0
  %2157 = vmatprep.subr.mxu0 0.0
  %2158 = vmatpush1.msra.mxu0 0.0
  %2159 = vmatprep.subr.mxu0 0.0
  %2160 = vmatpush1.msra.mxu0 0.0
  %2161 = vmatprep.subr.mxu0 0.0
  %2162 = vmatpush1.msra.mxu0 0.0
  %2163 = vmatprep.mubr.f32.mxu0 0.0
  %2164 = vmatmul.mubr.f32.gmra.mrb[0].mxu0 %v2026
  %v2165 = vpop.f32.mrb[0].mxu0
  %v2166 = vadd.f32 0.0, %v2165
  %v2167 = vpop.f32.mrb[0].mxu0
  %v2168 = vadd.f32 0.0, %v2167
  %2169 = vdwg.mxu0
  %2170 = vmatprep.subr.mxu0 %v1915
  %2171 = vmatpush1.msra.mxu0 %v1913
  %2172 = vmatprep.subr.mxu0 %v1919
  %2173 = vmatpush1.msra.mxu0 %v1917
  %2174 = vmatprep.subr.mxu0 %v1925
  %2175 = vmatpush1.msra.mxu0 %v1923
  %2176 = vmatprep.subr.mxu0 %v1929
  %2177 = vmatpush1.msra.mxu0 %v1927
  %2178 = vmatprep.subr.mxu0 %v1935
  %2179 = vmatpush1.msra.mxu0 %v1933
  %2180 = vmatprep.subr.mxu0 %v1939
  %2181 = vmatpush1.msra.mxu0 %v1937
  %2182 = vmatprep.subr.mxu0 %v1945
  %2183 = vmatpush1.msra.mxu0 %v1943
  %2184 = vmatprep.subr.mxu0 %v1949
  %2185 = vmatpush1.msra.mxu0 %v1947
  %2186 = vmatprep.subr.mxu0 0.0
  %2187 = vmatpush1.msra.mxu0 0.0
  %2188 = vmatprep.subr.mxu0 0.0
  %2189 = vmatpush1.msra.mxu0 0.0
  %2190 = vmatprep.subr.mxu0 0.0
  %2191 = vmatpush1.msra.mxu0 0.0
  %2192 = vmatprep.subr.mxu0 0.0
  %2193 = vmatpush1.msra.mxu0 0.0
  %2194 = vmatprep.subr.mxu0 0.0
  %2195 = vmatpush1.msra.mxu0 0.0
  %2196 = vmatprep.subr.mxu0 0.0
  %2197 = vmatpush1.msra.mxu0 0.0
  %2198 = vmatprep.subr.mxu0 0.0
  %2199 = vmatpush1.msra.mxu0 0.0
  %2200 = vmatprep.subr.mxu0 0.0
  %2201 = vmatpush1.msra.mxu0 0.0
  %2202 = vmatprep.subr.mxu0 0.0
  %2203 = vmatpush1.msra.mxu0 0.0
  %2204 = vmatprep.subr.mxu0 0.0
  %2205 = vmatpush1.msra.mxu0 0.0
  %2206 = vmatprep.subr.mxu0 0.0
  %2207 = vmatpush1.msra.mxu0 0.0
  %2208 = vmatprep.subr.mxu0 0.0
  %2209 = vmatpush1.msra.mxu0 0.0
  %2210 = vmatprep.subr.mxu0 0.0
  %2211 = vmatpush1.msra.mxu0 0.0
  %2212 = vmatprep.subr.mxu0 0.0
  %2213 = vmatpush1.msra.mxu0 0.0
  %2214 = vmatprep.subr.mxu0 0.0
  %2215 = vmatpush1.msra.mxu0 0.0
  %2216 = vmatprep.subr.mxu0 0.0
  %2217 = vmatpush1.msra.mxu0 0.0
  %2218 = vmatprep.subr.mxu0 0.0
  %2219 = vmatpush1.msra.mxu0 0.0
  %2220 = vmatprep.subr.mxu0 0.0
  %2221 = vmatpush1.msra.mxu0 0.0
  %2222 = vmatprep.subr.mxu0 0.0
  %2223 = vmatpush1.msra.mxu0 0.0
  %2224 = vmatprep.subr.mxu0 0.0
  %2225 = vmatpush1.msra.mxu0 0.0
  %2226 = vmatprep.subr.mxu0 0.0
  %2227 = vmatpush1.msra.mxu0 0.0
  %2228 = vmatprep.subr.mxu0 0.0
  %2229 = vmatpush1.msra.mxu0 0.0
  %2230 = vmatprep.subr.mxu0 0.0
  %2231 = vmatpush1.msra.mxu0 0.0
  %2232 = vmatprep.subr.mxu0 0.0
  %2233 = vmatpush1.msra.mxu0 0.0
  %2234 = vmatprep.mubr.f32.mxu0 0.0
  %2235 = vmatmul.mubr.f32.gmra.mrb[0].mxu0 %v2026
  %v2236 = vpop.f32.mrb[0].mxu0
  %v2237 = vadd.f32 0.0, %v2236
  %v2238 = vpop.f32.mrb[0].mxu0
  %v2239 = vadd.f32 0.0, %v2238
  %2240 = vdwg.mxu0
  %2241 = vmatprep.subr.mxu0 %v1988
  %2242 = vmatpush1.msra.mxu0 %v1986
  %2243 = vmatprep.subr.mxu0 %v1992
  %2244 = vmatpush1.msra.mxu0 %v1990
  %2245 = vmatprep.subr.mxu0 %v1998
  %2246 = vmatpush1.msra.mxu0 %v1996
  %2247 = vmatprep.subr.mxu0 %v2002
  %2248 = vmatpush1.msra.mxu0 %v2000
  %2249 = vmatprep.subr.mxu0 %v2008
  %2250 = vmatpush1.msra.mxu0 %v2006
  %2251 = vmatprep.subr.mxu0 %v2012
  %2252 = vmatpush1.msra.mxu0 %v2010
  %2253 = vmatprep.subr.mxu0 %v2018
  %2254 = vmatpush1.msra.mxu0 %v2016
  %2255 = vmatprep.subr.mxu0 %v2022
  %2256 = vmatpush1.msra.mxu0 %v2020
  %2257 = vmatprep.subr.mxu0 0.0
  %2258 = vmatpush1.msra.mxu0 0.0
  %2259 = vmatprep.subr.mxu0 0.0
  %2260 = vmatpush1.msra.mxu0 0.0
  %2261 = vmatprep.subr.mxu0 0.0
  %2262 = vmatpush1.msra.mxu0 0.0
  %2263 = vmatprep.subr.mxu0 0.0
  %2264 = vmatpush1.msra.mxu0 0.0
  %2265 = vmatprep.subr.mxu0 0.0
  %2266 = vmatpush1.msra.mxu0 0.0
  %2267 = vmatprep.subr.mxu0 0.0
  %2268 = vmatpush1.msra.mxu0 0.0
  %2269 = vmatprep.subr.mxu0 0.0
  %2270 = vmatpush1.msra.mxu0 0.0
  %2271 = vmatprep.subr.mxu0 0.0
  %2272 = vmatpush1.msra.mxu0 0.0
  %2273 = vmatprep.subr.mxu0 0.0
  %2274 = vmatpush1.msra.mxu0 0.0
  %2275 = vmatprep.subr.mxu0 0.0
  %2276 = vmatpush1.msra.mxu0 0.0
  %2277 = vmatprep.subr.mxu0 0.0
  %2278 = vmatpush1.msra.mxu0 0.0
  %2279 = vmatprep.subr.mxu0 0.0
  %2280 = vmatpush1.msra.mxu0 0.0
  %2281 = vmatprep.subr.mxu0 0.0
  %2282 = vmatpush1.msra.mxu0 0.0
  %2283 = vmatprep.subr.mxu0 0.0
  %2284 = vmatpush1.msra.mxu0 0.0
  %2285 = vmatprep.subr.mxu0 0.0
  %2286 = vmatpush1.msra.mxu0 0.0
  %2287 = vmatprep.subr.mxu0 0.0
  %2288 = vmatpush1.msra.mxu0 0.0
  %2289 = vmatprep.subr.mxu0 0.0
  %2290 = vmatpush1.msra.mxu0 0.0
  %2291 = vmatprep.subr.mxu0 0.0
  %2292 = vmatpush1.msra.mxu0 0.0
  %2293 = vmatprep.subr.mxu0 0.0
  %2294 = vmatpush1.msra.mxu0 0.0
  %2295 = vmatprep.subr.mxu0 0.0
  %2296 = vmatpush1.msra.mxu0 0.0
  %2297 = vmatprep.subr.mxu0 0.0
  %2298 = vmatpush1.msra.mxu0 0.0
  %2299 = vmatprep.subr.mxu0 0.0
  %2300 = vmatpush1.msra.mxu0 0.0
  %2301 = vmatprep.subr.mxu0 0.0
  %2302 = vmatpush1.msra.mxu0 0.0
  %2303 = vmatprep.subr.mxu0 0.0
  %2304 = vmatpush1.msra.mxu0 0.0
  %2305 = vmatprep.mubr.f32.mxu0 0.0
  %2306 = vmatmul.mubr.f32.gmra.mrb[0].mxu0 %v2026
  %v2307 = vpop.f32.mrb[0].mxu0
  %v2308 = vadd.f32 0.0, %v2307
  %v2309 = vpop.f32.mrb[0].mxu0
  %v2310 = vadd.f32 0.0, %v2309
  %2311 = vdwg.mxu0
  %v2312 = vmul.f32 %v1767, %v1767
  %v2313 = vmul.f32 %v1769, %v1769
  %v2314 = vmul.f32 %v1840, %v1840
  %v2315 = vmul.f32 %v1842, %v1842
  %v2316 = vmul.f32 %v1913, %v1913
  %v2317 = vmul.f32 %v1915, %v1915
  %v2318 = vmul.f32 %v1986, %v1986
  %v2319 = vmul.f32 %v1988, %v1988
  %v2320 = vmul.f32 %v1771, %v1771
  %v2321 = vmul.f32 %v1773, %v1773
  %v2322 = vmul.f32 %v1844, %v1844
  %v2323 = vmul.f32 %v1846, %v1846
  %v2324 = vmul.f32 %v1917, %v1917
  %v2325 = vmul.f32 %v1919, %v1919
  %v2326 = vmul.f32 %v1990, %v1990
  %v2327 = vmul.f32 %v1992, %v1992
  %v2328 = vmul.f32 %v1777, %v1777
  %v2329 = vmul.f32 %v1779, %v1779
  %v2330 = vmul.f32 %v1850, %v1850
  %v2331 = vmul.f32 %v1852, %v1852
  %v2332 = vmul.f32 %v1923, %v1923
  %v2333 = vmul.f32 %v1925, %v1925
  %v2334 = vmul.f32 %v1996, %v1996
  %v2335 = vmul.f32 %v1998, %v1998
  %v2336 = vmul.f32 %v1781, %v1781
  %v2337 = vmul.f32 %v1783, %v1783
  %v2338 = vmul.f32 %v1854, %v1854
  %v2339 = vmul.f32 %v1856, %v1856
  %v2340 = vmul.f32 %v1927, %v1927
  %v2341 = vmul.f32 %v1929, %v1929
  %v2342 = vmul.f32 %v2000, %v2000
  %v2343 = vmul.f32 %v2002, %v2002
  %v2344 = vmul.f32 %v1787, %v1787
  %v2345 = vmul.f32 %v1789, %v1789
  %v2346 = vmul.f32 %v1860, %v1860
  %v2347 = vmul.f32 %v1862, %v1862
  %v2348 = vmul.f32 %v1933, %v1933
  %v2349 = vmul.f32 %v1935, %v1935
  %v2350 = vmul.f32 %v2006, %v2006
  %v2351 = vmul.f32 %v2008, %v2008
  %v2352 = vmul.f32 %v1791, %v1791
  %v2353 = vmul.f32 %v1793, %v1793
  %v2354 = vmul.f32 %v1864, %v1864
  %v2355 = vmul.f32 %v1866, %v1866
  %v2356 = vmul.f32 %v1937, %v1937
  %v2357 = vmul.f32 %v1939, %v1939
  %v2358 = vmul.f32 %v2010, %v2010
  %v2359 = vmul.f32 %v2012, %v2012
  %v2360 = vmul.f32 %v1797, %v1797
  %v2361 = vmul.f32 %v1799, %v1799
  %v2362 = vmul.f32 %v1870, %v1870
  %v2363 = vmul.f32 %v1872, %v1872
  %v2364 = vmul.f32 %v1943, %v1943
  %v2365 = vmul.f32 %v1945, %v1945
  %v2366 = vmul.f32 %v2016, %v2016
  %v2367 = vmul.f32 %v2018, %v2018
  %v2368 = vmul.f32 %v1801, %v1801
  %v2369 = vmul.f32 %v1803, %v1803
  %v2370 = vmul.f32 %v1874, %v1874
  %v2371 = vmul.f32 %v1876, %v1876
  %v2372 = vmul.f32 %v1947, %v1947
  %v2373 = vmul.f32 %v1949, %v1949
  %v2374 = vmul.f32 %v2020, %v2020
  %v2375 = vmul.f32 %v2022, %v2022
  %2376 = vmatprep.subr.mxu0 %v2313
  %2377 = vmatpush1.msra.mxu0 %v2312
  %2378 = vmatprep.subr.mxu0 %v2321
  %2379 = vmatpush1.msra.mxu0 %v2320
  %2380 = vmatprep.subr.mxu0 %v2329
  %2381 = vmatpush1.msra.mxu0 %v2328
  %2382 = vmatprep.subr.mxu0 %v2337
  %2383 = vmatpush1.msra.mxu0 %v2336
  %2384 = vmatprep.subr.mxu0 %v2345
  %2385 = vmatpush1.msra.mxu0 %v2344
  %2386 = vmatprep.subr.mxu0 %v2353
  %2387 = vmatpush1.msra.mxu0 %v2352
  %2388 = vmatprep.subr.mxu0 %v2361
  %2389 = vmatpush1.msra.mxu0 %v2360
  %2390 = vmatprep.subr.mxu0 %v2369
  %2391 = vmatpush1.msra.mxu0 %v2368
  %2392 = vmatprep.subr.mxu0 0.0
  %2393 = vmatpush1.msra.mxu0 0.0
  %2394 = vmatprep.subr.mxu0 0.0
  %2395 = vmatpush1.msra.mxu0 0.0
  %2396 = vmatprep.subr.mxu0 0.0
  %2397 = vmatpush1.msra.mxu0 0.0
  %2398 = vmatprep.subr.mxu0 0.0
  %2399 = vmatpush1.msra.mxu0 0.0
  %2400 = vmatprep.subr.mxu0 0.0
  %2401 = vmatpush1.msra.mxu0 0.0
  %2402 = vmatprep.subr.mxu0 0.0
  %2403 = vmatpush1.msra.mxu0 0.0
  %2404 = vmatprep.subr.mxu0 0.0
  %2405 = vmatpush1.msra.mxu0 0.0
  %2406 = vmatprep.subr.mxu0 0.0
  %2407 = vmatpush1.msra.mxu0 0.0
  %2408 = vmatprep.subr.mxu0 0.0
  %2409 = vmatpush1.msra.mxu0 0.0
  %2410 = vmatprep.subr.mxu0 0.0
  %2411 = vmatpush1.msra.mxu0 0.0
  %2412 = vmatprep.subr.mxu0 0.0
  %2413 = vmatpush1.msra.mxu0 0.0
  %2414 = vmatprep.subr.mxu0 0.0
  %2415 = vmatpush1.msra.mxu0 0.0
  %2416 = vmatprep.subr.mxu0 0.0
  %2417 = vmatpush1.msra.mxu0 0.0
  %2418 = vmatprep.subr.mxu0 0.0
  %2419 = vmatpush1.msra.mxu0 0.0
  %2420 = vmatprep.subr.mxu0 0.0
  %2421 = vmatpush1.msra.mxu0 0.0
  %2422 = vmatprep.subr.mxu0 0.0
  %2423 = vmatpush1.msra.mxu0 0.0
  %2424 = vmatprep.subr.mxu0 0.0
  %2425 = vmatpush1.msra.mxu0 0.0
  %2426 = vmatprep.subr.mxu0 0.0
  %2427 = vmatpush1.msra.mxu0 0.0
  %2428 = vmatprep.subr.mxu0 0.0
  %2429 = vmatpush1.msra.mxu0 0.0
  %2430 = vmatprep.subr.mxu0 0.0
  %2431 = vmatpush1.msra.mxu0 0.0
  %2432 = vmatprep.subr.mxu0 0.0
  %2433 = vmatpush1.msra.mxu0 0.0
  %2434 = vmatprep.subr.mxu0 0.0
  %2435 = vmatpush1.msra.mxu0 0.0
  %2436 = vmatprep.subr.mxu0 0.0
  %2437 = vmatpush1.msra.mxu0 0.0
  %2438 = vmatprep.subr.mxu0 0.0
  %2439 = vmatpush1.msra.mxu0 0.0
  %2440 = vmatprep.mubr.f32.mxu0 0.0
  %2441 = vmatmul.mubr.f32.gmra.mrb[0].mxu0 %v2026
  %v2442 = vpop.f32.mrb[0].mxu0
  %v2443 = vadd.f32 0.0, %v2442
  %v2444 = vpop.f32.mrb[0].mxu0
  %v2445 = vadd.f32 0.0, %v2444
  %2446 = vdwg.mxu0
  %2447 = vmatprep.subr.mxu0 %v2315
  %2448 = vmatpush1.msra.mxu0 %v2314
  %2449 = vmatprep.subr.mxu0 %v2323
  %2450 = vmatpush1.msra.mxu0 %v2322
  %2451 = vmatprep.subr.mxu0 %v2331
  %2452 = vmatpush1.msra.mxu0 %v2330
  %2453 = vmatprep.subr.mxu0 %v2339
  %2454 = vmatpush1.msra.mxu0 %v2338
  %2455 = vmatprep.subr.mxu0 %v2347
  %2456 = vmatpush1.msra.mxu0 %v2346
  %2457 = vmatprep.subr.mxu0 %v2355
  %2458 = vmatpush1.msra.mxu0 %v2354
  %2459 = vmatprep.subr.mxu0 %v2363
  %2460 = vmatpush1.msra.mxu0 %v2362
  %2461 = vmatprep.subr.mxu0 %v2371
  %2462 = vmatpush1.msra.mxu0 %v2370
  %2463 = vmatprep.subr.mxu0 0.0
  %2464 = vmatpush1.msra.mxu0 0.0
  %2465 = vmatprep.subr.mxu0 0.0
  %2466 = vmatpush1.msra.mxu0 0.0
  %2467 = vmatprep.subr.mxu0 0.0
  %2468 = vmatpush1.msra.mxu0 0.0
  %2469 = vmatprep.subr.mxu0 0.0
  %2470 = vmatpush1.msra.mxu0 0.0
  %2471 = vmatprep.subr.mxu0 0.0
  %2472 = vmatpush1.msra.mxu0 0.0
  %2473 = vmatprep.subr.mxu0 0.0
  %2474 = vmatpush1.msra.mxu0 0.0
  %2475 = vmatprep.subr.mxu0 0.0
  %2476 = vmatpush1.msra.mxu0 0.0
  %2477 = vmatprep.subr.mxu0 0.0
  %2478 = vmatpush1.msra.mxu0 0.0
  %2479 = vmatprep.subr.mxu0 0.0
  %2480 = vmatpush1.msra.mxu0 0.0
  %2481 = vmatprep.subr.mxu0 0.0
  %2482 = vmatpush1.msra.mxu0 0.0
  %2483 = vmatprep.subr.mxu0 0.0
  %2484 = vmatpush1.msra.mxu0 0.0
  %2485 = vmatprep.subr.mxu0 0.0
  %2486 = vmatpush1.msra.mxu0 0.0
  %2487 = vmatprep.subr.mxu0 0.0
  %2488 = vmatpush1.msra.mxu0 0.0
  %2489 = vmatprep.subr.mxu0 0.0
  %2490 = vmatpush1.msra.mxu0 0.0
  %2491 = vmatprep.subr.mxu0 0.0
  %2492 = vmatpush1.msra.mxu0 0.0
  %2493 = vmatprep.subr.mxu0 0.0
  %2494 = vmatpush1.msra.mxu0 0.0
  %2495 = vmatprep.subr.mxu0 0.0
  %2496 = vmatpush1.msra.mxu0 0.0
  %2497 = vmatprep.subr.mxu0 0.0
  %2498 = vmatpush1.msra.mxu0 0.0
  %2499 = vmatprep.subr.mxu0 0.0
  %2500 = vmatpush1.msra.mxu0 0.0
  %2501 = vmatprep.subr.mxu0 0.0
  %2502 = vmatpush1.msra.mxu0 0.0
  %2503 = vmatprep.subr.mxu0 0.0
  %2504 = vmatpush1.msra.mxu0 0.0
  %2505 = vmatprep.subr.mxu0 0.0
  %2506 = vmatpush1.msra.mxu0 0.0
  %2507 = vmatprep.subr.mxu0 0.0
  %2508 = vmatpush1.msra.mxu0 0.0
  %2509 = vmatprep.subr.mxu0 0.0
  %2510 = vmatpush1.msra.mxu0 0.0
  %2511 = vmatprep.mubr.f32.mxu0 0.0
  %2512 = vmatmul.mubr.f32.gmra.mrb[0].mxu0 %v2026
  %v2513 = vpop.f32.mrb[0].mxu0
  %v2514 = vadd.f32 0.0, %v2513
  %v2515 = vpop.f32.mrb[0].mxu0
  %v2516 = vadd.f32 0.0, %v2515
  %2517 = vdwg.mxu0
  %2518 = vmatprep.subr.mxu0 %v2317
  %2519 = vmatpush1.msra.mxu0 %v2316
  %2520 = vmatprep.subr.mxu0 %v2325
  %2521 = vmatpush1.msra.mxu0 %v2324
  %2522 = vmatprep.subr.mxu0 %v2333
  %2523 = vmatpush1.msra.mxu0 %v2332
  %2524 = vmatprep.subr.mxu0 %v2341
  %2525 = vmatpush1.msra.mxu0 %v2340
  %2526 = vmatprep.subr.mxu0 %v2349
  %2527 = vmatpush1.msra.mxu0 %v2348
  %2528 = vmatprep.subr.mxu0 %v2357
  %2529 = vmatpush1.msra.mxu0 %v2356
  %2530 = vmatprep.subr.mxu0 %v2365
  %2531 = vmatpush1.msra.mxu0 %v2364
  %2532 = vmatprep.subr.mxu0 %v2373
  %2533 = vmatpush1.msra.mxu0 %v2372
  %2534 = vmatprep.subr.mxu0 0.0
  %2535 = vmatpush1.msra.mxu0 0.0
  %2536 = vmatprep.subr.mxu0 0.0
  %2537 = vmatpush1.msra.mxu0 0.0
  %2538 = vmatprep.subr.mxu0 0.0
  %2539 = vmatpush1.msra.mxu0 0.0
  %2540 = vmatprep.subr.mxu0 0.0
  %2541 = vmatpush1.msra.mxu0 0.0
  %2542 = vmatprep.subr.mxu0 0.0
  %2543 = vmatpush1.msra.mxu0 0.0
  %2544 = vmatprep.subr.mxu0 0.0
  %2545 = vmatpush1.msra.mxu0 0.0
  %2546 = vmatprep.subr.mxu0 0.0
  %2547 = vmatpush1.msra.mxu0 0.0
  %2548 = vmatprep.subr.mxu0 0.0
  %2549 = vmatpush1.msra.mxu0 0.0
  %2550 = vmatprep.subr.mxu0 0.0
  %2551 = vmatpush1.msra.mxu0 0.0
  %2552 = vmatprep.subr.mxu0 0.0
  %2553 = vmatpush1.msra.mxu0 0.0
  %2554 = vmatprep.subr.mxu0 0.0
  %2555 = vmatpush1.msra.mxu0 0.0
  %2556 = vmatprep.subr.mxu0 0.0
  %2557 = vmatpush1.msra.mxu0 0.0
  %2558 = vmatprep.subr.mxu0 0.0
  %2559 = vmatpush1.msra.mxu0 0.0
  %2560 = vmatprep.subr.mxu0 0.0
  %2561 = vmatpush1.msra.mxu0 0.0
  %2562 = vmatprep.subr.mxu0 0.0
  %2563 = vmatpush1.msra.mxu0 0.0
  %2564 = vmatprep.subr.mxu0 0.0
  %2565 = vmatpush1.msra.mxu0 0.0
  %2566 = vmatprep.subr.mxu0 0.0
  %2567 = vmatpush1.msra.mxu0 0.0
  %2568 = vmatprep.subr.mxu0 0.0
  %2569 = vmatpush1.msra.mxu0 0.0
  %2570 = vmatprep.subr.mxu0 0.0
  %2571 = vmatpush1.msra.mxu0 0.0
  %2572 = vmatprep.subr.mxu0 0.0
  %2573 = vmatpush1.msra.mxu0 0.0
  %2574 = vmatprep.subr.mxu0 0.0
  %2575 = vmatpush1.msra.mxu0 0.0
  %2576 = vmatprep.subr.mxu0 0.0
  %2577 = vmatpush1.msra.mxu0 0.0
  %2578 = vmatprep.subr.mxu0 0.0
  %2579 = vmatpush1.msra.mxu0 0.0
  %2580 = vmatprep.subr.mxu0 0.0
  %2581 = vmatpush1.msra.mxu0 0.0
  %2582 = vmatprep.mubr.f32.mxu0 0.0
  %2583 = vmatmul.mubr.f32.gmra.mrb[0].mxu0 %v2026
  %v2584 = vpop.f32.mrb[0].mxu0
  %v2585 = vadd.f32 0.0, %v2584
  %v2586 = vpop.f32.mrb[0].mxu0
  %v2587 = vadd.f32 0.0, %v2586
  %2588 = vdwg.mxu0
  %2589 = vmatprep.subr.mxu0 %v2319
  %2590 = vmatpush1.msra.mxu0 %v2318
  %2591 = vmatprep.subr.mxu0 %v2327
  %2592 = vmatpush1.msra.mxu0 %v2326
  %2593 = vmatprep.subr.mxu0 %v2335
  %2594 = vmatpush1.msra.mxu0 %v2334
  %2595 = vmatprep.subr.mxu0 %v2343
  %2596 = vmatpush1.msra.mxu0 %v2342
  %2597 = vmatprep.subr.mxu0 %v2351
  %2598 = vmatpush1.msra.mxu0 %v2350
  %2599 = vmatprep.subr.mxu0 %v2359
  %2600 = vmatpush1.msra.mxu0 %v2358
  %2601 = vmatprep.subr.mxu0 %v2367
  %2602 = vmatpush1.msra.mxu0 %v2366
  %2603 = vmatprep.subr.mxu0 %v2375
  %2604 = vmatpush1.msra.mxu0 %v2374
  %2605 = vmatprep.subr.mxu0 0.0
  %2606 = vmatpush1.msra.mxu0 0.0
  %2607 = vmatprep.subr.mxu0 0.0
  %2608 = vmatpush1.msra.mxu0 0.0
  %2609 = vmatprep.subr.mxu0 0.0
  %2610 = vmatpush1.msra.mxu0 0.0
  %2611 = vmatprep.subr.mxu0 0.0
  %2612 = vmatpush1.msra.mxu0 0.0
  %2613 = vmatprep.subr.mxu0 0.0
  %2614 = vmatpush1.msra.mxu0 0.0
  %2615 = vmatprep.subr.mxu0 0.0
  %2616 = vmatpush1.msra.mxu0 0.0
  %2617 = vmatprep.subr.mxu0 0.0
  %2618 = vmatpush1.msra.mxu0 0.0
  %2619 = vmatprep.subr.mxu0 0.0
  %2620 = vmatpush1.msra.mxu0 0.0
  %2621 = vmatprep.subr.mxu0 0.0
  %2622 = vmatpush1.msra.mxu0 0.0
  %2623 = vmatprep.subr.mxu0 0.0
  %2624 = vmatpush1.msra.mxu0 0.0
  %2625 = vmatprep.subr.mxu0 0.0
  %2626 = vmatpush1.msra.mxu0 0.0
  %2627 = vmatprep.subr.mxu0 0.0
  %2628 = vmatpush1.msra.mxu0 0.0
  %2629 = vmatprep.subr.mxu0 0.0
  %2630 = vmatpush1.msra.mxu0 0.0
  %2631 = vmatprep.subr.mxu0 0.0
  %2632 = vmatpush1.msra.mxu0 0.0
  %2633 = vmatprep.subr.mxu0 0.0
  %2634 = vmatpush1.msra.mxu0 0.0
  %2635 = vmatprep.subr.mxu0 0.0
  %2636 = vmatpush1.msra.mxu0 0.0
  %2637 = vmatprep.subr.mxu0 0.0
  %2638 = vmatpush1.msra.mxu0 0.0
  %2639 = vmatprep.subr.mxu0 0.0
  %2640 = vmatpush1.msra.mxu0 0.0
  %2641 = vmatprep.subr.mxu0 0.0
  %2642 = vmatpush1.msra.mxu0 0.0
  %2643 = vmatprep.subr.mxu0 0.0
  %2644 = vmatpush1.msra.mxu0 0.0
  %2645 = vmatprep.subr.mxu0 0.0
  %2646 = vmatpush1.msra.mxu0 0.0
  %2647 = vmatprep.subr.mxu0 0.0
  %2648 = vmatpush1.msra.mxu0 0.0
  %2649 = vmatprep.subr.mxu0 0.0
  %2650 = vmatpush1.msra.mxu0 0.0
  %2651 = vmatprep.subr.mxu0 0.0
  %2652 = vmatpush1.msra.mxu0 0.0
  %2653 = vmatprep.mubr.f32.mxu0 0.0
  %2654 = vmatmul.mubr.f32.gmra.mrb[0].mxu0 %v2026
  %v2655 = vpop.f32.mrb[0].mxu0
  %v2656 = vadd.f32 0.0, %v2655
  %v2657 = vpop.f32.mrb[0].mxu0
  %v2658 = vadd.f32 0.0, %v2657
  %2659 = vdwg.mxu0
  %v2660 = vadd.f32 %v2095, %v2097
  %v2661 = vadd.f32 %v2660, %v2166
  %v2662 = vadd.f32 %v2661, %v2168
  %v2663 = vadd.f32 %v2662, %v2237
  %v2664 = vadd.f32 %v2663, %v2239
  %v2665 = vadd.f32 %v2664, %v2308
  %v2666 = vadd.f32 %v2665, %v2310
  %2667 = vadd.xlane.f32.xlu0 %v2666
  %v2668 = vpop.xlane.xlu0 %2667
  %v2669 = vmul.f32 %v2668, 0.00012207031
  %v2670 = vadd.f32 %v2443, %v2445
  %v2671 = vadd.f32 %v2670, %v2514
  %v2672 = vadd.f32 %v2671, %v2516
  %v2673 = vadd.f32 %v2672, %v2585
  %v2674 = vadd.f32 %v2673, %v2587
  %v2675 = vadd.f32 %v2674, %v2656
  %v2676 = vadd.f32 %v2675, %v2658
  %2677 = vadd.xlane.f32.xlu0 %v2676
  %v2678 = vpop.xlane.xlu0 %2677
  %v2679 = vmul.f32 %v2678, 0.00012207031
  %v2680 = vmul.f32 %v2669, %v2669
  %v2681 = vsub.f32 %v2679, %v2680
  %v2682 = vmax.f32 %v2681, 0.0
  %v2683 = vadd.f32 %v2682, 1e-05
  %v2684 = vrsqrt.pop %v2683
  %v2685 = vld [vmem:[%s9] sm:$0xff]
  %v2686 = vmul.f32 %v2685, %v2684
  %v2687 = vld [vmem:[%s10] sm:$0xff]
  %v2688 = vmul.f32 %v2669, %v2686
  %v2689 = vsub.f32 %v2687, %v2688
  %v2690 = vld [vmem:[%s8] sm:$0xff]
  %v2691 = vld [vmem:[%s8 + $0x8] sm:$0xff]
  %v2692 = vld [vmem:[%s8 + $0x10] sm:$0xff]
  %v2693 = vld [vmem:[%s8 + $0x18] sm:$0xff]
  %v2694 = vld [vmem:[%s8 + $0x20] sm:$0xff]
  %v2695 = vld [vmem:[%s8 + $0x28] sm:$0xff]
  %v2696 = vld [vmem:[%s8 + $0x30] sm:$0xff]
  %v2697 = vld [vmem:[%s8 + $0x38] sm:$0xff]
  %2699 = vset.pattern.permute.xlu0 0
  %2700 = vperm.xlu0 %2699, %v2686
  %v2701 = vpop.permute.xlu0 %2700
  %v2704 = vsel %vm1148, %v2690, 0
  %v2707 = vsel %vm1148, %v2691, 0
  %v2710 = vsel %vm1148, %v2692, 0
  %v2713 = vsel %vm1148, %v2693, 0
  %v2716 = vsel %vm1148, %v2694, 0
  %v2719 = vsel %vm1148, %v2695, 0
  %v2722 = vsel %vm1148, %v2696, 0
  %v2725 = vsel %vm1148, %v2697, 0
  %2727 = vmatprep.subr.mxu0 0.0
  %2728 = vmatpush1.msra.mxu0 %v2701
  %2729 = vmatprep.subr.mxu0 0.0
  %2730 = vmatpush1.msra.mxu0 0.0
  %2731 = vmatprep.subr.mxu0 0.0
  %2732 = vmatpush1.msra.mxu0 0.0
  %2733 = vmatprep.subr.mxu0 0.0
  %2734 = vmatpush1.msra.mxu0 0.0
  %2735 = vmatprep.subr.mxu0 0.0
  %2736 = vmatpush1.msra.mxu0 0.0
  %2737 = vmatprep.subr.mxu0 0.0
  %2738 = vmatpush1.msra.mxu0 0.0
  %2739 = vmatprep.subr.mxu0 0.0
  %2740 = vmatpush1.msra.mxu0 0.0
  %2741 = vmatprep.subr.mxu0 0.0
  %2742 = vmatpush1.msra.mxu0 0.0
  %2743 = vmatprep.subr.mxu0 0.0
  %2744 = vmatpush1.msra.mxu0 0.0
  %2745 = vmatprep.subr.mxu0 0.0
  %2746 = vmatpush1.msra.mxu0 0.0
  %2747 = vmatprep.subr.mxu0 0.0
  %2748 = vmatpush1.msra.mxu0 0.0
  %2749 = vmatprep.subr.mxu0 0.0
  %2750 = vmatpush1.msra.mxu0 0.0
  %2751 = vmatprep.subr.mxu0 0.0
  %2752 = vmatpush1.msra.mxu0 0.0
  %2753 = vmatprep.subr.mxu0 0.0
  %2754 = vmatpush1.msra.mxu0 0.0
  %2755 = vmatprep.subr.mxu0 0.0
  %2756 = vmatpush1.msra.mxu0 0.0
  %2757 = vmatprep.subr.mxu0 0.0
  %2758 = vmatpush1.msra.mxu0 0.0
  %2759 = vmatprep.subr.mxu0 0.0
  %2760 = vmatpush1.msra.mxu0 0.0
  %2761 = vmatprep.subr.mxu0 0.0
  %2762 = vmatpush1.msra.mxu0 0.0
  %2763 = vmatprep.subr.mxu0 0.0
  %2764 = vmatpush1.msra.mxu0 0.0
  %2765 = vmatprep.subr.mxu0 0.0
  %2766 = vmatpush1.msra.mxu0 0.0
  %2767 = vmatprep.subr.mxu0 0.0
  %2768 = vmatpush1.msra.mxu0 0.0
  %2769 = vmatprep.subr.mxu0 0.0
  %2770 = vmatpush1.msra.mxu0 0.0
  %2771 = vmatprep.subr.mxu0 0.0
  %2772 = vmatpush1.msra.mxu0 0.0
  %2773 = vmatprep.subr.mxu0 0.0
  %2774 = vmatpush1.msra.mxu0 0.0
  %2775 = vmatprep.subr.mxu0 0.0
  %2776 = vmatpush1.msra.mxu0 0.0
  %2777 = vmatprep.subr.mxu0 0.0
  %2778 = vmatpush1.msra.mxu0 0.0
  %2779 = vmatprep.subr.mxu0 0.0
  %2780 = vmatpush1.msra.mxu0 0.0
  %2781 = vmatprep.subr.mxu0 0.0
  %2782 = vmatpush1.msra.mxu0 0.0
  %2783 = vmatprep.subr.mxu0 0.0
  %2784 = vmatpush1.msra.mxu0 0.0
  %2785 = vmatprep.subr.mxu0 0.0
  %2786 = vmatpush1.msra.mxu0 0.0
  %2787 = vmatprep.subr.mxu0 0.0
  %2788 = vmatpush1.msra.mxu0 0.0
  %2789 = vmatprep.subr.mxu0 0.0
  %2790 = vmatpush1.msra.mxu0 0.0
  %2791 = vmatprep.mubr.f32.mxu0 0.0
  %2792 = vmatmul.mubr.f32.gmra.mrb[0].mxu0 %v2704
  %v2793 = vpop.f32.mrb[0].mxu0
  %v2794 = vadd.f32 0.0, %v2793
  %v2795 = vpop.f32.mrb[0].mxu0
  %2796 = vmatprep.mubr.f32.mxu0 0.0
  %2797 = vmatmul.mubr.f32.gmra.mrb[0].mxu0 %v2707
  %v2798 = vpop.f32.mrb[0].mxu0
  %v2799 = vadd.f32 0.0, %v2798
  %v2800 = vpop.f32.mrb[0].mxu0
  %2801 = vmatprep.mubr.f32.mxu0 0.0
  %2802 = vmatmul.mubr.f32.gmra.mrb[0].mxu0 %v2710
  %v2803 = vpop.f32.mrb[0].mxu0
  %v2804 = vadd.f32 0.0, %v2803
  %v2805 = vpop.f32.mrb[0].mxu0
  %2806 = vmatprep.mubr.f32.mxu0 0.0
  %2807 = vmatmul.mubr.f32.gmra.mrb[0].mxu0 %v2713
  %v2808 = vpop.f32.mrb[0].mxu0
  %v2809 = vadd.f32 0.0, %v2808
  %v2810 = vpop.f32.mrb[0].mxu0
  %2811 = vmatprep.mubr.f32.mxu0 0.0
  %2812 = vmatmul.mubr.f32.gmra.mrb[0].mxu0 %v2716
  %v2813 = vpop.f32.mrb[0].mxu0
  %v2814 = vadd.f32 0.0, %v2813
  %v2815 = vpop.f32.mrb[0].mxu0
  %2816 = vmatprep.mubr.f32.mxu0 0.0
  %2817 = vmatmul.mubr.f32.gmra.mrb[0].mxu0 %v2719
  %v2818 = vpop.f32.mrb[0].mxu0
  %v2819 = vadd.f32 0.0, %v2818
  %v2820 = vpop.f32.mrb[0].mxu0
  %2821 = vmatprep.mubr.f32.mxu0 0.0
  %2822 = vmatmul.mubr.f32.gmra.mrb[0].mxu0 %v2722
  %v2823 = vpop.f32.mrb[0].mxu0
  %v2824 = vadd.f32 0.0, %v2823
  %v2825 = vpop.f32.mrb[0].mxu0
  %2826 = vmatprep.mubr.f32.mxu0 0.0
  %2827 = vmatmul.mubr.f32.gmra.mrb[0].mxu0 %v2725
  %v2828 = vpop.f32.mrb[0].mxu0
  %v2829 = vadd.f32 0.0, %v2828
  %v2830 = vpop.f32.mrb[0].mxu0
  %2831 = vdwg.mxu0
  %2833 = vset.pattern.permute.xlu0 0
  %2834 = vperm.xlu0 %2833, %v2689
  %v2835 = vpop.permute.xlu0 %2834
  %2837 = vmatprep.subr.mxu0 0.0
  %2838 = vmatpush1.msra.mxu0 %v2835
  %2839 = vmatprep.subr.mxu0 0.0
  %2840 = vmatpush1.msra.mxu0 0.0
  %2841 = vmatprep.subr.mxu0 0.0
  %2842 = vmatpush1.msra.mxu0 0.0
  %2843 = vmatprep.subr.mxu0 0.0
  %2844 = vmatpush1.msra.mxu0 0.0
  %2845 = vmatprep.subr.mxu0 0.0
  %2846 = vmatpush1.msra.mxu0 0.0
  %2847 = vmatprep.subr.mxu0 0.0
  %2848 = vmatpush1.msra.mxu0 0.0
  %2849 = vmatprep.subr.mxu0 0.0
  %2850 = vmatpush1.msra.mxu0 0.0
  %2851 = vmatprep.subr.mxu0 0.0
  %2852 = vmatpush1.msra.mxu0 0.0
  %2853 = vmatprep.subr.mxu0 0.0
  %2854 = vmatpush1.msra.mxu0 0.0
  %2855 = vmatprep.subr.mxu0 0.0
  %2856 = vmatpush1.msra.mxu0 0.0
  %2857 = vmatprep.subr.mxu0 0.0
  %2858 = vmatpush1.msra.mxu0 0.0
  %2859 = vmatprep.subr.mxu0 0.0
  %2860 = vmatpush1.msra.mxu0 0.0
  %2861 = vmatprep.subr.mxu0 0.0
  %2862 = vmatpush1.msra.mxu0 0.0
  %2863 = vmatprep.subr.mxu0 0.0
  %2864 = vmatpush1.msra.mxu0 0.0
  %2865 = vmatprep.subr.mxu0 0.0
  %2866 = vmatpush1.msra.mxu0 0.0
  %2867 = vmatprep.subr.mxu0 0.0
  %2868 = vmatpush1.msra.mxu0 0.0
  %2869 = vmatprep.subr.mxu0 0.0
  %2870 = vmatpush1.msra.mxu0 0.0
  %2871 = vmatprep.subr.mxu0 0.0
  %2872 = vmatpush1.msra.mxu0 0.0
  %2873 = vmatprep.subr.mxu0 0.0
  %2874 = vmatpush1.msra.mxu0 0.0
  %2875 = vmatprep.subr.mxu0 0.0
  %2876 = vmatpush1.msra.mxu0 0.0
  %2877 = vmatprep.subr.mxu0 0.0
  %2878 = vmatpush1.msra.mxu0 0.0
  %2879 = vmatprep.subr.mxu0 0.0
  %2880 = vmatpush1.msra.mxu0 0.0
  %2881 = vmatprep.subr.mxu0 0.0
  %2882 = vmatpush1.msra.mxu0 0.0
  %2883 = vmatprep.subr.mxu0 0.0
  %2884 = vmatpush1.msra.mxu0 0.0
  %2885 = vmatprep.subr.mxu0 0.0
  %2886 = vmatpush1.msra.mxu0 0.0
  %2887 = vmatprep.subr.mxu0 0.0
  %2888 = vmatpush1.msra.mxu0 0.0
  %2889 = vmatprep.subr.mxu0 0.0
  %2890 = vmatpush1.msra.mxu0 0.0
  %2891 = vmatprep.subr.mxu0 0.0
  %2892 = vmatpush1.msra.mxu0 0.0
  %2893 = vmatprep.subr.mxu0 0.0
  %2894 = vmatpush1.msra.mxu0 0.0
  %2895 = vmatprep.subr.mxu0 0.0
  %2896 = vmatpush1.msra.mxu0 0.0
  %2897 = vmatprep.subr.mxu0 0.0
  %2898 = vmatpush1.msra.mxu0 0.0
  %2899 = vmatprep.subr.mxu0 0.0
  %2900 = vmatpush1.msra.mxu0 0.0
  %2901 = vmatprep.mubr.f32.mxu0 0.0
  %2902 = vmatmul.mubr.f32.gmra.mrb[0].mxu0 %v2704
  %v2903 = vpop.f32.mrb[0].mxu0
  %v2904 = vadd.f32 0.0, %v2903
  %v2905 = vpop.f32.mrb[0].mxu0
  %2906 = vmatprep.mubr.f32.mxu0 0.0
  %2907 = vmatmul.mubr.f32.gmra.mrb[0].mxu0 %v2707
  %v2908 = vpop.f32.mrb[0].mxu0
  %v2909 = vadd.f32 0.0, %v2908
  %v2910 = vpop.f32.mrb[0].mxu0
  %2911 = vmatprep.mubr.f32.mxu0 0.0
  %2912 = vmatmul.mubr.f32.gmra.mrb[0].mxu0 %v2710
  %v2913 = vpop.f32.mrb[0].mxu0
  %v2914 = vadd.f32 0.0, %v2913
  %v2915 = vpop.f32.mrb[0].mxu0
  %2916 = vmatprep.mubr.f32.mxu0 0.0
  %2917 = vmatmul.mubr.f32.gmra.mrb[0].mxu0 %v2713
  %v2918 = vpop.f32.mrb[0].mxu0
  %v2919 = vadd.f32 0.0, %v2918
  %v2920 = vpop.f32.mrb[0].mxu0
  %2921 = vmatprep.mubr.f32.mxu0 0.0
  %2922 = vmatmul.mubr.f32.gmra.mrb[0].mxu0 %v2716
  %v2923 = vpop.f32.mrb[0].mxu0
  %v2924 = vadd.f32 0.0, %v2923
  %v2925 = vpop.f32.mrb[0].mxu0
  %2926 = vmatprep.mubr.f32.mxu0 0.0
  %2927 = vmatmul.mubr.f32.gmra.mrb[0].mxu0 %v2719
  %v2928 = vpop.f32.mrb[0].mxu0
  %v2929 = vadd.f32 0.0, %v2928
  %v2930 = vpop.f32.mrb[0].mxu0
  %2931 = vmatprep.mubr.f32.mxu0 0.0
  %2932 = vmatmul.mubr.f32.gmra.mrb[0].mxu0 %v2722
  %v2933 = vpop.f32.mrb[0].mxu0
  %v2934 = vadd.f32 0.0, %v2933
  %v2935 = vpop.f32.mrb[0].mxu0
  %2936 = vmatprep.mubr.f32.mxu0 0.0
  %2937 = vmatmul.mubr.f32.gmra.mrb[0].mxu0 %v2725
  %v2938 = vpop.f32.mrb[0].mxu0
  %v2939 = vadd.f32 0.0, %v2938
  %v2940 = vpop.f32.mrb[0].mxu0
  %2941 = vdwg.mxu0
  %2943 = vset.pattern.permute.xlu0 0
  %2944 = vperm.xlu0 %2943, %v2794
  %v2945 = vpop.permute.xlu0 %2944
  %2948 = vset.pattern.permute.xlu0 0
  %2949 = vperm.xlu0 %2948, %v2799
  %v2950 = vpop.permute.xlu0 %2949
  %2953 = vset.pattern.permute.xlu0 0
  %2954 = vperm.xlu0 %2953, %v2804
  %v2955 = vpop.permute.xlu0 %2954
  %2958 = vset.pattern.permute.xlu0 0
  %2959 = vperm.xlu0 %2958, %v2809
  %v2960 = vpop.permute.xlu0 %2959
  %2963 = vset.pattern.permute.xlu0 0
  %2964 = vperm.xlu0 %2963, %v2814
  %v2965 = vpop.permute.xlu0 %2964
  %2968 = vset.pattern.permute.xlu0 0
  %2969 = vperm.xlu0 %2968, %v2819
  %v2970 = vpop.permute.xlu0 %2969
  %2973 = vset.pattern.permute.xlu0 0
  %2974 = vperm.xlu0 %2973, %v2824
  %v2975 = vpop.permute.xlu0 %2974
  %2978 = vset.pattern.permute.xlu0 0
  %2979 = vperm.xlu0 %2978, %v2829
  %v2980 = vpop.permute.xlu0 %2979
  %v2982 = vmul.f32 %v1767, %v2945
  %v2983 = vmul.f32 %v1769, %v2945
  %v2984 = vmul.f32 %v1840, %v2945
  %v2985 = vmul.f32 %v1842, %v2945
  %v2986 = vmul.f32 %v1913, %v2945
  %v2987 = vmul.f32 %v1915, %v2945
  %v2988 = vmul.f32 %v1986, %v2945
  %v2989 = vmul.f32 %v1988, %v2945
  %v2990 = vmul.f32 %v1771, %v2950
  %v2991 = vmul.f32 %v1773, %v2950
  %v2992 = vmul.f32 %v1844, %v2950
  %v2993 = vmul.f32 %v1846, %v2950
  %v2994 = vmul.f32 %v1917, %v2950
  %v2995 = vmul.f32 %v1919, %v2950
  %v2996 = vmul.f32 %v1990, %v2950
  %v2997 = vmul.f32 %v1992, %v2950
  %v2998 = vmul.f32 %v1777, %v2955
  %v2999 = vmul.f32 %v1779, %v2955
  %v3000 = vmul.f32 %v1850, %v2955
  %v3001 = vmul.f32 %v1852, %v2955
  %v3002 = vmul.f32 %v1923, %v2955
  %v3003 = vmul.f32 %v1925, %v2955
  %v3004 = vmul.f32 %v1996, %v2955
  %v3005 = vmul.f32 %v1998, %v2955
  %v3006 = vmul.f32 %v1781, %v2960
  %v3007 = vmul.f32 %v1783, %v2960
  %v3008 = vmul.f32 %v1854, %v2960
  %v3009 = vmul.f32 %v1856, %v2960
  %v3010 = vmul.f32 %v1927, %v2960
  %v3011 = vmul.f32 %v1929, %v2960
  %v3012 = vmul.f32 %v2000, %v2960
  %v3013 = vmul.f32 %v2002, %v2960
  %v3014 = vmul.f32 %v1787, %v2965
  %v3015 = vmul.f32 %v1789, %v2965
  %v3016 = vmul.f32 %v1860, %v2965
  %v3017 = vmul.f32 %v1862, %v2965
  %v3018 = vmul.f32 %v1933, %v2965
  %v3019 = vmul.f32 %v1935, %v2965
  %v3020 = vmul.f32 %v2006, %v2965
  %v3021 = vmul.f32 %v2008, %v2965
  %v3022 = vmul.f32 %v1791, %v2970
  %v3023 = vmul.f32 %v1793, %v2970
  %v3024 = vmul.f32 %v1864, %v2970
  %v3025 = vmul.f32 %v1866, %v2970
  %v3026 = vmul.f32 %v1937, %v2970
  %v3027 = vmul.f32 %v1939, %v2970
  %v3028 = vmul.f32 %v2010, %v2970
  %v3029 = vmul.f32 %v2012, %v2970
  %v3030 = vmul.f32 %v1797, %v2975
  %v3031 = vmul.f32 %v1799, %v2975
  %v3032 = vmul.f32 %v1870, %v2975
  %v3033 = vmul.f32 %v1872, %v2975
  %v3034 = vmul.f32 %v1943, %v2975
  %v3035 = vmul.f32 %v1945, %v2975
  %v3036 = vmul.f32 %v2016, %v2975
  %v3037 = vmul.f32 %v2018, %v2975
  %v3038 = vmul.f32 %v1801, %v2980
  %v3039 = vmul.f32 %v1803, %v2980
  %v3040 = vmul.f32 %v1874, %v2980
  %v3041 = vmul.f32 %v1876, %v2980
  %v3042 = vmul.f32 %v1947, %v2980
  %v3043 = vmul.f32 %v1949, %v2980
  %v3044 = vmul.f32 %v2020, %v2980
  %v3045 = vmul.f32 %v2022, %v2980
  %3047 = vset.pattern.permute.xlu0 0
  %3048 = vperm.xlu0 %3047, %v2904
  %v3049 = vpop.permute.xlu0 %3048
  %3052 = vset.pattern.permute.xlu0 0
  %3053 = vperm.xlu0 %3052, %v2909
  %v3054 = vpop.permute.xlu0 %3053
  %3057 = vset.pattern.permute.xlu0 0
  %3058 = vperm.xlu0 %3057, %v2914
  %v3059 = vpop.permute.xlu0 %3058
  %3062 = vset.pattern.permute.xlu0 0
  %3063 = vperm.xlu0 %3062, %v2919
  %v3064 = vpop.permute.xlu0 %3063
  %3067 = vset.pattern.permute.xlu0 0
  %3068 = vperm.xlu0 %3067, %v2924
  %v3069 = vpop.permute.xlu0 %3068
  %3072 = vset.pattern.permute.xlu0 0
  %3073 = vperm.xlu0 %3072, %v2929
  %v3074 = vpop.permute.xlu0 %3073
  %3077 = vset.pattern.permute.xlu0 0
  %3078 = vperm.xlu0 %3077, %v2934
  %v3079 = vpop.permute.xlu0 %3078
  %3082 = vset.pattern.permute.xlu0 0
  %3083 = vperm.xlu0 %3082, %v2939
  %v3084 = vpop.permute.xlu0 %3083
  %v3086 = vadd.f32 %v2982, %v3049
  %v3087 = vadd.f32 %v2983, %v3049
  %v3088 = vadd.f32 %v2984, %v3049
  %v3089 = vadd.f32 %v2985, %v3049
  %v3090 = vadd.f32 %v2986, %v3049
  %v3091 = vadd.f32 %v2987, %v3049
  %v3092 = vadd.f32 %v2988, %v3049
  %v3093 = vadd.f32 %v2989, %v3049
  %v3094 = vadd.f32 %v2990, %v3054
  %v3095 = vadd.f32 %v2991, %v3054
  %v3096 = vadd.f32 %v2992, %v3054
  %v3097 = vadd.f32 %v2993, %v3054
  %v3098 = vadd.f32 %v2994, %v3054
  %v3099 = vadd.f32 %v2995, %v3054
  %v3100 = vadd.f32 %v2996, %v3054
  %v3101 = vadd.f32 %v2997, %v3054
  %v3102 = vadd.f32 %v2998, %v3059
  %v3103 = vadd.f32 %v2999, %v3059
  %v3104 = vadd.f32 %v3000, %v3059
  %v3105 = vadd.f32 %v3001, %v3059
  %v3106 = vadd.f32 %v3002, %v3059
  %v3107 = vadd.f32 %v3003, %v3059
  %v3108 = vadd.f32 %v3004, %v3059
  %v3109 = vadd.f32 %v3005, %v3059
  %v3110 = vadd.f32 %v3006, %v3064
  %v3111 = vadd.f32 %v3007, %v3064
  %v3112 = vadd.f32 %v3008, %v3064
  %v3113 = vadd.f32 %v3009, %v3064
  %v3114 = vadd.f32 %v3010, %v3064
  %v3115 = vadd.f32 %v3011, %v3064
  %v3116 = vadd.f32 %v3012, %v3064
  %v3117 = vadd.f32 %v3013, %v3064
  %v3118 = vadd.f32 %v3014, %v3069
  %v3119 = vadd.f32 %v3015, %v3069
  %v3120 = vadd.f32 %v3016, %v3069
  %v3121 = vadd.f32 %v3017, %v3069
  %v3122 = vadd.f32 %v3018, %v3069
  %v3123 = vadd.f32 %v3019, %v3069
  %v3124 = vadd.f32 %v3020, %v3069
  %v3125 = vadd.f32 %v3021, %v3069
  %v3126 = vadd.f32 %v3022, %v3074
  %v3127 = vadd.f32 %v3023, %v3074
  %v3128 = vadd.f32 %v3024, %v3074
  %v3129 = vadd.f32 %v3025, %v3074
  %v3130 = vadd.f32 %v3026, %v3074
  %v3131 = vadd.f32 %v3027, %v3074
  %v3132 = vadd.f32 %v3028, %v3074
  %v3133 = vadd.f32 %v3029, %v3074
  %v3134 = vadd.f32 %v3030, %v3079
  %v3135 = vadd.f32 %v3031, %v3079
  %v3136 = vadd.f32 %v3032, %v3079
  %v3137 = vadd.f32 %v3033, %v3079
  %v3138 = vadd.f32 %v3034, %v3079
  %v3139 = vadd.f32 %v3035, %v3079
  %v3140 = vadd.f32 %v3036, %v3079
  %v3141 = vadd.f32 %v3037, %v3079
  %v3142 = vadd.f32 %v3038, %v3084
  %v3143 = vadd.f32 %v3039, %v3084
  %v3144 = vadd.f32 %v3040, %v3084
  %v3145 = vadd.f32 %v3041, %v3084
  %v3146 = vadd.f32 %v3042, %v3084
  %v3147 = vadd.f32 %v3043, %v3084
  %v3148 = vadd.f32 %v3044, %v3084
  %v3149 = vadd.f32 %v3045, %v3084
  %v3150 = vmax.f32 %v3086, 0.0
  %v3151 = vmax.f32 %v3087, 0.0
  %v3152 = vmax.f32 %v3088, 0.0
  %v3153 = vmax.f32 %v3089, 0.0
  %v3154 = vmax.f32 %v3090, 0.0
  %v3155 = vmax.f32 %v3091, 0.0
  %v3156 = vmax.f32 %v3092, 0.0
  %v3157 = vmax.f32 %v3093, 0.0
  %v3158 = vmax.f32 %v3094, 0.0
  %v3159 = vmax.f32 %v3095, 0.0
  %v3160 = vmax.f32 %v3096, 0.0
  %v3161 = vmax.f32 %v3097, 0.0
  %v3162 = vmax.f32 %v3098, 0.0
  %v3163 = vmax.f32 %v3099, 0.0
  %v3164 = vmax.f32 %v3100, 0.0
  %v3165 = vmax.f32 %v3101, 0.0
  %v3166 = vmax.f32 %v3102, 0.0
  %v3167 = vmax.f32 %v3103, 0.0
  %v3168 = vmax.f32 %v3104, 0.0
  %v3169 = vmax.f32 %v3105, 0.0
  %v3170 = vmax.f32 %v3106, 0.0
  %v3171 = vmax.f32 %v3107, 0.0
  %v3172 = vmax.f32 %v3108, 0.0
  %v3173 = vmax.f32 %v3109, 0.0
  %v3174 = vmax.f32 %v3110, 0.0
  %v3175 = vmax.f32 %v3111, 0.0
  %v3176 = vmax.f32 %v3112, 0.0
  %v3177 = vmax.f32 %v3113, 0.0
  %v3178 = vmax.f32 %v3114, 0.0
  %v3179 = vmax.f32 %v3115, 0.0
  %v3180 = vmax.f32 %v3116, 0.0
  %v3181 = vmax.f32 %v3117, 0.0
  %v3182 = vmax.f32 %v3118, 0.0
  %v3183 = vmax.f32 %v3119, 0.0
  %v3184 = vmax.f32 %v3120, 0.0
  %v3185 = vmax.f32 %v3121, 0.0
  %v3186 = vmax.f32 %v3122, 0.0
  %v3187 = vmax.f32 %v3123, 0.0
  %v3188 = vmax.f32 %v3124, 0.0
  %v3189 = vmax.f32 %v3125, 0.0
  %v3190 = vmax.f32 %v3126, 0.0
  %v3191 = vmax.f32 %v3127, 0.0
  %v3192 = vmax.f32 %v3128, 0.0
  %v3193 = vmax.f32 %v3129, 0.0
  %v3194 = vmax.f32 %v3130, 0.0
  %v3195 = vmax.f32 %v3131, 0.0
  %v3196 = vmax.f32 %v3132, 0.0
  %v3197 = vmax.f32 %v3133, 0.0
  %v3198 = vmax.f32 %v3134, 0.0
  %v3199 = vmax.f32 %v3135, 0.0
  %v3200 = vmax.f32 %v3136, 0.0
  %v3201 = vmax.f32 %v3137, 0.0
  %v3202 = vmax.f32 %v3138, 0.0
  %v3203 = vmax.f32 %v3139, 0.0
  %v3204 = vmax.f32 %v3140, 0.0
  %v3205 = vmax.f32 %v3141, 0.0
  %v3206 = vmax.f32 %v3142, 0.0
  %v3207 = vmax.f32 %v3143, 0.0
  %v3208 = vmax.f32 %v3144, 0.0
  %v3209 = vmax.f32 %v3145, 0.0
  %v3210 = vmax.f32 %v3146, 0.0
  %v3211 = vmax.f32 %v3147, 0.0
  %v3212 = vmax.f32 %v3148, 0.0
  %v3213 = vmax.f32 %v3149, 0.0
  %3214 = vst [vmem:[%s11] sm:$0xff] %v3150
  %3215 = vst [vmem:[%s11 + $0x8] sm:$0xff] %v3151
  %3216 = vst [vmem:[%s11 + $0x10] sm:$0xff] %v3152
  %3217 = vst [vmem:[%s11 + $0x18] sm:$0xff] %v3153
  %3218 = vst [vmem:[%s11 + $0x20] sm:$0xff] %v3154
  %3219 = vst [vmem:[%s11 + $0x28] sm:$0xff] %v3155
  %3220 = vst [vmem:[%s11 + $0x30] sm:$0xff] %v3156
  %3221 = vst [vmem:[%s11 + $0x38] sm:$0xff] %v3157
  %3222 = vst [vmem:[%s11 + $0x40] sm:$0xff] %v3158
  %3223 = vst [vmem:[%s11 + $0x48] sm:$0xff] %v3159
  %3224 = vst [vmem:[%s11 + $0x50] sm:$0xff] %v3160
  %3225 = vst [vmem:[%s11 + $0x58] sm:$0xff] %v3161
  %3226 = vst [vmem:[%s11 + $0x60] sm:$0xff] %v3162
  %3227 = vst [vmem:[%s11 + $0x68] sm:$0xff] %v3163
  %3228 = vst [vmem:[%s11 + $0x70] sm:$0xff] %v3164
  %3229 = vst [vmem:[%s11 + $0x78] sm:$0xff] %v3165
  %3230 = vst [vmem:[%s11 + $0x80] sm:$0xff] %v3166
  %3231 = vst [vmem:[%s11 + $0x88] sm:$0xff] %v3167
  %3232 = vst [vmem:[%s11 + $0x90] sm:$0xff] %v3168
  %3233 = vst [vmem:[%s11 + $0x98] sm:$0xff] %v3169
  %3234 = vst [vmem:[%s11 + $0xa0] sm:$0xff] %v3170
  %3235 = vst [vmem:[%s11 + $0xa8] sm:$0xff] %v3171
  %3236 = vst [vmem:[%s11 + $0xb0] sm:$0xff] %v3172
  %3237 = vst [vmem:[%s11 + $0xb8] sm:$0xff] %v3173
  %3238 = vst [vmem:[%s11 + $0xc0] sm:$0xff] %v3174
  %3239 = vst [vmem:[%s11 + $0xc8] sm:$0xff] %v3175
  %3240 = vst [vmem:[%s11 + $0xd0] sm:$0xff] %v3176
  %3241 = vst [vmem:[%s11 + $0xd8] sm:$0xff] %v3177
  %3242 = vst [vmem:[%s11 + $0xe0] sm:$0xff] %v3178
  %3243 = vst [vmem:[%s11 + $0xe8] sm:$0xff] %v3179
  %3244 = vst [vmem:[%s11 + $0xf0] sm:$0xff] %v3180
  %3245 = vst [vmem:[%s11 + $0xf8] sm:$0xff] %v3181
  %3246 = vst [vmem:[%s11 + $0x100] sm:$0xff] %v3182
  %3247 = vst [vmem:[%s11 + $0x108] sm:$0xff] %v3183
  %3248 = vst [vmem:[%s11 + $0x110] sm:$0xff] %v3184
  %3249 = vst [vmem:[%s11 + $0x118] sm:$0xff] %v3185
  %3250 = vst [vmem:[%s11 + $0x120] sm:$0xff] %v3186
  %3251 = vst [vmem:[%s11 + $0x128] sm:$0xff] %v3187
  %3252 = vst [vmem:[%s11 + $0x130] sm:$0xff] %v3188
  %3253 = vst [vmem:[%s11 + $0x138] sm:$0xff] %v3189
  %3254 = vst [vmem:[%s11 + $0x140] sm:$0xff] %v3190
  %3255 = vst [vmem:[%s11 + $0x148] sm:$0xff] %v3191
  %3256 = vst [vmem:[%s11 + $0x150] sm:$0xff] %v3192
  %3257 = vst [vmem:[%s11 + $0x158] sm:$0xff] %v3193
  %3258 = vst [vmem:[%s11 + $0x160] sm:$0xff] %v3194
  %3259 = vst [vmem:[%s11 + $0x168] sm:$0xff] %v3195
  %3260 = vst [vmem:[%s11 + $0x170] sm:$0xff] %v3196
  %3261 = vst [vmem:[%s11 + $0x178] sm:$0xff] %v3197
  %3262 = vst [vmem:[%s11 + $0x180] sm:$0xff] %v3198
  %3263 = vst [vmem:[%s11 + $0x188] sm:$0xff] %v3199
  %3264 = vst [vmem:[%s11 + $0x190] sm:$0xff] %v3200
  %3265 = vst [vmem:[%s11 + $0x198] sm:$0xff] %v3201
  %3266 = vst [vmem:[%s11 + $0x1a0] sm:$0xff] %v3202
  %3267 = vst [vmem:[%s11 + $0x1a8] sm:$0xff] %v3203
  %3268 = vst [vmem:[%s11 + $0x1b0] sm:$0xff] %v3204
  %3269 = vst [vmem:[%s11 + $0x1b8] sm:$0xff] %v3205
  %3270 = vst [vmem:[%s11 + $0x1c0] sm:$0xff] %v3206
  %3271 = vst [vmem:[%s11 + $0x1c8] sm:$0xff] %v3207
  %3272 = vst [vmem:[%s11 + $0x1d0] sm:$0xff] %v3208
  %3273 = vst [vmem:[%s11 + $0x1d8] sm:$0xff] %v3209
  %3274 = vst [vmem:[%s11 + $0x1e0] sm:$0xff] %v3210
  %3275 = vst [vmem:[%s11 + $0x1e8] sm:$0xff] %v3211
  %3276 = vst [vmem:[%s11 + $0x1f0] sm:$0xff] %v3212
  %3277 = vst [vmem:[%s11 + $0x1f8] sm:$0xff] %v3213
  // Predicated region
  $region46: #{block_proposed_forward.1} parent=0 // pred_check
    _
  $region47: #{block_proposed_forward.1} parent=0 // pred_check_branch
    %3279 = sbr.rel (0) target = $region49
  $region48: #{block_proposed_forward.1} parent=0 // pred_region
    _
  $region49: #{block_proposed_forward.1} parent=0 // pred_fallthru
    _
  // Predicated region
  $region50: #{block_proposed_forward.1} parent=0 // pred_check
    _
  $region51: #{block_proposed_forward.1} parent=0 // pred_check_branch
    %3281 = sbr.rel (0) target = $region53
  $region52: #{block_proposed_forward.1} parent=0 // pred_region
    _
  $region53: #{block_proposed_forward.1} parent=0 // pred_fallthru
    _

</llo_original>
